<compile_context>
chip_gen: v6e
topology: v6e:2x2x1
jax: 0.10.0
libtpu: 0.0.40
codegen_flags: <defaults>
</compile_context>

<pallas_src>
import jax
import jax.numpy as jnp
import numpy as np
from jax import lax
from jax.experimental import pallas as pl
from jax.experimental.pallas import tpu as pltpu  # noqa: F401  (kept for TPU-specific tuning hooks)

EPS = 1e-5  # nn.LayerNorm default eps


def _layernorm(x, g, b):
    mu = jnp.mean(x, axis=-1, keepdims=True)
    var = jnp.mean(jnp.square(x - mu), axis=-1, keepdims=True)
    return (x - mu) * lax.rsqrt(var + EPS) * g + b


def agent_q_kernel(obs_ref, h0_ref,
                   fn_ref, w1_ref, w2_ref, wih_ref, whh_ref, bgru_ref,
                   wq_ref, bq_ref, vec_ref,
                   q_ref, hfin_ref):
    T = obs_ref.shape[0]
    H = hfin_ref.shape[-1]

    # ---- Hoist weight loads and (1, .) broadcast operands out of the time loop ----
    fn_g, fn_b = fn_ref[0:1, :], fn_ref[1:2, :]            # (1, D) each
    w1 = w1_ref[...]                                       # (D, H)
    w2 = w2_ref[...]                                       # (H, H)
    w_ih = wih_ref[...]                                    # (H, 3H)  [r | z | n]
    w_hh = whh_ref[...]                                    # (H, 3H)  [r | z | n]
    b_ih = bgru_ref[0:1, :]                                # (1, 3H)
    b_hh = bgru_ref[1:2, :]                                # (1, 3H)
    wq = wq_ref[...]                                       # (H, A)
    bq = bq_ref[...]                                       # (1, A)
    b1, ln1_g, ln1_b = vec_ref[0:1, :], vec_ref[1:2, :], vec_ref[2:3, :]
    b2, ln2_g, ln2_b = vec_ref[3:4, :], vec_ref[4:5, :], vec_ref[5:6, :]
    ln3_g, ln3_b = vec_ref[6:7, :], vec_ref[7:8, :]

    def step(t, h):
        x = obs_ref[t]                                     # (B, D)

        # RNNBase.feature_norm
        x = _layernorm(x, fn_g, fn_b)

        # MLPLayer.fc1: Linear -> ReLU -> LayerNorm
        x = jnp.maximum(
            jnp.dot(x, w1, preferred_element_type=jnp.float32) + b1, 0.0)
        x = _layernorm(x, ln1_g, ln1_b)

        # MLPLayer.fc2[0]: Linear -> ReLU -> LayerNorm  (layer_N = 1)
        x = jnp.maximum(
            jnp.dot(x, w2, preferred_element_type=jnp.float32) + b2, 0.0)
        x = _layernorm(x, ln2_g, ln2_b)

        # GRU cell (PyTorch nn.GRU equations, gate order r, z, n) — fused gate matmuls
        gi = jnp.dot(x, w_ih, preferred_element_type=jnp.float32) + b_ih   # (B, 3H)
        gh = jnp.dot(h, w_hh, preferred_element_type=jnp.float32) + b_hh   # (B, 3H)
        r = jax.nn.sigmoid(gi[:, 0:H] + gh[:, 0:H])
        z = jax.nn.sigmoid(gi[:, H:2 * H] + gh[:, H:2 * H])
        n = jnp.tanh(gi[:, 2 * H:3 * H] + r * gh[:, 2 * H:3 * H])
        h_new = (1.0 - z) * n + z * h

        # RNNLayer.norm + ACTLayer (single discrete head)
        y = _layernorm(h_new, ln3_g, ln3_b)
        q_ref[t] = jnp.dot(y, wq, preferred_element_type=jnp.float32) + bq
        return h_new

    h_final = lax.fori_loop(0, T, step, h0_ref[...], unroll=True)
    hfin_ref[...] = h_final


class AgentQFunctionPallas:
    """JAX/Pallas re-implementation of AgentQFunction (RNN path)."""

    def __init__(self, input_dim, act_dim, hidden_size=32, seed=0):
        self.input_dim = input_dim
        self.act_dim = act_dim
        self.hidden_size = hidden_size
        D, H, A = input_dim, hidden_size, act_dim

        key = jax.random.PRNGKey(seed)
        keys = list(jax.random.split(key, 32))
        it = iter(keys)

        def w(shape, scale=0.1):
            return (scale * jax.random.normal(next(it), shape)).astype(jnp.float32)

        def gamma(d):  # layernorm weight ~ 1
            return (1.0 + 0.05 * jax.random.normal(next(it), (1, d))).astype(jnp.float32)

        def beta(d):   # layernorm / linear bias, small
            return (0.05 * jax.random.normal(next(it), (1, d))).astype(jnp.float32)

        p = {}
        p["fn_g"], p["fn_b"] = gamma(D), beta(D)
        p["w1"], p["b1"] = w((D, H)), beta(H)
        p["ln1_g"], p["ln1_b"] = gamma(H), beta(H)
        p["w2"], p["b2"] = w((H, H)), beta(H)
        p["ln2_g"], p["ln2_b"] = gamma(H), beta(H)
        p["wir"], p["wiz"], p["win"] = w((H, H)), w((H, H)), w((H, H))
        p["whr"], p["whz"], p["whn"] = w((H, H)), w((H, H)), w((H, H))
        p["bir"], p["biz"], p["bin"] = beta(H), beta(H), beta(H)
        p["bhr"], p["bhz"], p["bhn"] = beta(H), beta(H), beta(H)
        p["ln3_g"], p["ln3_b"] = gamma(H), beta(H)
        p["wq"], p["bq"] = w((H, A)), beta(A)
        self.params = p

        # ---- consolidated parameter slabs fed to the kernel (9 arrays total) ----
        fn_slab = jnp.concatenate([p["fn_g"], p["fn_b"]], axis=0)            # (2, D)
        w_ih = jnp.concatenate([p["wir"], p["wiz"], p["win"]], axis=1)       # (H, 3H)
        w_hh = jnp.concatenate([p["whr"], p["whz"], p["whn"]], axis=1)       # (H, 3H)
        b_ih = jnp.concatenate([p["bir"], p["biz"], p["bin"]], axis=1)       # (1, 3H)
        b_hh = jnp.concatenate([p["bhr"], p["bhz"], p["bhn"]], axis=1)       # (1, 3H)
        b_gru = jnp.concatenate([b_ih, b_hh], axis=0)                        # (2, 3H)
        vec_slab = jnp.concatenate(
            [p["b1"], p["ln1_g"], p["ln1_b"],
             p["b2"], p["ln2_g"], p["ln2_b"],
             p["ln3_g"], p["ln3_b"]], axis=0)                                # (8, H)
        self.packed = (fn_slab, p["w1"], p["w2"], w_ih, w_hh, b_gru,
                       p["wq"], p["bq"], vec_slab)

    # ---------------- Pallas forward ----------------
    def forward(self, obs, rnn_states):
        obs = jnp.asarray(obs, jnp.float32)
        rnn_states = jnp.asarray(rnn_states, jnp.float32)

        no_sequence = (obs.ndim == 2)
        if no_sequence:
            obs = obs[None]
        if rnn_states.ndim == 2:
            rnn_states = rnn_states[None]
        h0 = rnn_states[0]                                   # (B, H)

        T, B, _ = obs.shape
        H, A = self.hidden_size, self.act_dim

        # Single kernel invocation: everything (obs, params, outputs) is VMEM-resident,
        # the time recurrence is an in-kernel unrolled loop.
        q_outs, h_final = pl.pallas_call(
            agent_q_kernel,
            out_shape=(jax.ShapeDtypeStruct((T, B, A), jnp.float32),
                       jax.ShapeDtypeStruct((B, H), jnp.float32)),
        )(obs, h0, *self.packed)

        if no_sequence:
            q_outs = q_outs[0]
        return q_outs, h_final[None]                         # (1, B, H) like nn.GRU h_n

    # ---------------- pure-JAX reference ----------------
    def reference_forward(self, obs, rnn_states):
        obs = jnp.asarray(obs, jnp.float32)
        rnn_states = jnp.asarray(rnn_states, jnp.float32)
        no_sequence = (obs.ndim == 2)
        if no_sequence:
            obs = obs[None]
        if rnn_states.ndim == 2:
            rnn_states = rnn_states[None]
        p = self.params
        h0 = rnn_states[0]

        def step(h, x_t):
            x = _layernorm(x_t, p["fn_g"], p["fn_b"])
            x = jnp.maximum(x @ p["w1"] + p["b1"], 0.0)
            x = _layernorm(x, p["ln1_g"], p["ln1_b"])
            x = jnp.maximum(x @ p["w2"] + p["b2"], 0.0)
            x = _layernorm(x, p["ln2_g"], p["ln2_b"])
            r = jax.nn.sigmoid(x @ p["wir"] + p["bir"] + h @ p["whr"] + p["bhr"])
            z = jax.nn.sigmoid(x @ p["wiz"] + p["biz"] + h @ p["whz"] + p["bhz"])
            n = jnp.tanh(x @ p["win"] + p["bin"] + r * (h @ p["whn"] + p["bhn"]))
            h_new = (1.0 - z) * n + z * h
            y = _layernorm(h_new, p["ln3_g"], p["ln3_b"])
            q = y @ p["wq"] + p["bq"]
            return h_new, q

        h_fin, qs = jax.lax.scan(step, h0, obs)
        if no_sequence:
            qs = qs[0]
        return qs, h_fin[None]


if __name__ == "__main__":
    # Small deterministic example: seq=8, batch=4, input_dim=16, hidden=32, act_dim=5
    T, B, D, H, A = 8, 4, 16, 32, 5
    model = AgentQFunctionPallas(input_dim=D, act_dim=A, hidden_size=H, seed=0)

    key = jax.random.PRNGKey(0)
    k_obs, k_h = jax.random.split(key)
    obs = jax.random.normal(k_obs, (T, B, D), dtype=jnp.float32)
    rnn_states = jax.random.normal(k_h, (1, B, H), dtype=jnp.float32)

    q_outs, h_final = model.forward(obs, rnn_states)
    q_outs, h_final = jax.block_until_ready((q_outs, h_final))

    q_ref, h_ref = model.reference_forward(obs, rnn_states)
    np.testing.assert_allclose(np.asarray(q_outs), np.asarray(q_ref), rtol=1e-4, atol=1e-4)
    np.testing.assert_allclose(np.asarray(h_final), np.asarray(h_ref), rtol=1e-4, atol=1e-4)

    assert q_outs.shape == (T, B, A) and h_final.shape == (1, B, H)
    print("KERNEL_OK")
</pallas_src>

<mosaic_0001>
module attributes {stable_mosaic.version = 11 : i64} {
  func.func @agent_q_kernel(%arg0: memref<8x4x16xf32, #tpu.memory_space<vmem>>, %arg1: memref<4x32xf32, #tpu.memory_space<vmem>>, %arg2: memref<2x16xf32, #tpu.memory_space<vmem>>, %arg3: memref<16x32xf32, #tpu.memory_space<vmem>>, %arg4: memref<32x32xf32, #tpu.memory_space<vmem>>, %arg5: memref<32x96xf32, #tpu.memory_space<vmem>>, %arg6: memref<32x96xf32, #tpu.memory_space<vmem>>, %arg7: memref<2x96xf32, #tpu.memory_space<vmem>>, %arg8: memref<32x5xf32, #tpu.memory_space<vmem>>, %arg9: memref<1x5xf32, #tpu.memory_space<vmem>>, %arg10: memref<8x32xf32, #tpu.memory_space<vmem>>, %arg11: memref<8x4x5xf32, #tpu.memory_space<vmem>>, %arg12: memref<4x32xf32, #tpu.memory_space<vmem>>) attributes {dimension_semantics = [], scalar_prefetch = 0 : i64, scratch_operands = 0 : i64, tpu.core_type = #tpu.core_type<tc>} {
    %c0 = arith.constant 0 : index
    %c0_0 = arith.constant 0 : index
    %0 = vector.load %arg2[%c0, %c0_0] : memref<2x16xf32, #tpu.memory_space<vmem>>, vector<1x16xf32>
    %c1 = arith.constant 1 : index
    %c0_1 = arith.constant 0 : index
    %1 = vector.load %arg2[%c1, %c0_1] : memref<2x16xf32, #tpu.memory_space<vmem>>, vector<1x16xf32>
    %c0_2 = arith.constant 0 : index
    %c0_3 = arith.constant 0 : index
    %2 = vector.load %arg3[%c0_2, %c0_3] : memref<16x32xf32, #tpu.memory_space<vmem>>, vector<16x32xf32>
    %c0_4 = arith.constant 0 : index
    %c0_5 = arith.constant 0 : index
    %3 = vector.load %arg4[%c0_4, %c0_5] : memref<32x32xf32, #tpu.memory_space<vmem>>, vector<32x32xf32>
    %c0_6 = arith.constant 0 : index
    %c0_7 = arith.constant 0 : index
    %4 = vector.load %arg5[%c0_6, %c0_7] : memref<32x96xf32, #tpu.memory_space<vmem>>, vector<32x96xf32>
    %c0_8 = arith.constant 0 : index
    %c0_9 = arith.constant 0 : index
    %5 = vector.load %arg6[%c0_8, %c0_9] : memref<32x96xf32, #tpu.memory_space<vmem>>, vector<32x96xf32>
    %c0_10 = arith.constant 0 : index
    %c0_11 = arith.constant 0 : index
    %6 = vector.load %arg7[%c0_10, %c0_11] : memref<2x96xf32, #tpu.memory_space<vmem>>, vector<1x96xf32>
    %c1_12 = arith.constant 1 : index
    %c0_13 = arith.constant 0 : index
    %7 = vector.load %arg7[%c1_12, %c0_13] : memref<2x96xf32, #tpu.memory_space<vmem>>, vector<1x96xf32>
    %c0_14 = arith.constant 0 : index
    %c0_15 = arith.constant 0 : index
    %8 = vector.load %arg8[%c0_14, %c0_15] : memref<32x5xf32, #tpu.memory_space<vmem>>, vector<32x5xf32>
    %c0_16 = arith.constant 0 : index
    %c0_17 = arith.constant 0 : index
    %9 = vector.load %arg9[%c0_16, %c0_17] : memref<1x5xf32, #tpu.memory_space<vmem>>, vector<1x5xf32>
    %c0_18 = arith.constant 0 : index
    %c0_19 = arith.constant 0 : index
    %10 = vector.load %arg10[%c0_18, %c0_19] : memref<8x32xf32, #tpu.memory_space<vmem>>, vector<1x32xf32>
    %c1_20 = arith.constant 1 : index
    %c0_21 = arith.constant 0 : index
    %11 = vector.load %arg10[%c1_20, %c0_21] : memref<8x32xf32, #tpu.memory_space<vmem>>, vector<1x32xf32>
    %c2 = arith.constant 2 : index
    %c0_22 = arith.constant 0 : index
    %12 = vector.load %arg10[%c2, %c0_22] : memref<8x32xf32, #tpu.memory_space<vmem>>, vector<1x32xf32>
    %c3 = arith.constant 3 : index
    %c0_23 = arith.constant 0 : index
    %13 = vector.load %arg10[%c3, %c0_23] : memref<8x32xf32, #tpu.memory_space<vmem>>, vector<1x32xf32>
    %c4 = arith.constant 4 : index
    %c0_24 = arith.constant 0 : index
    %14 = vector.load %arg10[%c4, %c0_24] : memref<8x32xf32, #tpu.memory_space<vmem>>, vector<1x32xf32>
    %c5 = arith.constant 5 : index
    %c0_25 = arith.constant 0 : index
    %15 = vector.load %arg10[%c5, %c0_25] : memref<8x32xf32, #tpu.memory_space<vmem>>, vector<1x32xf32>
    %c6 = arith.constant 6 : index
    %c0_26 = arith.constant 0 : index
    %16 = vector.load %arg10[%c6, %c0_26] : memref<8x32xf32, #tpu.memory_space<vmem>>, vector<1x32xf32>
    %c7 = arith.constant 7 : index
    %c0_27 = arith.constant 0 : index
    %17 = vector.load %arg10[%c7, %c0_27] : memref<8x32xf32, #tpu.memory_space<vmem>>, vector<1x32xf32>
    %c0_28 = arith.constant 0 : index
    %c0_29 = arith.constant 0 : index
    %18 = vector.load %arg1[%c0_28, %c0_29] : memref<4x32xf32, #tpu.memory_space<vmem>>, vector<4x32xf32>
    %c0_i32 = arith.constant 0 : i32
    %19 = arith.index_cast %c0_i32 : i32 to index
    %c0_30 = arith.constant 0 : index
    %c0_31 = arith.constant 0 : index
    %20 = vector.load %arg0[%19, %c0_30, %c0_31] : memref<8x4x16xf32, #tpu.memory_space<vmem>>, vector<1x4x16xf32>
    %21 = vector.shape_cast %20 : vector<1x4x16xf32> to vector<4x16xf32>
    %cst = arith.constant dense<0.000000e+00> : vector<4xf32>
    %22 = vector.multi_reduction <add>, %21, %cst [1] : vector<4x16xf32> to vector<4xf32>
    %23 = vector.shape_cast %22 : vector<4xf32> to vector<4x1xf32>
    %cst_32 = arith.constant 1.600000e+01 : f32
    %24 = vector.broadcast %cst_32 : f32 to vector<4x1xf32>
    %25 = arith.divf %23, %24 : vector<4x1xf32>
    %26 = vector.broadcast %25 : vector<4x1xf32> to vector<4x16xf32>
    %27 = arith.subf %21, %26 : vector<4x16xf32>
    %28 = arith.mulf %27, %27 : vector<4x16xf32>
    %cst_33 = arith.constant dense<0.000000e+00> : vector<4xf32>
    %29 = vector.multi_reduction <add>, %28, %cst_33 [1] : vector<4x16xf32> to vector<4xf32>
    %30 = vector.shape_cast %29 : vector<4xf32> to vector<4x1xf32>
    %cst_34 = arith.constant 1.600000e+01 : f32
    %31 = vector.broadcast %cst_34 : f32 to vector<4x1xf32>
    %32 = arith.divf %30, %31 : vector<4x1xf32>
    %33 = vector.broadcast %25 : vector<4x1xf32> to vector<4x16xf32>
    %34 = arith.subf %21, %33 : vector<4x16xf32>
    %cst_35 = arith.constant 9.99999974E-6 : f32
    %35 = vector.broadcast %cst_35 : f32 to vector<4x1xf32>
    %36 = arith.addf %32, %35 : vector<4x1xf32>
    %37 = math.rsqrt %36 : vector<4x1xf32>
    %38 = vector.broadcast %37 : vector<4x1xf32> to vector<4x16xf32>
    %39 = arith.mulf %34, %38 : vector<4x16xf32>
    %40 = vector.broadcast %0 : vector<1x16xf32> to vector<4x16xf32>
    %41 = arith.mulf %39, %40 : vector<4x16xf32>
    %42 = vector.broadcast %1 : vector<1x16xf32> to vector<4x16xf32>
    %43 = arith.addf %41, %42 : vector<4x16xf32>
    %cst_36 = arith.constant dense<0.000000e+00> : vector<4x32xf32>
    %44 = tpu.matmul %43, %2, %cst_36 {dimension_numbers = #tpu.dot_dimension_numbers<[1], [0], [0], [1], [0, 0, 1, 1], [], []>} : vector<4x16xf32>, vector<16x32xf32>, vector<4x32xf32> -> vector<4x32xf32>
    %45 = vector.broadcast %10 : vector<1x32xf32> to vector<4x32xf32>
    %46 = arith.addf %44, %45 : vector<4x32xf32>
    %cst_37 = arith.constant 0.000000e+00 : f32
    %47 = vector.broadcast %cst_37 : f32 to vector<4x32xf32>
    %48 = arith.maximumf %46, %47 : vector<4x32xf32>
    %cst_38 = arith.constant dense<0.000000e+00> : vector<4xf32>
    %49 = vector.multi_reduction <add>, %48, %cst_38 [1] : vector<4x32xf32> to vector<4xf32>
    %50 = vector.shape_cast %49 : vector<4xf32> to vector<4x1xf32>
    %cst_39 = arith.constant 3.200000e+01 : f32
    %51 = vector.broadcast %cst_39 : f32 to vector<4x1xf32>
    %52 = arith.divf %50, %51 : vector<4x1xf32>
    %53 = vector.broadcast %52 : vector<4x1xf32> to vector<4x32xf32>
    %54 = arith.subf %48, %53 : vector<4x32xf32>
    %55 = arith.mulf %54, %54 : vector<4x32xf32>
    %cst_40 = arith.constant dense<0.000000e+00> : vector<4xf32>
    %56 = vector.multi_reduction <add>, %55, %cst_40 [1] : vector<4x32xf32> to vector<4xf32>
    %57 = vector.shape_cast %56 : vector<4xf32> to vector<4x1xf32>
    %cst_41 = arith.constant 3.200000e+01 : f32
    %58 = vector.broadcast %cst_41 : f32 to vector<4x1xf32>
    %59 = arith.divf %57, %58 : vector<4x1xf32>
    %60 = vector.broadcast %52 : vector<4x1xf32> to vector<4x32xf32>
    %61 = arith.subf %48, %60 : vector<4x32xf32>
    %cst_42 = arith.constant 9.99999974E-6 : f32
    %62 = vector.broadcast %cst_42 : f32 to vector<4x1xf32>
    %63 = arith.addf %59, %62 : vector<4x1xf32>
    %64 = math.rsqrt %63 : vector<4x1xf32>
    %65 = vector.broadcast %64 : vector<4x1xf32> to vector<4x32xf32>
    %66 = arith.mulf %61, %65 : vector<4x32xf32>
    %67 = vector.broadcast %11 : vector<1x32xf32> to vector<4x32xf32>
    %68 = arith.mulf %66, %67 : vector<4x32xf32>
    %69 = vector.broadcast %12 : vector<1x32xf32> to vector<4x32xf32>
    %70 = arith.addf %68, %69 : vector<4x32xf32>
    %cst_43 = arith.constant dense<0.000000e+00> : vector<4x32xf32>
    %71 = tpu.matmul %70, %3, %cst_43 {dimension_numbers = #tpu.dot_dimension_numbers<[1], [0], [0], [1], [0, 0, 1, 1], [], []>} : vector<4x32xf32>, vector<32x32xf32>, vector<4x32xf32> -> vector<4x32xf32>
    %72 = vector.broadcast %13 : vector<1x32xf32> to vector<4x32xf32>
    %73 = arith.addf %71, %72 : vector<4x32xf32>
    %cst_44 = arith.constant 0.000000e+00 : f32
    %74 = vector.broadcast %cst_44 : f32 to vector<4x32xf32>
    %75 = arith.maximumf %73, %74 : vector<4x32xf32>
    %cst_45 = arith.constant dense<0.000000e+00> : vector<4xf32>
    %76 = vector.multi_reduction <add>, %75, %cst_45 [1] : vector<4x32xf32> to vector<4xf32>
    %77 = vector.shape_cast %76 : vector<4xf32> to vector<4x1xf32>
    %cst_46 = arith.constant 3.200000e+01 : f32
    %78 = vector.broadcast %cst_46 : f32 to vector<4x1xf32>
    %79 = arith.divf %77, %78 : vector<4x1xf32>
    %80 = vector.broadcast %79 : vector<4x1xf32> to vector<4x32xf32>
    %81 = arith.subf %75, %80 : vector<4x32xf32>
    %82 = arith.mulf %81, %81 : vector<4x32xf32>
    %cst_47 = arith.constant dense<0.000000e+00> : vector<4xf32>
    %83 = vector.multi_reduction <add>, %82, %cst_47 [1] : vector<4x32xf32> to vector<4xf32>
    %84 = vector.shape_cast %83 : vector<4xf32> to vector<4x1xf32>
    %cst_48 = arith.constant 3.200000e+01 : f32
    %85 = vector.broadcast %cst_48 : f32 to vector<4x1xf32>
    %86 = arith.divf %84, %85 : vector<4x1xf32>
    %87 = vector.broadcast %79 : vector<4x1xf32> to vector<4x32xf32>
    %88 = arith.subf %75, %87 : vector<4x32xf32>
    %cst_49 = arith.constant 9.99999974E-6 : f32
    %89 = vector.broadcast %cst_49 : f32 to vector<4x1xf32>
    %90 = arith.addf %86, %89 : vector<4x1xf32>
    %91 = math.rsqrt %90 : vector<4x1xf32>
    %92 = vector.broadcast %91 : vector<4x1xf32> to vector<4x32xf32>
    %93 = arith.mulf %88, %92 : vector<4x32xf32>
    %94 = vector.broadcast %14 : vector<1x32xf32> to vector<4x32xf32>
    %95 = arith.mulf %93, %94 : vector<4x32xf32>
    %96 = vector.broadcast %15 : vector<1x32xf32> to vector<4x32xf32>
    %97 = arith.addf %95, %96 : vector<4x32xf32>
    %cst_50 = arith.constant dense<0.000000e+00> : vector<4x96xf32>
    %98 = tpu.matmul %97, %4, %cst_50 {dimension_numbers = #tpu.dot_dimension_numbers<[1], [0], [0], [1], [0, 0, 1, 1], [], []>} : vector<4x32xf32>, vector<32x96xf32>, vector<4x96xf32> -> vector<4x96xf32>
    %99 = vector.broadcast %6 : vector<1x96xf32> to vector<4x96xf32>
    %100 = arith.addf %98, %99 : vector<4x96xf32>
    %cst_51 = arith.constant dense<0.000000e+00> : vector<4x96xf32>
    %101 = tpu.matmul %18, %5, %cst_51 {dimension_numbers = #tpu.dot_dimension_numbers<[1], [0], [0], [1], [0, 0, 1, 1], [], []>} : vector<4x32xf32>, vector<32x96xf32>, vector<4x96xf32> -> vector<4x96xf32>
    %102 = vector.broadcast %7 : vector<1x96xf32> to vector<4x96xf32>
    %103 = arith.addf %101, %102 : vector<4x96xf32>
    %104 = vector.extract_strided_slice %100 {offsets = [0, 0], sizes = [4, 32], strides = [1, 1]} : vector<4x96xf32> to vector<4x32xf32>
    %105 = vector.extract_strided_slice %103 {offsets = [0, 0], sizes = [4, 32], strides = [1, 1]} : vector<4x96xf32> to vector<4x32xf32>
    %106 = arith.addf %104, %105 : vector<4x32xf32>
    %107 = arith.negf %106 : vector<4x32xf32>
    %108 = math.exp %107 : vector<4x32xf32>
    %cst_52 = arith.constant 1.000000e+00 : f32
    %109 = vector.broadcast %cst_52 : f32 to vector<4x32xf32>
    %110 = arith.addf %109, %108 : vector<4x32xf32>
    %111 = arith.divf %109, %110 : vector<4x32xf32>
    %112 = vector.extract_strided_slice %100 {offsets = [0, 32], sizes = [4, 32], strides = [1, 1]} : vector<4x96xf32> to vector<4x32xf32>
    %113 = vector.extract_strided_slice %103 {offsets = [0, 32], sizes = [4, 32], strides = [1, 1]} : vector<4x96xf32> to vector<4x32xf32>
    %114 = arith.addf %112, %113 : vector<4x32xf32>
    %115 = arith.negf %114 : vector<4x32xf32>
    %116 = math.exp %115 : vector<4x32xf32>
    %cst_53 = arith.constant 1.000000e+00 : f32
    %117 = vector.broadcast %cst_53 : f32 to vector<4x32xf32>
    %118 = arith.addf %117, %116 : vector<4x32xf32>
    %119 = arith.divf %117, %118 : vector<4x32xf32>
    %120 = vector.extract_strided_slice %100 {offsets = [0, 64], sizes = [4, 32], strides = [1, 1]} : vector<4x96xf32> to vector<4x32xf32>
    %121 = vector.extract_strided_slice %103 {offsets = [0, 64], sizes = [4, 32], strides = [1, 1]} : vector<4x96xf32> to vector<4x32xf32>
    %122 = arith.mulf %111, %121 : vector<4x32xf32>
    %123 = arith.addf %120, %122 : vector<4x32xf32>
    %124 = math.tanh %123 : vector<4x32xf32>
    %cst_54 = arith.constant 1.000000e+00 : f32
    %125 = vector.broadcast %cst_54 : f32 to vector<4x32xf32>
    %126 = arith.subf %125, %119 : vector<4x32xf32>
    %127 = arith.mulf %126, %124 : vector<4x32xf32>
    %128 = arith.mulf %119, %18 : vector<4x32xf32>
    %129 = arith.addf %127, %128 : vector<4x32xf32>
    %cst_55 = arith.constant dense<0.000000e+00> : vector<4xf32>
    %130 = vector.multi_reduction <add>, %129, %cst_55 [1] : vector<4x32xf32> to vector<4xf32>
    %131 = vector.shape_cast %130 : vector<4xf32> to vector<4x1xf32>
    %cst_56 = arith.constant 3.200000e+01 : f32
    %132 = vector.broadcast %cst_56 : f32 to vector<4x1xf32>
    %133 = arith.divf %131, %132 : vector<4x1xf32>
    %134 = vector.broadcast %133 : vector<4x1xf32> to vector<4x32xf32>
    %135 = arith.subf %129, %134 : vector<4x32xf32>
    %136 = arith.mulf %135, %135 : vector<4x32xf32>
    %cst_57 = arith.constant dense<0.000000e+00> : vector<4xf32>
    %137 = vector.multi_reduction <add>, %136, %cst_57 [1] : vector<4x32xf32> to vector<4xf32>
    %138 = vector.shape_cast %137 : vector<4xf32> to vector<4x1xf32>
    %cst_58 = arith.constant 3.200000e+01 : f32
    %139 = vector.broadcast %cst_58 : f32 to vector<4x1xf32>
    %140 = arith.divf %138, %139 : vector<4x1xf32>
    %141 = vector.broadcast %133 : vector<4x1xf32> to vector<4x32xf32>
    %142 = arith.subf %129, %141 : vector<4x32xf32>
    %cst_59 = arith.constant 9.99999974E-6 : f32
    %143 = vector.broadcast %cst_59 : f32 to vector<4x1xf32>
    %144 = arith.addf %140, %143 : vector<4x1xf32>
    %145 = math.rsqrt %144 : vector<4x1xf32>
    %146 = vector.broadcast %145 : vector<4x1xf32> to vector<4x32xf32>
    %147 = arith.mulf %142, %146 : vector<4x32xf32>
    %148 = vector.broadcast %16 : vector<1x32xf32> to vector<4x32xf32>
    %149 = arith.mulf %147, %148 : vector<4x32xf32>
    %150 = vector.broadcast %17 : vector<1x32xf32> to vector<4x32xf32>
    %151 = arith.addf %149, %150 : vector<4x32xf32>
    %cst_60 = arith.constant dense<0.000000e+00> : vector<4x5xf32>
    %152 = tpu.matmul %151, %8, %cst_60 {dimension_numbers = #tpu.dot_dimension_numbers<[1], [0], [0], [1], [0, 0, 1, 1], [], []>} : vector<4x32xf32>, vector<32x5xf32>, vector<4x5xf32> -> vector<4x5xf32>
    %153 = vector.broadcast %9 : vector<1x5xf32> to vector<4x5xf32>
    %154 = arith.addf %152, %153 : vector<4x5xf32>
    %155 = arith.index_cast %c0_i32 : i32 to index
    %c0_61 = arith.constant 0 : index
    %c0_62 = arith.constant 0 : index
    %156 = vector.load %arg11[%155, %c0_61, %c0_62] : memref<8x4x5xf32, #tpu.memory_space<vmem>>, vector<1x4x5xf32>
    %157 = vector.shape_cast %156 : vector<1x4x5xf32> to vector<4x5xf32>
    %158 = vector.shape_cast %154 : vector<4x5xf32> to vector<1x4x5xf32>
    tpu.vector_store %arg11[%155, %c0_61, %c0_62], %158 {strides = array<i32>} : memref<8x4x5xf32, #tpu.memory_space<vmem>>, vector<1x4x5xf32>,
    %c1_i32 = arith.constant 1 : i32
    %159 = arith.index_cast %c1_i32 : i32 to index
    %c0_63 = arith.constant 0 : index
    %c0_64 = arith.constant 0 : index
    %160 = vector.load %arg0[%159, %c0_63, %c0_64] : memref<8x4x16xf32, #tpu.memory_space<vmem>>, vector<1x4x16xf32>
    %161 = vector.shape_cast %160 : vector<1x4x16xf32> to vector<4x16xf32>
    %cst_65 = arith.constant dense<0.000000e+00> : vector<4xf32>
    %162 = vector.multi_reduction <add>, %161, %cst_65 [1] : vector<4x16xf32> to vector<4xf32>
    %163 = vector.shape_cast %162 : vector<4xf32> to vector<4x1xf32>
    %cst_66 = arith.constant 1.600000e+01 : f32
    %164 = vector.broadcast %cst_66 : f32 to vector<4x1xf32>
    %165 = arith.divf %163, %164 : vector<4x1xf32>
    %166 = vector.broadcast %165 : vector<4x1xf32> to vector<4x16xf32>
    %167 = arith.subf %161, %166 : vector<4x16xf32>
    %168 = arith.mulf %167, %167 : vector<4x16xf32>
    %cst_67 = arith.constant dense<0.000000e+00> : vector<4xf32>
    %169 = vector.multi_reduction <add>, %168, %cst_67 [1] : vector<4x16xf32> to vector<4xf32>
    %170 = vector.shape_cast %169 : vector<4xf32> to vector<4x1xf32>
    %cst_68 = arith.constant 1.600000e+01 : f32
    %171 = vector.broadcast %cst_68 : f32 to vector<4x1xf32>
    %172 = arith.divf %170, %171 : vector<4x1xf32>
    %173 = vector.broadcast %165 : vector<4x1xf32> to vector<4x16xf32>
    %174 = arith.subf %161, %173 : vector<4x16xf32>
    %cst_69 = arith.constant 9.99999974E-6 : f32
    %175 = vector.broadcast %cst_69 : f32 to vector<4x1xf32>
    %176 = arith.addf %172, %175 : vector<4x1xf32>
    %177 = math.rsqrt %176 : vector<4x1xf32>
    %178 = vector.broadcast %177 : vector<4x1xf32> to vector<4x16xf32>
    %179 = arith.mulf %174, %178 : vector<4x16xf32>
    %180 = vector.broadcast %0 : vector<1x16xf32> to vector<4x16xf32>
    %181 = arith.mulf %179, %180 : vector<4x16xf32>
    %182 = vector.broadcast %1 : vector<1x16xf32> to vector<4x16xf32>
    %183 = arith.addf %181, %182 : vector<4x16xf32>
    %cst_70 = arith.constant dense<0.000000e+00> : vector<4x32xf32>
    %184 = tpu.matmul %183, %2, %cst_70 {dimension_numbers = #tpu.dot_dimension_numbers<[1], [0], [0], [1], [0, 0, 1, 1], [], []>} : vector<4x16xf32>, vector<16x32xf32>, vector<4x32xf32> -> vector<4x32xf32>
    %185 = vector.broadcast %10 : vector<1x32xf32> to vector<4x32xf32>
    %186 = arith.addf %184, %185 : vector<4x32xf32>
    %cst_71 = arith.constant 0.000000e+00 : f32
    %187 = vector.broadcast %cst_71 : f32 to vector<4x32xf32>
    %188 = arith.maximumf %186, %187 : vector<4x32xf32>
    %cst_72 = arith.constant dense<0.000000e+00> : vector<4xf32>
    %189 = vector.multi_reduction <add>, %188, %cst_72 [1] : vector<4x32xf32> to vector<4xf32>
    %190 = vector.shape_cast %189 : vector<4xf32> to vector<4x1xf32>
    %cst_73 = arith.constant 3.200000e+01 : f32
    %191 = vector.broadcast %cst_73 : f32 to vector<4x1xf32>
    %192 = arith.divf %190, %191 : vector<4x1xf32>
    %193 = vector.broadcast %192 : vector<4x1xf32> to vector<4x32xf32>
    %194 = arith.subf %188, %193 : vector<4x32xf32>
    %195 = arith.mulf %194, %194 : vector<4x32xf32>
    %cst_74 = arith.constant dense<0.000000e+00> : vector<4xf32>
    %196 = vector.multi_reduction <add>, %195, %cst_74 [1] : vector<4x32xf32> to vector<4xf32>
    %197 = vector.shape_cast %196 : vector<4xf32> to vector<4x1xf32>
    %cst_75 = arith.constant 3.200000e+01 : f32
    %198 = vector.broadcast %cst_75 : f32 to vector<4x1xf32>
    %199 = arith.divf %197, %198 : vector<4x1xf32>
    %200 = vector.broadcast %192 : vector<4x1xf32> to vector<4x32xf32>
    %201 = arith.subf %188, %200 : vector<4x32xf32>
    %cst_76 = arith.constant 9.99999974E-6 : f32
    %202 = vector.broadcast %cst_76 : f32 to vector<4x1xf32>
    %203 = arith.addf %199, %202 : vector<4x1xf32>
    %204 = math.rsqrt %203 : vector<4x1xf32>
    %205 = vector.broadcast %204 : vector<4x1xf32> to vector<4x32xf32>
    %206 = arith.mulf %201, %205 : vector<4x32xf32>
    %207 = vector.broadcast %11 : vector<1x32xf32> to vector<4x32xf32>
    %208 = arith.mulf %206, %207 : vector<4x32xf32>
    %209 = vector.broadcast %12 : vector<1x32xf32> to vector<4x32xf32>
    %210 = arith.addf %208, %209 : vector<4x32xf32>
    %cst_77 = arith.constant dense<0.000000e+00> : vector<4x32xf32>
    %211 = tpu.matmul %210, %3, %cst_77 {dimension_numbers = #tpu.dot_dimension_numbers<[1], [0], [0], [1], [0, 0, 1, 1], [], []>} : vector<4x32xf32>, vector<32x32xf32>, vector<4x32xf32> -> vector<4x32xf32>
    %212 = vector.broadcast %13 : vector<1x32xf32> to vector<4x32xf32>
    %213 = arith.addf %211, %212 : vector<4x32xf32>
    %cst_78 = arith.constant 0.000000e+00 : f32
    %214 = vector.broadcast %cst_78 : f32 to vector<4x32xf32>
    %215 = arith.maximumf %213, %214 : vector<4x32xf32>
    %cst_79 = arith.constant dense<0.000000e+00> : vector<4xf32>
    %216 = vector.multi_reduction <add>, %215, %cst_79 [1] : vector<4x32xf32> to vector<4xf32>
    %217 = vector.shape_cast %216 : vector<4xf32> to vector<4x1xf32>
    %cst_80 = arith.constant 3.200000e+01 : f32
    %218 = vector.broadcast %cst_80 : f32 to vector<4x1xf32>
    %219 = arith.divf %217, %218 : vector<4x1xf32>
    %220 = vector.broadcast %219 : vector<4x1xf32> to vector<4x32xf32>
    %221 = arith.subf %215, %220 : vector<4x32xf32>
    %222 = arith.mulf %221, %221 : vector<4x32xf32>
    %cst_81 = arith.constant dense<0.000000e+00> : vector<4xf32>
    %223 = vector.multi_reduction <add>, %222, %cst_81 [1] : vector<4x32xf32> to vector<4xf32>
    %224 = vector.shape_cast %223 : vector<4xf32> to vector<4x1xf32>
    %cst_82 = arith.constant 3.200000e+01 : f32
    %225 = vector.broadcast %cst_82 : f32 to vector<4x1xf32>
    %226 = arith.divf %224, %225 : vector<4x1xf32>
    %227 = vector.broadcast %219 : vector<4x1xf32> to vector<4x32xf32>
    %228 = arith.subf %215, %227 : vector<4x32xf32>
    %cst_83 = arith.constant 9.99999974E-6 : f32
    %229 = vector.broadcast %cst_83 : f32 to vector<4x1xf32>
    %230 = arith.addf %226, %229 : vector<4x1xf32>
    %231 = math.rsqrt %230 : vector<4x1xf32>
    %232 = vector.broadcast %231 : vector<4x1xf32> to vector<4x32xf32>
    %233 = arith.mulf %228, %232 : vector<4x32xf32>
    %234 = vector.broadcast %14 : vector<1x32xf32> to vector<4x32xf32>
    %235 = arith.mulf %233, %234 : vector<4x32xf32>
    %236 = vector.broadcast %15 : vector<1x32xf32> to vector<4x32xf32>
    %237 = arith.addf %235, %236 : vector<4x32xf32>
    %cst_84 = arith.constant dense<0.000000e+00> : vector<4x96xf32>
    %238 = tpu.matmul %237, %4, %cst_84 {dimension_numbers = #tpu.dot_dimension_numbers<[1], [0], [0], [1], [0, 0, 1, 1], [], []>} : vector<4x32xf32>, vector<32x96xf32>, vector<4x96xf32> -> vector<4x96xf32>
    %239 = vector.broadcast %6 : vector<1x96xf32> to vector<4x96xf32>
    %240 = arith.addf %238, %239 : vector<4x96xf32>
    %cst_85 = arith.constant dense<0.000000e+00> : vector<4x96xf32>
    %241 = tpu.matmul %129, %5, %cst_85 {dimension_numbers = #tpu.dot_dimension_numbers<[1], [0], [0], [1], [0, 0, 1, 1], [], []>} : vector<4x32xf32>, vector<32x96xf32>, vector<4x96xf32> -> vector<4x96xf32>
    %242 = vector.broadcast %7 : vector<1x96xf32> to vector<4x96xf32>
    %243 = arith.addf %241, %242 : vector<4x96xf32>
    %244 = vector.extract_strided_slice %240 {offsets = [0, 0], sizes = [4, 32], strides = [1, 1]} : vector<4x96xf32> to vector<4x32xf32>
    %245 = vector.extract_strided_slice %243 {offsets = [0, 0], sizes = [4, 32], strides = [1, 1]} : vector<4x96xf32> to vector<4x32xf32>
    %246 = arith.addf %244, %245 : vector<4x32xf32>
    %247 = arith.negf %246 : vector<4x32xf32>
    %248 = math.exp %247 : vector<4x32xf32>
    %cst_86 = arith.constant 1.000000e+00 : f32
    %249 = vector.broadcast %cst_86 : f32 to vector<4x32xf32>
    %250 = arith.addf %249, %248 : vector<4x32xf32>
    %251 = arith.divf %249, %250 : vector<4x32xf32>
    %252 = vector.extract_strided_slice %240 {offsets = [0, 32], sizes = [4, 32], strides = [1, 1]} : vector<4x96xf32> to vector<4x32xf32>
    %253 = vector.extract_strided_slice %243 {offsets = [0, 32], sizes = [4, 32], strides = [1, 1]} : vector<4x96xf32> to vector<4x32xf32>
    %254 = arith.addf %252, %253 : vector<4x32xf32>
    %255 = arith.negf %254 : vector<4x32xf32>
    %256 = math.exp %255 : vector<4x32xf32>
    %cst_87 = arith.constant 1.000000e+00 : f32
    %257 = vector.broadcast %cst_87 : f32 to vector<4x32xf32>
    %258 = arith.addf %257, %256 : vector<4x32xf32>
    %259 = arith.divf %257, %258 : vector<4x32xf32>
    %260 = vector.extract_strided_slice %240 {offsets = [0, 64], sizes = [4, 32], strides = [1, 1]} : vector<4x96xf32> to vector<4x32xf32>
    %261 = vector.extract_strided_slice %243 {offsets = [0, 64], sizes = [4, 32], strides = [1, 1]} : vector<4x96xf32> to vector<4x32xf32>
    %262 = arith.mulf %251, %261 : vector<4x32xf32>
    %263 = arith.addf %260, %262 : vector<4x32xf32>
    %264 = math.tanh %263 : vector<4x32xf32>
    %cst_88 = arith.constant 1.000000e+00 : f32
    %265 = vector.broadcast %cst_88 : f32 to vector<4x32xf32>
    %266 = arith.subf %265, %259 : vector<4x32xf32>
    %267 = arith.mulf %266, %264 : vector<4x32xf32>
    %268 = arith.mulf %259, %129 : vector<4x32xf32>
    %269 = arith.addf %267, %268 : vector<4x32xf32>
    %cst_89 = arith.constant dense<0.000000e+00> : vector<4xf32>
    %270 = vector.multi_reduction <add>, %269, %cst_89 [1] : vector<4x32xf32> to vector<4xf32>
    %271 = vector.shape_cast %270 : vector<4xf32> to vector<4x1xf32>
    %cst_90 = arith.constant 3.200000e+01 : f32
    %272 = vector.broadcast %cst_90 : f32 to vector<4x1xf32>
    %273 = arith.divf %271, %272 : vector<4x1xf32>
    %274 = vector.broadcast %273 : vector<4x1xf32> to vector<4x32xf32>
    %275 = arith.subf %269, %274 : vector<4x32xf32>
    %276 = arith.mulf %275, %275 : vector<4x32xf32>
    %cst_91 = arith.constant dense<0.000000e+00> : vector<4xf32>
    %277 = vector.multi_reduction <add>, %276, %cst_91 [1] : vector<4x32xf32> to vector<4xf32>
    %278 = vector.shape_cast %277 : vector<4xf32> to vector<4x1xf32>
    %cst_92 = arith.constant 3.200000e+01 : f32
    %279 = vector.broadcast %cst_92 : f32 to vector<4x1xf32>
    %280 = arith.divf %278, %279 : vector<4x1xf32>
    %281 = vector.broadcast %273 : vector<4x1xf32> to vector<4x32xf32>
    %282 = arith.subf %269, %281 : vector<4x32xf32>
    %cst_93 = arith.constant 9.99999974E-6 : f32
    %283 = vector.broadcast %cst_93 : f32 to vector<4x1xf32>
    %284 = arith.addf %280, %283 : vector<4x1xf32>
    %285 = math.rsqrt %284 : vector<4x1xf32>
    %286 = vector.broadcast %285 : vector<4x1xf32> to vector<4x32xf32>
    %287 = arith.mulf %282, %286 : vector<4x32xf32>
    %288 = vector.broadcast %16 : vector<1x32xf32> to vector<4x32xf32>
    %289 = arith.mulf %287, %288 : vector<4x32xf32>
    %290 = vector.broadcast %17 : vector<1x32xf32> to vector<4x32xf32>
    %291 = arith.addf %289, %290 : vector<4x32xf32>
    %cst_94 = arith.constant dense<0.000000e+00> : vector<4x5xf32>
    %292 = tpu.matmul %291, %8, %cst_94 {dimension_numbers = #tpu.dot_dimension_numbers<[1], [0], [0], [1], [0, 0, 1, 1], [], []>} : vector<4x32xf32>, vector<32x5xf32>, vector<4x5xf32> -> vector<4x5xf32>
    %293 = vector.broadcast %9 : vector<1x5xf32> to vector<4x5xf32>
    %294 = arith.addf %292, %293 : vector<4x5xf32>
    %295 = arith.index_cast %c1_i32 : i32 to index
    %c0_95 = arith.constant 0 : index
    %c0_96 = arith.constant 0 : index
    %296 = vector.load %arg11[%295, %c0_95, %c0_96] : memref<8x4x5xf32, #tpu.memory_space<vmem>>, vector<1x4x5xf32>
    %297 = vector.shape_cast %296 : vector<1x4x5xf32> to vector<4x5xf32>
    %298 = vector.shape_cast %294 : vector<4x5xf32> to vector<1x4x5xf32>
    tpu.vector_store %arg11[%295, %c0_95, %c0_96], %298 {strides = array<i32>} : memref<8x4x5xf32, #tpu.memory_space<vmem>>, vector<1x4x5xf32>,
    %c2_i32 = arith.constant 2 : i32
    %299 = arith.index_cast %c2_i32 : i32 to index
    %c0_97 = arith.constant 0 : index
    %c0_98 = arith.constant 0 : index
    %300 = vector.load %arg0[%299, %c0_97, %c0_98] : memref<8x4x16xf32, #tpu.memory_space<vmem>>, vector<1x4x16xf32>
    %301 = vector.shape_cast %300 : vector<1x4x16xf32> to vector<4x16xf32>
    %cst_99 = arith.constant dense<0.000000e+00> : vector<4xf32>
    %302 = vector.multi_reduction <add>, %301, %cst_99 [1] : vector<4x16xf32> to vector<4xf32>
    %303 = vector.shape_cast %302 : vector<4xf32> to vector<4x1xf32>
    %cst_100 = arith.constant 1.600000e+01 : f32
    %304 = vector.broadcast %cst_100 : f32 to vector<4x1xf32>
    %305 = arith.divf %303, %304 : vector<4x1xf32>
    %306 = vector.broadcast %305 : vector<4x1xf32> to vector<4x16xf32>
    %307 = arith.subf %301, %306 : vector<4x16xf32>
    %308 = arith.mulf %307, %307 : vector<4x16xf32>
    %cst_101 = arith.constant dense<0.000000e+00> : vector<4xf32>
    %309 = vector.multi_reduction <add>, %308, %cst_101 [1] : vector<4x16xf32> to vector<4xf32>
    %310 = vector.shape_cast %309 : vector<4xf32> to vector<4x1xf32>
    %cst_102 = arith.constant 1.600000e+01 : f32
    %311 = vector.broadcast %cst_102 : f32 to vector<4x1xf32>
    %312 = arith.divf %310, %311 : vector<4x1xf32>
    %313 = vector.broadcast %305 : vector<4x1xf32> to vector<4x16xf32>
    %314 = arith.subf %301, %313 : vector<4x16xf32>
    %cst_103 = arith.constant 9.99999974E-6 : f32
    %315 = vector.broadcast %cst_103 : f32 to vector<4x1xf32>
    %316 = arith.addf %312, %315 : vector<4x1xf32>
    %317 = math.rsqrt %316 : vector<4x1xf32>
    %318 = vector.broadcast %317 : vector<4x1xf32> to vector<4x16xf32>
    %319 = arith.mulf %314, %318 : vector<4x16xf32>
    %320 = vector.broadcast %0 : vector<1x16xf32> to vector<4x16xf32>
    %321 = arith.mulf %319, %320 : vector<4x16xf32>
    %322 = vector.broadcast %1 : vector<1x16xf32> to vector<4x16xf32>
    %323 = arith.addf %321, %322 : vector<4x16xf32>
    %cst_104 = arith.constant dense<0.000000e+00> : vector<4x32xf32>
    %324 = tpu.matmul %323, %2, %cst_104 {dimension_numbers = #tpu.dot_dimension_numbers<[1], [0], [0], [1], [0, 0, 1, 1], [], []>} : vector<4x16xf32>, vector<16x32xf32>, vector<4x32xf32> -> vector<4x32xf32>
    %325 = vector.broadcast %10 : vector<1x32xf32> to vector<4x32xf32>
    %326 = arith.addf %324, %325 : vector<4x32xf32>
    %cst_105 = arith.constant 0.000000e+00 : f32
    %327 = vector.broadcast %cst_105 : f32 to vector<4x32xf32>
    %328 = arith.maximumf %326, %327 : vector<4x32xf32>
    %cst_106 = arith.constant dense<0.000000e+00> : vector<4xf32>
    %329 = vector.multi_reduction <add>, %328, %cst_106 [1] : vector<4x32xf32> to vector<4xf32>
    %330 = vector.shape_cast %329 : vector<4xf32> to vector<4x1xf32>
    %cst_107 = arith.constant 3.200000e+01 : f32
    %331 = vector.broadcast %cst_107 : f32 to vector<4x1xf32>
    %332 = arith.divf %330, %331 : vector<4x1xf32>
    %333 = vector.broadcast %332 : vector<4x1xf32> to vector<4x32xf32>
    %334 = arith.subf %328, %333 : vector<4x32xf32>
    %335 = arith.mulf %334, %334 : vector<4x32xf32>
    %cst_108 = arith.constant dense<0.000000e+00> : vector<4xf32>
    %336 = vector.multi_reduction <add>, %335, %cst_108 [1] : vector<4x32xf32> to vector<4xf32>
    %337 = vector.shape_cast %336 : vector<4xf32> to vector<4x1xf32>
    %cst_109 = arith.constant 3.200000e+01 : f32
    %338 = vector.broadcast %cst_109 : f32 to vector<4x1xf32>
    %339 = arith.divf %337, %338 : vector<4x1xf32>
    %340 = vector.broadcast %332 : vector<4x1xf32> to vector<4x32xf32>
    %341 = arith.subf %328, %340 : vector<4x32xf32>
    %cst_110 = arith.constant 9.99999974E-6 : f32
    %342 = vector.broadcast %cst_110 : f32 to vector<4x1xf32>
    %343 = arith.addf %339, %342 : vector<4x1xf32>
    %344 = math.rsqrt %343 : vector<4x1xf32>
    %345 = vector.broadcast %344 : vector<4x1xf32> to vector<4x32xf32>
    %346 = arith.mulf %341, %345 : vector<4x32xf32>
    %347 = vector.broadcast %11 : vector<1x32xf32> to vector<4x32xf32>
    %348 = arith.mulf %346, %347 : vector<4x32xf32>
    %349 = vector.broadcast %12 : vector<1x32xf32> to vector<4x32xf32>
    %350 = arith.addf %348, %349 : vector<4x32xf32>
    %cst_111 = arith.constant dense<0.000000e+00> : vector<4x32xf32>
    %351 = tpu.matmul %350, %3, %cst_111 {dimension_numbers = #tpu.dot_dimension_numbers<[1], [0], [0], [1], [0, 0, 1, 1], [], []>} : vector<4x32xf32>, vector<32x32xf32>, vector<4x32xf32> -> vector<4x32xf32>
    %352 = vector.broadcast %13 : vector<1x32xf32> to vector<4x32xf32>
    %353 = arith.addf %351, %352 : vector<4x32xf32>
    %cst_112 = arith.constant 0.000000e+00 : f32
    %354 = vector.broadcast %cst_112 : f32 to vector<4x32xf32>
    %355 = arith.maximumf %353, %354 : vector<4x32xf32>
    %cst_113 = arith.constant dense<0.000000e+00> : vector<4xf32>
    %356 = vector.multi_reduction <add>, %355, %cst_113 [1] : vector<4x32xf32> to vector<4xf32>
    %357 = vector.shape_cast %356 : vector<4xf32> to vector<4x1xf32>
    %cst_114 = arith.constant 3.200000e+01 : f32
    %358 = vector.broadcast %cst_114 : f32 to vector<4x1xf32>
    %359 = arith.divf %357, %358 : vector<4x1xf32>
    %360 = vector.broadcast %359 : vector<4x1xf32> to vector<4x32xf32>
    %361 = arith.subf %355, %360 : vector<4x32xf32>
    %362 = arith.mulf %361, %361 : vector<4x32xf32>
    %cst_115 = arith.constant dense<0.000000e+00> : vector<4xf32>
    %363 = vector.multi_reduction <add>, %362, %cst_115 [1] : vector<4x32xf32> to vector<4xf32>
    %364 = vector.shape_cast %363 : vector<4xf32> to vector<4x1xf32>
    %cst_116 = arith.constant 3.200000e+01 : f32
    %365 = vector.broadcast %cst_116 : f32 to vector<4x1xf32>
    %366 = arith.divf %364, %365 : vector<4x1xf32>
    %367 = vector.broadcast %359 : vector<4x1xf32> to vector<4x32xf32>
    %368 = arith.subf %355, %367 : vector<4x32xf32>
    %cst_117 = arith.constant 9.99999974E-6 : f32
    %369 = vector.broadcast %cst_117 : f32 to vector<4x1xf32>
    %370 = arith.addf %366, %369 : vector<4x1xf32>
    %371 = math.rsqrt %370 : vector<4x1xf32>
    %372 = vector.broadcast %371 : vector<4x1xf32> to vector<4x32xf32>
    %373 = arith.mulf %368, %372 : vector<4x32xf32>
    %374 = vector.broadcast %14 : vector<1x32xf32> to vector<4x32xf32>
    %375 = arith.mulf %373, %374 : vector<4x32xf32>
    %376 = vector.broadcast %15 : vector<1x32xf32> to vector<4x32xf32>
    %377 = arith.addf %375, %376 : vector<4x32xf32>
    %cst_118 = arith.constant dense<0.000000e+00> : vector<4x96xf32>
    %378 = tpu.matmul %377, %4, %cst_118 {dimension_numbers = #tpu.dot_dimension_numbers<[1], [0], [0], [1], [0, 0, 1, 1], [], []>} : vector<4x32xf32>, vector<32x96xf32>, vector<4x96xf32> -> vector<4x96xf32>
    %379 = vector.broadcast %6 : vector<1x96xf32> to vector<4x96xf32>
    %380 = arith.addf %378, %379 : vector<4x96xf32>
    %cst_119 = arith.constant dense<0.000000e+00> : vector<4x96xf32>
    %381 = tpu.matmul %269, %5, %cst_119 {dimension_numbers = #tpu.dot_dimension_numbers<[1], [0], [0], [1], [0, 0, 1, 1], [], []>} : vector<4x32xf32>, vector<32x96xf32>, vector<4x96xf32> -> vector<4x96xf32>
    %382 = vector.broadcast %7 : vector<1x96xf32> to vector<4x96xf32>
    %383 = arith.addf %381, %382 : vector<4x96xf32>
    %384 = vector.extract_strided_slice %380 {offsets = [0, 0], sizes = [4, 32], strides = [1, 1]} : vector<4x96xf32> to vector<4x32xf32>
    %385 = vector.extract_strided_slice %383 {offsets = [0, 0], sizes = [4, 32], strides = [1, 1]} : vector<4x96xf32> to vector<4x32xf32>
    %386 = arith.addf %384, %385 : vector<4x32xf32>
    %387 = arith.negf %386 : vector<4x32xf32>
    %388 = math.exp %387 : vector<4x32xf32>
    %cst_120 = arith.constant 1.000000e+00 : f32
    %389 = vector.broadcast %cst_120 : f32 to vector<4x32xf32>
    %390 = arith.addf %389, %388 : vector<4x32xf32>
    %391 = arith.divf %389, %390 : vector<4x32xf32>
    %392 = vector.extract_strided_slice %380 {offsets = [0, 32], sizes = [4, 32], strides = [1, 1]} : vector<4x96xf32> to vector<4x32xf32>
    %393 = vector.extract_strided_slice %383 {offsets = [0, 32], sizes = [4, 32], strides = [1, 1]} : vector<4x96xf32> to vector<4x32xf32>
    %394 = arith.addf %392, %393 : vector<4x32xf32>
    %395 = arith.negf %394 : vector<4x32xf32>
    %396 = math.exp %395 : vector<4x32xf32>
    %cst_121 = arith.constant 1.000000e+00 : f32
    %397 = vector.broadcast %cst_121 : f32 to vector<4x32xf32>
    %398 = arith.addf %397, %396 : vector<4x32xf32>
    %399 = arith.divf %397, %398 : vector<4x32xf32>
    %400 = vector.extract_strided_slice %380 {offsets = [0, 64], sizes = [4, 32], strides = [1, 1]} : vector<4x96xf32> to vector<4x32xf32>
    %401 = vector.extract_strided_slice %383 {offsets = [0, 64], sizes = [4, 32], strides = [1, 1]} : vector<4x96xf32> to vector<4x32xf32>
    %402 = arith.mulf %391, %401 : vector<4x32xf32>
    %403 = arith.addf %400, %402 : vector<4x32xf32>
    %404 = math.tanh %403 : vector<4x32xf32>
    %cst_122 = arith.constant 1.000000e+00 : f32
    %405 = vector.broadcast %cst_122 : f32 to vector<4x32xf32>
    %406 = arith.subf %405, %399 : vector<4x32xf32>
    %407 = arith.mulf %406, %404 : vector<4x32xf32>
    %408 = arith.mulf %399, %269 : vector<4x32xf32>
    %409 = arith.addf %407, %408 : vector<4x32xf32>
    %cst_123 = arith.constant dense<0.000000e+00> : vector<4xf32>
    %410 = vector.multi_reduction <add>, %409, %cst_123 [1] : vector<4x32xf32> to vector<4xf32>
    %411 = vector.shape_cast %410 : vector<4xf32> to vector<4x1xf32>
    %cst_124 = arith.constant 3.200000e+01 : f32
    %412 = vector.broadcast %cst_124 : f32 to vector<4x1xf32>
    %413 = arith.divf %411, %412 : vector<4x1xf32>
    %414 = vector.broadcast %413 : vector<4x1xf32> to vector<4x32xf32>
    %415 = arith.subf %409, %414 : vector<4x32xf32>
    %416 = arith.mulf %415, %415 : vector<4x32xf32>
    %cst_125 = arith.constant dense<0.000000e+00> : vector<4xf32>
    %417 = vector.multi_reduction <add>, %416, %cst_125 [1] : vector<4x32xf32> to vector<4xf32>
    %418 = vector.shape_cast %417 : vector<4xf32> to vector<4x1xf32>
    %cst_126 = arith.constant 3.200000e+01 : f32
    %419 = vector.broadcast %cst_126 : f32 to vector<4x1xf32>
    %420 = arith.divf %418, %419 : vector<4x1xf32>
    %421 = vector.broadcast %413 : vector<4x1xf32> to vector<4x32xf32>
    %422 = arith.subf %409, %421 : vector<4x32xf32>
    %cst_127 = arith.constant 9.99999974E-6 : f32
    %423 = vector.broadcast %cst_127 : f32 to vector<4x1xf32>
    %424 = arith.addf %420, %423 : vector<4x1xf32>
    %425 = math.rsqrt %424 : vector<4x1xf32>
    %426 = vector.broadcast %425 : vector<4x1xf32> to vector<4x32xf32>
    %427 = arith.mulf %422, %426 : vector<4x32xf32>
    %428 = vector.broadcast %16 : vector<1x32xf32> to vector<4x32xf32>
    %429 = arith.mulf %427, %428 : vector<4x32xf32>
    %430 = vector.broadcast %17 : vector<1x32xf32> to vector<4x32xf32>
    %431 = arith.addf %429, %430 : vector<4x32xf32>
    %cst_128 = arith.constant dense<0.000000e+00> : vector<4x5xf32>
    %432 = tpu.matmul %431, %8, %cst_128 {dimension_numbers = #tpu.dot_dimension_numbers<[1], [0], [0], [1], [0, 0, 1, 1], [], []>} : vector<4x32xf32>, vector<32x5xf32>, vector<4x5xf32> -> vector<4x5xf32>
    %433 = vector.broadcast %9 : vector<1x5xf32> to vector<4x5xf32>
    %434 = arith.addf %432, %433 : vector<4x5xf32>
    %435 = arith.index_cast %c2_i32 : i32 to index
    %c0_129 = arith.constant 0 : index
    %c0_130 = arith.constant 0 : index
    %436 = vector.load %arg11[%435, %c0_129, %c0_130] : memref<8x4x5xf32, #tpu.memory_space<vmem>>, vector<1x4x5xf32>
    %437 = vector.shape_cast %436 : vector<1x4x5xf32> to vector<4x5xf32>
    %438 = vector.shape_cast %434 : vector<4x5xf32> to vector<1x4x5xf32>
    tpu.vector_store %arg11[%435, %c0_129, %c0_130], %438 {strides = array<i32>} : memref<8x4x5xf32, #tpu.memory_space<vmem>>, vector<1x4x5xf32>,
    %c3_i32 = arith.constant 3 : i32
    %439 = arith.index_cast %c3_i32 : i32 to index
    %c0_131 = arith.constant 0 : index
    %c0_132 = arith.constant 0 : index
    %440 = vector.load %arg0[%439, %c0_131, %c0_132] : memref<8x4x16xf32, #tpu.memory_space<vmem>>, vector<1x4x16xf32>
    %441 = vector.shape_cast %440 : vector<1x4x16xf32> to vector<4x16xf32>
    %cst_133 = arith.constant dense<0.000000e+00> : vector<4xf32>
    %442 = vector.multi_reduction <add>, %441, %cst_133 [1] : vector<4x16xf32> to vector<4xf32>
    %443 = vector.shape_cast %442 : vector<4xf32> to vector<4x1xf32>
    %cst_134 = arith.constant 1.600000e+01 : f32
    %444 = vector.broadcast %cst_134 : f32 to vector<4x1xf32>
    %445 = arith.divf %443, %444 : vector<4x1xf32>
    %446 = vector.broadcast %445 : vector<4x1xf32> to vector<4x16xf32>
    %447 = arith.subf %441, %446 : vector<4x16xf32>
    %448 = arith.mulf %447, %447 : vector<4x16xf32>
    %cst_135 = arith.constant dense<0.000000e+00> : vector<4xf32>
    %449 = vector.multi_reduction <add>, %448, %cst_135 [1] : vector<4x16xf32> to vector<4xf32>
    %450 = vector.shape_cast %449 : vector<4xf32> to vector<4x1xf32>
    %cst_136 = arith.constant 1.600000e+01 : f32
    %451 = vector.broadcast %cst_136 : f32 to vector<4x1xf32>
    %452 = arith.divf %450, %451 : vector<4x1xf32>
    %453 = vector.broadcast %445 : vector<4x1xf32> to vector<4x16xf32>
    %454 = arith.subf %441, %453 : vector<4x16xf32>
    %cst_137 = arith.constant 9.99999974E-6 : f32
    %455 = vector.broadcast %cst_137 : f32 to vector<4x1xf32>
    %456 = arith.addf %452, %455 : vector<4x1xf32>
    %457 = math.rsqrt %456 : vector<4x1xf32>
    %458 = vector.broadcast %457 : vector<4x1xf32> to vector<4x16xf32>
    %459 = arith.mulf %454, %458 : vector<4x16xf32>
    %460 = vector.broadcast %0 : vector<1x16xf32> to vector<4x16xf32>
    %461 = arith.mulf %459, %460 : vector<4x16xf32>
    %462 = vector.broadcast %1 : vector<1x16xf32> to vector<4x16xf32>
    %463 = arith.addf %461, %462 : vector<4x16xf32>
    %cst_138 = arith.constant dense<0.000000e+00> : vector<4x32xf32>
    %464 = tpu.matmul %463, %2, %cst_138 {dimension_numbers = #tpu.dot_dimension_numbers<[1], [0], [0], [1], [0, 0, 1, 1], [], []>} : vector<4x16xf32>, vector<16x32xf32>, vector<4x32xf32> -> vector<4x32xf32>
    %465 = vector.broadcast %10 : vector<1x32xf32> to vector<4x32xf32>
    %466 = arith.addf %464, %465 : vector<4x32xf32>
    %cst_139 = arith.constant 0.000000e+00 : f32
    %467 = vector.broadcast %cst_139 : f32 to vector<4x32xf32>
    %468 = arith.maximumf %466, %467 : vector<4x32xf32>
    %cst_140 = arith.constant dense<0.000000e+00> : vector<4xf32>
    %469 = vector.multi_reduction <add>, %468, %cst_140 [1] : vector<4x32xf32> to vector<4xf32>
    %470 = vector.shape_cast %469 : vector<4xf32> to vector<4x1xf32>
    %cst_141 = arith.constant 3.200000e+01 : f32
    %471 = vector.broadcast %cst_141 : f32 to vector<4x1xf32>
    %472 = arith.divf %470, %471 : vector<4x1xf32>
    %473 = vector.broadcast %472 : vector<4x1xf32> to vector<4x32xf32>
    %474 = arith.subf %468, %473 : vector<4x32xf32>
    %475 = arith.mulf %474, %474 : vector<4x32xf32>
    %cst_142 = arith.constant dense<0.000000e+00> : vector<4xf32>
    %476 = vector.multi_reduction <add>, %475, %cst_142 [1] : vector<4x32xf32> to vector<4xf32>
    %477 = vector.shape_cast %476 : vector<4xf32> to vector<4x1xf32>
    %cst_143 = arith.constant 3.200000e+01 : f32
    %478 = vector.broadcast %cst_143 : f32 to vector<4x1xf32>
    %479 = arith.divf %477, %478 : vector<4x1xf32>
    %480 = vector.broadcast %472 : vector<4x1xf32> to vector<4x32xf32>
    %481 = arith.subf %468, %480 : vector<4x32xf32>
    %cst_144 = arith.constant 9.99999974E-6 : f32
    %482 = vector.broadcast %cst_144 : f32 to vector<4x1xf32>
    %483 = arith.addf %479, %482 : vector<4x1xf32>
    %484 = math.rsqrt %483 : vector<4x1xf32>
    %485 = vector.broadcast %484 : vector<4x1xf32> to vector<4x32xf32>
    %486 = arith.mulf %481, %485 : vector<4x32xf32>
    %487 = vector.broadcast %11 : vector<1x32xf32> to vector<4x32xf32>
    %488 = arith.mulf %486, %487 : vector<4x32xf32>
    %489 = vector.broadcast %12 : vector<1x32xf32> to vector<4x32xf32>
    %490 = arith.addf %488, %489 : vector<4x32xf32>
    %cst_145 = arith.constant dense<0.000000e+00> : vector<4x32xf32>
    %491 = tpu.matmul %490, %3, %cst_145 {dimension_numbers = #tpu.dot_dimension_numbers<[1], [0], [0], [1], [0, 0, 1, 1], [], []>} : vector<4x32xf32>, vector<32x32xf32>, vector<4x32xf32> -> vector<4x32xf32>
    %492 = vector.broadcast %13 : vector<1x32xf32> to vector<4x32xf32>
    %493 = arith.addf %491, %492 : vector<4x32xf32>
    %cst_146 = arith.constant 0.000000e+00 : f32
    %494 = vector.broadcast %cst_146 : f32 to vector<4x32xf32>
    %495 = arith.maximumf %493, %494 : vector<4x32xf32>
    %cst_147 = arith.constant dense<0.000000e+00> : vector<4xf32>
    %496 = vector.multi_reduction <add>, %495, %cst_147 [1] : vector<4x32xf32> to vector<4xf32>
    %497 = vector.shape_cast %496 : vector<4xf32> to vector<4x1xf32>
    %cst_148 = arith.constant 3.200000e+01 : f32
    %498 = vector.broadcast %cst_148 : f32 to vector<4x1xf32>
    %499 = arith.divf %497, %498 : vector<4x1xf32>
    %500 = vector.broadcast %499 : vector<4x1xf32> to vector<4x32xf32>
    %501 = arith.subf %495, %500 : vector<4x32xf32>
    %502 = arith.mulf %501, %501 : vector<4x32xf32>
    %cst_149 = arith.constant dense<0.000000e+00> : vector<4xf32>
    %503 = vector.multi_reduction <add>, %502, %cst_149 [1] : vector<4x32xf32> to vector<4xf32>
    %504 = vector.shape_cast %503 : vector<4xf32> to vector<4x1xf32>
    %cst_150 = arith.constant 3.200000e+01 : f32
    %505 = vector.broadcast %cst_150 : f32 to vector<4x1xf32>
    %506 = arith.divf %504, %505 : vector<4x1xf32>
    %507 = vector.broadcast %499 : vector<4x1xf32> to vector<4x32xf32>
    %508 = arith.subf %495, %507 : vector<4x32xf32>
    %cst_151 = arith.constant 9.99999974E-6 : f32
    %509 = vector.broadcast %cst_151 : f32 to vector<4x1xf32>
    %510 = arith.addf %506, %509 : vector<4x1xf32>
    %511 = math.rsqrt %510 : vector<4x1xf32>
    %512 = vector.broadcast %511 : vector<4x1xf32> to vector<4x32xf32>
    %513 = arith.mulf %508, %512 : vector<4x32xf32>
    %514 = vector.broadcast %14 : vector<1x32xf32> to vector<4x32xf32>
    %515 = arith.mulf %513, %514 : vector<4x32xf32>
    %516 = vector.broadcast %15 : vector<1x32xf32> to vector<4x32xf32>
    %517 = arith.addf %515, %516 : vector<4x32xf32>
    %cst_152 = arith.constant dense<0.000000e+00> : vector<4x96xf32>
    %518 = tpu.matmul %517, %4, %cst_152 {dimension_numbers = #tpu.dot_dimension_numbers<[1], [0], [0], [1], [0, 0, 1, 1], [], []>} : vector<4x32xf32>, vector<32x96xf32>, vector<4x96xf32> -> vector<4x96xf32>
    %519 = vector.broadcast %6 : vector<1x96xf32> to vector<4x96xf32>
    %520 = arith.addf %518, %519 : vector<4x96xf32>
    %cst_153 = arith.constant dense<0.000000e+00> : vector<4x96xf32>
    %521 = tpu.matmul %409, %5, %cst_153 {dimension_numbers = #tpu.dot_dimension_numbers<[1], [0], [0], [1], [0, 0, 1, 1], [], []>} : vector<4x32xf32>, vector<32x96xf32>, vector<4x96xf32> -> vector<4x96xf32>
    %522 = vector.broadcast %7 : vector<1x96xf32> to vector<4x96xf32>
    %523 = arith.addf %521, %522 : vector<4x96xf32>
    %524 = vector.extract_strided_slice %520 {offsets = [0, 0], sizes = [4, 32], strides = [1, 1]} : vector<4x96xf32> to vector<4x32xf32>
    %525 = vector.extract_strided_slice %523 {offsets = [0, 0], sizes = [4, 32], strides = [1, 1]} : vector<4x96xf32> to vector<4x32xf32>
    %526 = arith.addf %524, %525 : vector<4x32xf32>
    %527 = arith.negf %526 : vector<4x32xf32>
    %528 = math.exp %527 : vector<4x32xf32>
    %cst_154 = arith.constant 1.000000e+00 : f32
    %529 = vector.broadcast %cst_154 : f32 to vector<4x32xf32>
    %530 = arith.addf %529, %528 : vector<4x32xf32>
    %531 = arith.divf %529, %530 : vector<4x32xf32>
    %532 = vector.extract_strided_slice %520 {offsets = [0, 32], sizes = [4, 32], strides = [1, 1]} : vector<4x96xf32> to vector<4x32xf32>
    %533 = vector.extract_strided_slice %523 {offsets = [0, 32], sizes = [4, 32], strides = [1, 1]} : vector<4x96xf32> to vector<4x32xf32>
    %534 = arith.addf %532, %533 : vector<4x32xf32>
    %535 = arith.negf %534 : vector<4x32xf32>
    %536 = math.exp %535 : vector<4x32xf32>
    %cst_155 = arith.constant 1.000000e+00 : f32
    %537 = vector.broadcast %cst_155 : f32 to vector<4x32xf32>
    %538 = arith.addf %537, %536 : vector<4x32xf32>
    %539 = arith.divf %537, %538 : vector<4x32xf32>
    %540 = vector.extract_strided_slice %520 {offsets = [0, 64], sizes = [4, 32], strides = [1, 1]} : vector<4x96xf32> to vector<4x32xf32>
    %541 = vector.extract_strided_slice %523 {offsets = [0, 64], sizes = [4, 32], strides = [1, 1]} : vector<4x96xf32> to vector<4x32xf32>
    %542 = arith.mulf %531, %541 : vector<4x32xf32>
    %543 = arith.addf %540, %542 : vector<4x32xf32>
    %544 = math.tanh %543 : vector<4x32xf32>
    %cst_156 = arith.constant 1.000000e+00 : f32
    %545 = vector.broadcast %cst_156 : f32 to vector<4x32xf32>
    %546 = arith.subf %545, %539 : vector<4x32xf32>
    %547 = arith.mulf %546, %544 : vector<4x32xf32>
    %548 = arith.mulf %539, %409 : vector<4x32xf32>
    %549 = arith.addf %547, %548 : vector<4x32xf32>
    %cst_157 = arith.constant dense<0.000000e+00> : vector<4xf32>
    %550 = vector.multi_reduction <add>, %549, %cst_157 [1] : vector<4x32xf32> to vector<4xf32>
    %551 = vector.shape_cast %550 : vector<4xf32> to vector<4x1xf32>
    %cst_158 = arith.constant 3.200000e+01 : f32
    %552 = vector.broadcast %cst_158 : f32 to vector<4x1xf32>
    %553 = arith.divf %551, %552 : vector<4x1xf32>
    %554 = vector.broadcast %553 : vector<4x1xf32> to vector<4x32xf32>
    %555 = arith.subf %549, %554 : vector<4x32xf32>
    %556 = arith.mulf %555, %555 : vector<4x32xf32>
    %cst_159 = arith.constant dense<0.000000e+00> : vector<4xf32>
    %557 = vector.multi_reduction <add>, %556, %cst_159 [1] : vector<4x32xf32> to vector<4xf32>
    %558 = vector.shape_cast %557 : vector<4xf32> to vector<4x1xf32>
    %cst_160 = arith.constant 3.200000e+01 : f32
    %559 = vector.broadcast %cst_160 : f32 to vector<4x1xf32>
    %560 = arith.divf %558, %559 : vector<4x1xf32>
    %561 = vector.broadcast %553 : vector<4x1xf32> to vector<4x32xf32>
    %562 = arith.subf %549, %561 : vector<4x32xf32>
    %cst_161 = arith.constant 9.99999974E-6 : f32
    %563 = vector.broadcast %cst_161 : f32 to vector<4x1xf32>
    %564 = arith.addf %560, %563 : vector<4x1xf32>
    %565 = math.rsqrt %564 : vector<4x1xf32>
    %566 = vector.broadcast %565 : vector<4x1xf32> to vector<4x32xf32>
    %567 = arith.mulf %562, %566 : vector<4x32xf32>
    %568 = vector.broadcast %16 : vector<1x32xf32> to vector<4x32xf32>
    %569 = arith.mulf %567, %568 : vector<4x32xf32>
    %570 = vector.broadcast %17 : vector<1x32xf32> to vector<4x32xf32>
    %571 = arith.addf %569, %570 : vector<4x32xf32>
    %cst_162 = arith.constant dense<0.000000e+00> : vector<4x5xf32>
    %572 = tpu.matmul %571, %8, %cst_162 {dimension_numbers = #tpu.dot_dimension_numbers<[1], [0], [0], [1], [0, 0, 1, 1], [], []>} : vector<4x32xf32>, vector<32x5xf32>, vector<4x5xf32> -> vector<4x5xf32>
    %573 = vector.broadcast %9 : vector<1x5xf32> to vector<4x5xf32>
    %574 = arith.addf %572, %573 : vector<4x5xf32>
    %575 = arith.index_cast %c3_i32 : i32 to index
    %c0_163 = arith.constant 0 : index
    %c0_164 = arith.constant 0 : index
    %576 = vector.load %arg11[%575, %c0_163, %c0_164] : memref<8x4x5xf32, #tpu.memory_space<vmem>>, vector<1x4x5xf32>
    %577 = vector.shape_cast %576 : vector<1x4x5xf32> to vector<4x5xf32>
    %578 = vector.shape_cast %574 : vector<4x5xf32> to vector<1x4x5xf32>
    tpu.vector_store %arg11[%575, %c0_163, %c0_164], %578 {strides = array<i32>} : memref<8x4x5xf32, #tpu.memory_space<vmem>>, vector<1x4x5xf32>,
    %c4_i32 = arith.constant 4 : i32
    %579 = arith.index_cast %c4_i32 : i32 to index
    %c0_165 = arith.constant 0 : index
    %c0_166 = arith.constant 0 : index
    %580 = vector.load %arg0[%579, %c0_165, %c0_166] : memref<8x4x16xf32, #tpu.memory_space<vmem>>, vector<1x4x16xf32>
    %581 = vector.shape_cast %580 : vector<1x4x16xf32> to vector<4x16xf32>
    %cst_167 = arith.constant dense<0.000000e+00> : vector<4xf32>
    %582 = vector.multi_reduction <add>, %581, %cst_167 [1] : vector<4x16xf32> to vector<4xf32>
    %583 = vector.shape_cast %582 : vector<4xf32> to vector<4x1xf32>
    %cst_168 = arith.constant 1.600000e+01 : f32
    %584 = vector.broadcast %cst_168 : f32 to vector<4x1xf32>
    %585 = arith.divf %583, %584 : vector<4x1xf32>
    %586 = vector.broadcast %585 : vector<4x1xf32> to vector<4x16xf32>
    %587 = arith.subf %581, %586 : vector<4x16xf32>
    %588 = arith.mulf %587, %587 : vector<4x16xf32>
    %cst_169 = arith.constant dense<0.000000e+00> : vector<4xf32>
    %589 = vector.multi_reduction <add>, %588, %cst_169 [1] : vector<4x16xf32> to vector<4xf32>
    %590 = vector.shape_cast %589 : vector<4xf32> to vector<4x1xf32>
    %cst_170 = arith.constant 1.600000e+01 : f32
    %591 = vector.broadcast %cst_170 : f32 to vector<4x1xf32>
    %592 = arith.divf %590, %591 : vector<4x1xf32>
    %593 = vector.broadcast %585 : vector<4x1xf32> to vector<4x16xf32>
    %594 = arith.subf %581, %593 : vector<4x16xf32>
    %cst_171 = arith.constant 9.99999974E-6 : f32
    %595 = vector.broadcast %cst_171 : f32 to vector<4x1xf32>
    %596 = arith.addf %592, %595 : vector<4x1xf32>
    %597 = math.rsqrt %596 : vector<4x1xf32>
    %598 = vector.broadcast %597 : vector<4x1xf32> to vector<4x16xf32>
    %599 = arith.mulf %594, %598 : vector<4x16xf32>
    %600 = vector.broadcast %0 : vector<1x16xf32> to vector<4x16xf32>
    %601 = arith.mulf %599, %600 : vector<4x16xf32>
    %602 = vector.broadcast %1 : vector<1x16xf32> to vector<4x16xf32>
    %603 = arith.addf %601, %602 : vector<4x16xf32>
    %cst_172 = arith.constant dense<0.000000e+00> : vector<4x32xf32>
    %604 = tpu.matmul %603, %2, %cst_172 {dimension_numbers = #tpu.dot_dimension_numbers<[1], [0], [0], [1], [0, 0, 1, 1], [], []>} : vector<4x16xf32>, vector<16x32xf32>, vector<4x32xf32> -> vector<4x32xf32>
    %605 = vector.broadcast %10 : vector<1x32xf32> to vector<4x32xf32>
    %606 = arith.addf %604, %605 : vector<4x32xf32>
    %cst_173 = arith.constant 0.000000e+00 : f32
    %607 = vector.broadcast %cst_173 : f32 to vector<4x32xf32>
    %608 = arith.maximumf %606, %607 : vector<4x32xf32>
    %cst_174 = arith.constant dense<0.000000e+00> : vector<4xf32>
    %609 = vector.multi_reduction <add>, %608, %cst_174 [1] : vector<4x32xf32> to vector<4xf32>
    %610 = vector.shape_cast %609 : vector<4xf32> to vector<4x1xf32>
    %cst_175 = arith.constant 3.200000e+01 : f32
    %611 = vector.broadcast %cst_175 : f32 to vector<4x1xf32>
    %612 = arith.divf %610, %611 : vector<4x1xf32>
    %613 = vector.broadcast %612 : vector<4x1xf32> to vector<4x32xf32>
    %614 = arith.subf %608, %613 : vector<4x32xf32>
    %615 = arith.mulf %614, %614 : vector<4x32xf32>
    %cst_176 = arith.constant dense<0.000000e+00> : vector<4xf32>
    %616 = vector.multi_reduction <add>, %615, %cst_176 [1] : vector<4x32xf32> to vector<4xf32>
    %617 = vector.shape_cast %616 : vector<4xf32> to vector<4x1xf32>
    %cst_177 = arith.constant 3.200000e+01 : f32
    %618 = vector.broadcast %cst_177 : f32 to vector<4x1xf32>
    %619 = arith.divf %617, %618 : vector<4x1xf32>
    %620 = vector.broadcast %612 : vector<4x1xf32> to vector<4x32xf32>
    %621 = arith.subf %608, %620 : vector<4x32xf32>
    %cst_178 = arith.constant 9.99999974E-6 : f32
    %622 = vector.broadcast %cst_178 : f32 to vector<4x1xf32>
    %623 = arith.addf %619, %622 : vector<4x1xf32>
    %624 = math.rsqrt %623 : vector<4x1xf32>
    %625 = vector.broadcast %624 : vector<4x1xf32> to vector<4x32xf32>
    %626 = arith.mulf %621, %625 : vector<4x32xf32>
    %627 = vector.broadcast %11 : vector<1x32xf32> to vector<4x32xf32>
    %628 = arith.mulf %626, %627 : vector<4x32xf32>
    %629 = vector.broadcast %12 : vector<1x32xf32> to vector<4x32xf32>
    %630 = arith.addf %628, %629 : vector<4x32xf32>
    %cst_179 = arith.constant dense<0.000000e+00> : vector<4x32xf32>
    %631 = tpu.matmul %630, %3, %cst_179 {dimension_numbers = #tpu.dot_dimension_numbers<[1], [0], [0], [1], [0, 0, 1, 1], [], []>} : vector<4x32xf32>, vector<32x32xf32>, vector<4x32xf32> -> vector<4x32xf32>
    %632 = vector.broadcast %13 : vector<1x32xf32> to vector<4x32xf32>
    %633 = arith.addf %631, %632 : vector<4x32xf32>
    %cst_180 = arith.constant 0.000000e+00 : f32
    %634 = vector.broadcast %cst_180 : f32 to vector<4x32xf32>
    %635 = arith.maximumf %633, %634 : vector<4x32xf32>
    %cst_181 = arith.constant dense<0.000000e+00> : vector<4xf32>
    %636 = vector.multi_reduction <add>, %635, %cst_181 [1] : vector<4x32xf32> to vector<4xf32>
    %637 = vector.shape_cast %636 : vector<4xf32> to vector<4x1xf32>
    %cst_182 = arith.constant 3.200000e+01 : f32
    %638 = vector.broadcast %cst_182 : f32 to vector<4x1xf32>
    %639 = arith.divf %637, %638 : vector<4x1xf32>
    %640 = vector.broadcast %639 : vector<4x1xf32> to vector<4x32xf32>
    %641 = arith.subf %635, %640 : vector<4x32xf32>
    %642 = arith.mulf %641, %641 : vector<4x32xf32>
    %cst_183 = arith.constant dense<0.000000e+00> : vector<4xf32>
    %643 = vector.multi_reduction <add>, %642, %cst_183 [1] : vector<4x32xf32> to vector<4xf32>
    %644 = vector.shape_cast %643 : vector<4xf32> to vector<4x1xf32>
    %cst_184 = arith.constant 3.200000e+01 : f32
    %645 = vector.broadcast %cst_184 : f32 to vector<4x1xf32>
    %646 = arith.divf %644, %645 : vector<4x1xf32>
    %647 = vector.broadcast %639 : vector<4x1xf32> to vector<4x32xf32>
    %648 = arith.subf %635, %647 : vector<4x32xf32>
    %cst_185 = arith.constant 9.99999974E-6 : f32
    %649 = vector.broadcast %cst_185 : f32 to vector<4x1xf32>
    %650 = arith.addf %646, %649 : vector<4x1xf32>
    %651 = math.rsqrt %650 : vector<4x1xf32>
    %652 = vector.broadcast %651 : vector<4x1xf32> to vector<4x32xf32>
    %653 = arith.mulf %648, %652 : vector<4x32xf32>
    %654 = vector.broadcast %14 : vector<1x32xf32> to vector<4x32xf32>
    %655 = arith.mulf %653, %654 : vector<4x32xf32>
    %656 = vector.broadcast %15 : vector<1x32xf32> to vector<4x32xf32>
    %657 = arith.addf %655, %656 : vector<4x32xf32>
    %cst_186 = arith.constant dense<0.000000e+00> : vector<4x96xf32>
    %658 = tpu.matmul %657, %4, %cst_186 {dimension_numbers = #tpu.dot_dimension_numbers<[1], [0], [0], [1], [0, 0, 1, 1], [], []>} : vector<4x32xf32>, vector<32x96xf32>, vector<4x96xf32> -> vector<4x96xf32>
    %659 = vector.broadcast %6 : vector<1x96xf32> to vector<4x96xf32>
    %660 = arith.addf %658, %659 : vector<4x96xf32>
    %cst_187 = arith.constant dense<0.000000e+00> : vector<4x96xf32>
    %661 = tpu.matmul %549, %5, %cst_187 {dimension_numbers = #tpu.dot_dimension_numbers<[1], [0], [0], [1], [0, 0, 1, 1], [], []>} : vector<4x32xf32>, vector<32x96xf32>, vector<4x96xf32> -> vector<4x96xf32>
    %662 = vector.broadcast %7 : vector<1x96xf32> to vector<4x96xf32>
    %663 = arith.addf %661, %662 : vector<4x96xf32>
    %664 = vector.extract_strided_slice %660 {offsets = [0, 0], sizes = [4, 32], strides = [1, 1]} : vector<4x96xf32> to vector<4x32xf32>
    %665 = vector.extract_strided_slice %663 {offsets = [0, 0], sizes = [4, 32], strides = [1, 1]} : vector<4x96xf32> to vector<4x32xf32>
    %666 = arith.addf %664, %665 : vector<4x32xf32>
    %667 = arith.negf %666 : vector<4x32xf32>
    %668 = math.exp %667 : vector<4x32xf32>
    %cst_188 = arith.constant 1.000000e+00 : f32
    %669 = vector.broadcast %cst_188 : f32 to vector<4x32xf32>
    %670 = arith.addf %669, %668 : vector<4x32xf32>
    %671 = arith.divf %669, %670 : vector<4x32xf32>
    %672 = vector.extract_strided_slice %660 {offsets = [0, 32], sizes = [4, 32], strides = [1, 1]} : vector<4x96xf32> to vector<4x32xf32>
    %673 = vector.extract_strided_slice %663 {offsets = [0, 32], sizes = [4, 32], strides = [1, 1]} : vector<4x96xf32> to vector<4x32xf32>
    %674 = arith.addf %672, %673 : vector<4x32xf32>
    %675 = arith.negf %674 : vector<4x32xf32>
    %676 = math.exp %675 : vector<4x32xf32>
    %cst_189 = arith.constant 1.000000e+00 : f32
    %677 = vector.broadcast %cst_189 : f32 to vector<4x32xf32>
    %678 = arith.addf %677, %676 : vector<4x32xf32>
    %679 = arith.divf %677, %678 : vector<4x32xf32>
    %680 = vector.extract_strided_slice %660 {offsets = [0, 64], sizes = [4, 32], strides = [1, 1]} : vector<4x96xf32> to vector<4x32xf32>
    %681 = vector.extract_strided_slice %663 {offsets = [0, 64], sizes = [4, 32], strides = [1, 1]} : vector<4x96xf32> to vector<4x32xf32>
    %682 = arith.mulf %671, %681 : vector<4x32xf32>
    %683 = arith.addf %680, %682 : vector<4x32xf32>
    %684 = math.tanh %683 : vector<4x32xf32>
    %cst_190 = arith.constant 1.000000e+00 : f32
    %685 = vector.broadcast %cst_190 : f32 to vector<4x32xf32>
    %686 = arith.subf %685, %679 : vector<4x32xf32>
    %687 = arith.mulf %686, %684 : vector<4x32xf32>
    %688 = arith.mulf %679, %549 : vector<4x32xf32>
    %689 = arith.addf %687, %688 : vector<4x32xf32>
    %cst_191 = arith.constant dense<0.000000e+00> : vector<4xf32>
    %690 = vector.multi_reduction <add>, %689, %cst_191 [1] : vector<4x32xf32> to vector<4xf32>
    %691 = vector.shape_cast %690 : vector<4xf32> to vector<4x1xf32>
    %cst_192 = arith.constant 3.200000e+01 : f32
    %692 = vector.broadcast %cst_192 : f32 to vector<4x1xf32>
    %693 = arith.divf %691, %692 : vector<4x1xf32>
    %694 = vector.broadcast %693 : vector<4x1xf32> to vector<4x32xf32>
    %695 = arith.subf %689, %694 : vector<4x32xf32>
    %696 = arith.mulf %695, %695 : vector<4x32xf32>
    %cst_193 = arith.constant dense<0.000000e+00> : vector<4xf32>
    %697 = vector.multi_reduction <add>, %696, %cst_193 [1] : vector<4x32xf32> to vector<4xf32>
    %698 = vector.shape_cast %697 : vector<4xf32> to vector<4x1xf32>
    %cst_194 = arith.constant 3.200000e+01 : f32
    %699 = vector.broadcast %cst_194 : f32 to vector<4x1xf32>
    %700 = arith.divf %698, %699 : vector<4x1xf32>
    %701 = vector.broadcast %693 : vector<4x1xf32> to vector<4x32xf32>
    %702 = arith.subf %689, %701 : vector<4x32xf32>
    %cst_195 = arith.constant 9.99999974E-6 : f32
    %703 = vector.broadcast %cst_195 : f32 to vector<4x1xf32>
    %704 = arith.addf %700, %703 : vector<4x1xf32>
    %705 = math.rsqrt %704 : vector<4x1xf32>
    %706 = vector.broadcast %705 : vector<4x1xf32> to vector<4x32xf32>
    %707 = arith.mulf %702, %706 : vector<4x32xf32>
    %708 = vector.broadcast %16 : vector<1x32xf32> to vector<4x32xf32>
    %709 = arith.mulf %707, %708 : vector<4x32xf32>
    %710 = vector.broadcast %17 : vector<1x32xf32> to vector<4x32xf32>
    %711 = arith.addf %709, %710 : vector<4x32xf32>
    %cst_196 = arith.constant dense<0.000000e+00> : vector<4x5xf32>
    %712 = tpu.matmul %711, %8, %cst_196 {dimension_numbers = #tpu.dot_dimension_numbers<[1], [0], [0], [1], [0, 0, 1, 1], [], []>} : vector<4x32xf32>, vector<32x5xf32>, vector<4x5xf32> -> vector<4x5xf32>
    %713 = vector.broadcast %9 : vector<1x5xf32> to vector<4x5xf32>
    %714 = arith.addf %712, %713 : vector<4x5xf32>
    %715 = arith.index_cast %c4_i32 : i32 to index
    %c0_197 = arith.constant 0 : index
    %c0_198 = arith.constant 0 : index
    %716 = vector.load %arg11[%715, %c0_197, %c0_198] : memref<8x4x5xf32, #tpu.memory_space<vmem>>, vector<1x4x5xf32>
    %717 = vector.shape_cast %716 : vector<1x4x5xf32> to vector<4x5xf32>
    %718 = vector.shape_cast %714 : vector<4x5xf32> to vector<1x4x5xf32>
    tpu.vector_store %arg11[%715, %c0_197, %c0_198], %718 {strides = array<i32>} : memref<8x4x5xf32, #tpu.memory_space<vmem>>, vector<1x4x5xf32>,
    %c5_i32 = arith.constant 5 : i32
    %719 = arith.index_cast %c5_i32 : i32 to index
    %c0_199 = arith.constant 0 : index
    %c0_200 = arith.constant 0 : index
    %720 = vector.load %arg0[%719, %c0_199, %c0_200] : memref<8x4x16xf32, #tpu.memory_space<vmem>>, vector<1x4x16xf32>
    %721 = vector.shape_cast %720 : vector<1x4x16xf32> to vector<4x16xf32>
    %cst_201 = arith.constant dense<0.000000e+00> : vector<4xf32>
    %722 = vector.multi_reduction <add>, %721, %cst_201 [1] : vector<4x16xf32> to vector<4xf32>
    %723 = vector.shape_cast %722 : vector<4xf32> to vector<4x1xf32>
    %cst_202 = arith.constant 1.600000e+01 : f32
    %724 = vector.broadcast %cst_202 : f32 to vector<4x1xf32>
    %725 = arith.divf %723, %724 : vector<4x1xf32>
    %726 = vector.broadcast %725 : vector<4x1xf32> to vector<4x16xf32>
    %727 = arith.subf %721, %726 : vector<4x16xf32>
    %728 = arith.mulf %727, %727 : vector<4x16xf32>
    %cst_203 = arith.constant dense<0.000000e+00> : vector<4xf32>
    %729 = vector.multi_reduction <add>, %728, %cst_203 [1] : vector<4x16xf32> to vector<4xf32>
    %730 = vector.shape_cast %729 : vector<4xf32> to vector<4x1xf32>
    %cst_204 = arith.constant 1.600000e+01 : f32
    %731 = vector.broadcast %cst_204 : f32 to vector<4x1xf32>
    %732 = arith.divf %730, %731 : vector<4x1xf32>
    %733 = vector.broadcast %725 : vector<4x1xf32> to vector<4x16xf32>
    %734 = arith.subf %721, %733 : vector<4x16xf32>
    %cst_205 = arith.constant 9.99999974E-6 : f32
    %735 = vector.broadcast %cst_205 : f32 to vector<4x1xf32>
    %736 = arith.addf %732, %735 : vector<4x1xf32>
    %737 = math.rsqrt %736 : vector<4x1xf32>
    %738 = vector.broadcast %737 : vector<4x1xf32> to vector<4x16xf32>
    %739 = arith.mulf %734, %738 : vector<4x16xf32>
    %740 = vector.broadcast %0 : vector<1x16xf32> to vector<4x16xf32>
    %741 = arith.mulf %739, %740 : vector<4x16xf32>
    %742 = vector.broadcast %1 : vector<1x16xf32> to vector<4x16xf32>
    %743 = arith.addf %741, %742 : vector<4x16xf32>
    %cst_206 = arith.constant dense<0.000000e+00> : vector<4x32xf32>
    %744 = tpu.matmul %743, %2, %cst_206 {dimension_numbers = #tpu.dot_dimension_numbers<[1], [0], [0], [1], [0, 0, 1, 1], [], []>} : vector<4x16xf32>, vector<16x32xf32>, vector<4x32xf32> -> vector<4x32xf32>
    %745 = vector.broadcast %10 : vector<1x32xf32> to vector<4x32xf32>
    %746 = arith.addf %744, %745 : vector<4x32xf32>
    %cst_207 = arith.constant 0.000000e+00 : f32
    %747 = vector.broadcast %cst_207 : f32 to vector<4x32xf32>
    %748 = arith.maximumf %746, %747 : vector<4x32xf32>
    %cst_208 = arith.constant dense<0.000000e+00> : vector<4xf32>
    %749 = vector.multi_reduction <add>, %748, %cst_208 [1] : vector<4x32xf32> to vector<4xf32>
    %750 = vector.shape_cast %749 : vector<4xf32> to vector<4x1xf32>
    %cst_209 = arith.constant 3.200000e+01 : f32
    %751 = vector.broadcast %cst_209 : f32 to vector<4x1xf32>
    %752 = arith.divf %750, %751 : vector<4x1xf32>
    %753 = vector.broadcast %752 : vector<4x1xf32> to vector<4x32xf32>
    %754 = arith.subf %748, %753 : vector<4x32xf32>
    %755 = arith.mulf %754, %754 : vector<4x32xf32>
    %cst_210 = arith.constant dense<0.000000e+00> : vector<4xf32>
    %756 = vector.multi_reduction <add>, %755, %cst_210 [1] : vector<4x32xf32> to vector<4xf32>
    %757 = vector.shape_cast %756 : vector<4xf32> to vector<4x1xf32>
    %cst_211 = arith.constant 3.200000e+01 : f32
    %758 = vector.broadcast %cst_211 : f32 to vector<4x1xf32>
    %759 = arith.divf %757, %758 : vector<4x1xf32>
    %760 = vector.broadcast %752 : vector<4x1xf32> to vector<4x32xf32>
    %761 = arith.subf %748, %760 : vector<4x32xf32>
    %cst_212 = arith.constant 9.99999974E-6 : f32
    %762 = vector.broadcast %cst_212 : f32 to vector<4x1xf32>
    %763 = arith.addf %759, %762 : vector<4x1xf32>
    %764 = math.rsqrt %763 : vector<4x1xf32>
    %765 = vector.broadcast %764 : vector<4x1xf32> to vector<4x32xf32>
    %766 = arith.mulf %761, %765 : vector<4x32xf32>
    %767 = vector.broadcast %11 : vector<1x32xf32> to vector<4x32xf32>
    %768 = arith.mulf %766, %767 : vector<4x32xf32>
    %769 = vector.broadcast %12 : vector<1x32xf32> to vector<4x32xf32>
    %770 = arith.addf %768, %769 : vector<4x32xf32>
    %cst_213 = arith.constant dense<0.000000e+00> : vector<4x32xf32>
    %771 = tpu.matmul %770, %3, %cst_213 {dimension_numbers = #tpu.dot_dimension_numbers<[1], [0], [0], [1], [0, 0, 1, 1], [], []>} : vector<4x32xf32>, vector<32x32xf32>, vector<4x32xf32> -> vector<4x32xf32>
    %772 = vector.broadcast %13 : vector<1x32xf32> to vector<4x32xf32>
    %773 = arith.addf %771, %772 : vector<4x32xf32>
    %cst_214 = arith.constant 0.000000e+00 : f32
    %774 = vector.broadcast %cst_214 : f32 to vector<4x32xf32>
    %775 = arith.maximumf %773, %774 : vector<4x32xf32>
    %cst_215 = arith.constant dense<0.000000e+00> : vector<4xf32>
    %776 = vector.multi_reduction <add>, %775, %cst_215 [1] : vector<4x32xf32> to vector<4xf32>
    %777 = vector.shape_cast %776 : vector<4xf32> to vector<4x1xf32>
    %cst_216 = arith.constant 3.200000e+01 : f32
    %778 = vector.broadcast %cst_216 : f32 to vector<4x1xf32>
    %779 = arith.divf %777, %778 : vector<4x1xf32>
    %780 = vector.broadcast %779 : vector<4x1xf32> to vector<4x32xf32>
    %781 = arith.subf %775, %780 : vector<4x32xf32>
    %782 = arith.mulf %781, %781 : vector<4x32xf32>
    %cst_217 = arith.constant dense<0.000000e+00> : vector<4xf32>
    %783 = vector.multi_reduction <add>, %782, %cst_217 [1] : vector<4x32xf32> to vector<4xf32>
    %784 = vector.shape_cast %783 : vector<4xf32> to vector<4x1xf32>
    %cst_218 = arith.constant 3.200000e+01 : f32
    %785 = vector.broadcast %cst_218 : f32 to vector<4x1xf32>
    %786 = arith.divf %784, %785 : vector<4x1xf32>
    %787 = vector.broadcast %779 : vector<4x1xf32> to vector<4x32xf32>
    %788 = arith.subf %775, %787 : vector<4x32xf32>
    %cst_219 = arith.constant 9.99999974E-6 : f32
    %789 = vector.broadcast %cst_219 : f32 to vector<4x1xf32>
    %790 = arith.addf %786, %789 : vector<4x1xf32>
    %791 = math.rsqrt %790 : vector<4x1xf32>
    %792 = vector.broadcast %791 : vector<4x1xf32> to vector<4x32xf32>
    %793 = arith.mulf %788, %792 : vector<4x32xf32>
    %794 = vector.broadcast %14 : vector<1x32xf32> to vector<4x32xf32>
    %795 = arith.mulf %793, %794 : vector<4x32xf32>
    %796 = vector.broadcast %15 : vector<1x32xf32> to vector<4x32xf32>
    %797 = arith.addf %795, %796 : vector<4x32xf32>
    %cst_220 = arith.constant dense<0.000000e+00> : vector<4x96xf32>
    %798 = tpu.matmul %797, %4, %cst_220 {dimension_numbers = #tpu.dot_dimension_numbers<[1], [0], [0], [1], [0, 0, 1, 1], [], []>} : vector<4x32xf32>, vector<32x96xf32>, vector<4x96xf32> -> vector<4x96xf32>
    %799 = vector.broadcast %6 : vector<1x96xf32> to vector<4x96xf32>
    %800 = arith.addf %798, %799 : vector<4x96xf32>
    %cst_221 = arith.constant dense<0.000000e+00> : vector<4x96xf32>
    %801 = tpu.matmul %689, %5, %cst_221 {dimension_numbers = #tpu.dot_dimension_numbers<[1], [0], [0], [1], [0, 0, 1, 1], [], []>} : vector<4x32xf32>, vector<32x96xf32>, vector<4x96xf32> -> vector<4x96xf32>
    %802 = vector.broadcast %7 : vector<1x96xf32> to vector<4x96xf32>
    %803 = arith.addf %801, %802 : vector<4x96xf32>
    %804 = vector.extract_strided_slice %800 {offsets = [0, 0], sizes = [4, 32], strides = [1, 1]} : vector<4x96xf32> to vector<4x32xf32>
    %805 = vector.extract_strided_slice %803 {offsets = [0, 0], sizes = [4, 32], strides = [1, 1]} : vector<4x96xf32> to vector<4x32xf32>
    %806 = arith.addf %804, %805 : vector<4x32xf32>
    %807 = arith.negf %806 : vector<4x32xf32>
    %808 = math.exp %807 : vector<4x32xf32>
    %cst_222 = arith.constant 1.000000e+00 : f32
    %809 = vector.broadcast %cst_222 : f32 to vector<4x32xf32>
    %810 = arith.addf %809, %808 : vector<4x32xf32>
    %811 = arith.divf %809, %810 : vector<4x32xf32>
    %812 = vector.extract_strided_slice %800 {offsets = [0, 32], sizes = [4, 32], strides = [1, 1]} : vector<4x96xf32> to vector<4x32xf32>
    %813 = vector.extract_strided_slice %803 {offsets = [0, 32], sizes = [4, 32], strides = [1, 1]} : vector<4x96xf32> to vector<4x32xf32>
    %814 = arith.addf %812, %813 : vector<4x32xf32>
    %815 = arith.negf %814 : vector<4x32xf32>
    %816 = math.exp %815 : vector<4x32xf32>
    %cst_223 = arith.constant 1.000000e+00 : f32
    %817 = vector.broadcast %cst_223 : f32 to vector<4x32xf32>
    %818 = arith.addf %817, %816 : vector<4x32xf32>
    %819 = arith.divf %817, %818 : vector<4x32xf32>
    %820 = vector.extract_strided_slice %800 {offsets = [0, 64], sizes = [4, 32], strides = [1, 1]} : vector<4x96xf32> to vector<4x32xf32>
    %821 = vector.extract_strided_slice %803 {offsets = [0, 64], sizes = [4, 32], strides = [1, 1]} : vector<4x96xf32> to vector<4x32xf32>
    %822 = arith.mulf %811, %821 : vector<4x32xf32>
    %823 = arith.addf %820, %822 : vector<4x32xf32>
    %824 = math.tanh %823 : vector<4x32xf32>
    %cst_224 = arith.constant 1.000000e+00 : f32
    %825 = vector.broadcast %cst_224 : f32 to vector<4x32xf32>
    %826 = arith.subf %825, %819 : vector<4x32xf32>
    %827 = arith.mulf %826, %824 : vector<4x32xf32>
    %828 = arith.mulf %819, %689 : vector<4x32xf32>
    %829 = arith.addf %827, %828 : vector<4x32xf32>
    %cst_225 = arith.constant dense<0.000000e+00> : vector<4xf32>
    %830 = vector.multi_reduction <add>, %829, %cst_225 [1] : vector<4x32xf32> to vector<4xf32>
    %831 = vector.shape_cast %830 : vector<4xf32> to vector<4x1xf32>
    %cst_226 = arith.constant 3.200000e+01 : f32
    %832 = vector.broadcast %cst_226 : f32 to vector<4x1xf32>
    %833 = arith.divf %831, %832 : vector<4x1xf32>
    %834 = vector.broadcast %833 : vector<4x1xf32> to vector<4x32xf32>
    %835 = arith.subf %829, %834 : vector<4x32xf32>
    %836 = arith.mulf %835, %835 : vector<4x32xf32>
    %cst_227 = arith.constant dense<0.000000e+00> : vector<4xf32>
    %837 = vector.multi_reduction <add>, %836, %cst_227 [1] : vector<4x32xf32> to vector<4xf32>
    %838 = vector.shape_cast %837 : vector<4xf32> to vector<4x1xf32>
    %cst_228 = arith.constant 3.200000e+01 : f32
    %839 = vector.broadcast %cst_228 : f32 to vector<4x1xf32>
    %840 = arith.divf %838, %839 : vector<4x1xf32>
    %841 = vector.broadcast %833 : vector<4x1xf32> to vector<4x32xf32>
    %842 = arith.subf %829, %841 : vector<4x32xf32>
    %cst_229 = arith.constant 9.99999974E-6 : f32
    %843 = vector.broadcast %cst_229 : f32 to vector<4x1xf32>
    %844 = arith.addf %840, %843 : vector<4x1xf32>
    %845 = math.rsqrt %844 : vector<4x1xf32>
    %846 = vector.broadcast %845 : vector<4x1xf32> to vector<4x32xf32>
    %847 = arith.mulf %842, %846 : vector<4x32xf32>
    %848 = vector.broadcast %16 : vector<1x32xf32> to vector<4x32xf32>
    %849 = arith.mulf %847, %848 : vector<4x32xf32>
    %850 = vector.broadcast %17 : vector<1x32xf32> to vector<4x32xf32>
    %851 = arith.addf %849, %850 : vector<4x32xf32>
    %cst_230 = arith.constant dense<0.000000e+00> : vector<4x5xf32>
    %852 = tpu.matmul %851, %8, %cst_230 {dimension_numbers = #tpu.dot_dimension_numbers<[1], [0], [0], [1], [0, 0, 1, 1], [], []>} : vector<4x32xf32>, vector<32x5xf32>, vector<4x5xf32> -> vector<4x5xf32>
    %853 = vector.broadcast %9 : vector<1x5xf32> to vector<4x5xf32>
    %854 = arith.addf %852, %853 : vector<4x5xf32>
    %855 = arith.index_cast %c5_i32 : i32 to index
    %c0_231 = arith.constant 0 : index
    %c0_232 = arith.constant 0 : index
    %856 = vector.load %arg11[%855, %c0_231, %c0_232] : memref<8x4x5xf32, #tpu.memory_space<vmem>>, vector<1x4x5xf32>
    %857 = vector.shape_cast %856 : vector<1x4x5xf32> to vector<4x5xf32>
    %858 = vector.shape_cast %854 : vector<4x5xf32> to vector<1x4x5xf32>
    tpu.vector_store %arg11[%855, %c0_231, %c0_232], %858 {strides = array<i32>} : memref<8x4x5xf32, #tpu.memory_space<vmem>>, vector<1x4x5xf32>,
    %c6_i32 = arith.constant 6 : i32
    %859 = arith.index_cast %c6_i32 : i32 to index
    %c0_233 = arith.constant 0 : index
    %c0_234 = arith.constant 0 : index
    %860 = vector.load %arg0[%859, %c0_233, %c0_234] : memref<8x4x16xf32, #tpu.memory_space<vmem>>, vector<1x4x16xf32>
    %861 = vector.shape_cast %860 : vector<1x4x16xf32> to vector<4x16xf32>
    %cst_235 = arith.constant dense<0.000000e+00> : vector<4xf32>
    %862 = vector.multi_reduction <add>, %861, %cst_235 [1] : vector<4x16xf32> to vector<4xf32>
    %863 = vector.shape_cast %862 : vector<4xf32> to vector<4x1xf32>
    %cst_236 = arith.constant 1.600000e+01 : f32
    %864 = vector.broadcast %cst_236 : f32 to vector<4x1xf32>
    %865 = arith.divf %863, %864 : vector<4x1xf32>
    %866 = vector.broadcast %865 : vector<4x1xf32> to vector<4x16xf32>
    %867 = arith.subf %861, %866 : vector<4x16xf32>
    %868 = arith.mulf %867, %867 : vector<4x16xf32>
    %cst_237 = arith.constant dense<0.000000e+00> : vector<4xf32>
    %869 = vector.multi_reduction <add>, %868, %cst_237 [1] : vector<4x16xf32> to vector<4xf32>
    %870 = vector.shape_cast %869 : vector<4xf32> to vector<4x1xf32>
    %cst_238 = arith.constant 1.600000e+01 : f32
    %871 = vector.broadcast %cst_238 : f32 to vector<4x1xf32>
    %872 = arith.divf %870, %871 : vector<4x1xf32>
    %873 = vector.broadcast %865 : vector<4x1xf32> to vector<4x16xf32>
    %874 = arith.subf %861, %873 : vector<4x16xf32>
    %cst_239 = arith.constant 9.99999974E-6 : f32
    %875 = vector.broadcast %cst_239 : f32 to vector<4x1xf32>
    %876 = arith.addf %872, %875 : vector<4x1xf32>
    %877 = math.rsqrt %876 : vector<4x1xf32>
    %878 = vector.broadcast %877 : vector<4x1xf32> to vector<4x16xf32>
    %879 = arith.mulf %874, %878 : vector<4x16xf32>
    %880 = vector.broadcast %0 : vector<1x16xf32> to vector<4x16xf32>
    %881 = arith.mulf %879, %880 : vector<4x16xf32>
    %882 = vector.broadcast %1 : vector<1x16xf32> to vector<4x16xf32>
    %883 = arith.addf %881, %882 : vector<4x16xf32>
    %cst_240 = arith.constant dense<0.000000e+00> : vector<4x32xf32>
    %884 = tpu.matmul %883, %2, %cst_240 {dimension_numbers = #tpu.dot_dimension_numbers<[1], [0], [0], [1], [0, 0, 1, 1], [], []>} : vector<4x16xf32>, vector<16x32xf32>, vector<4x32xf32> -> vector<4x32xf32>
    %885 = vector.broadcast %10 : vector<1x32xf32> to vector<4x32xf32>
    %886 = arith.addf %884, %885 : vector<4x32xf32>
    %cst_241 = arith.constant 0.000000e+00 : f32
    %887 = vector.broadcast %cst_241 : f32 to vector<4x32xf32>
    %888 = arith.maximumf %886, %887 : vector<4x32xf32>
    %cst_242 = arith.constant dense<0.000000e+00> : vector<4xf32>
    %889 = vector.multi_reduction <add>, %888, %cst_242 [1] : vector<4x32xf32> to vector<4xf32>
    %890 = vector.shape_cast %889 : vector<4xf32> to vector<4x1xf32>
    %cst_243 = arith.constant 3.200000e+01 : f32
    %891 = vector.broadcast %cst_243 : f32 to vector<4x1xf32>
    %892 = arith.divf %890, %891 : vector<4x1xf32>
    %893 = vector.broadcast %892 : vector<4x1xf32> to vector<4x32xf32>
    %894 = arith.subf %888, %893 : vector<4x32xf32>
    %895 = arith.mulf %894, %894 : vector<4x32xf32>
    %cst_244 = arith.constant dense<0.000000e+00> : vector<4xf32>
    %896 = vector.multi_reduction <add>, %895, %cst_244 [1] : vector<4x32xf32> to vector<4xf32>
    %897 = vector.shape_cast %896 : vector<4xf32> to vector<4x1xf32>
    %cst_245 = arith.constant 3.200000e+01 : f32
    %898 = vector.broadcast %cst_245 : f32 to vector<4x1xf32>
    %899 = arith.divf %897, %898 : vector<4x1xf32>
    %900 = vector.broadcast %892 : vector<4x1xf32> to vector<4x32xf32>
    %901 = arith.subf %888, %900 : vector<4x32xf32>
    %cst_246 = arith.constant 9.99999974E-6 : f32
    %902 = vector.broadcast %cst_246 : f32 to vector<4x1xf32>
    %903 = arith.addf %899, %902 : vector<4x1xf32>
    %904 = math.rsqrt %903 : vector<4x1xf32>
    %905 = vector.broadcast %904 : vector<4x1xf32> to vector<4x32xf32>
    %906 = arith.mulf %901, %905 : vector<4x32xf32>
    %907 = vector.broadcast %11 : vector<1x32xf32> to vector<4x32xf32>
    %908 = arith.mulf %906, %907 : vector<4x32xf32>
    %909 = vector.broadcast %12 : vector<1x32xf32> to vector<4x32xf32>
    %910 = arith.addf %908, %909 : vector<4x32xf32>
    %cst_247 = arith.constant dense<0.000000e+00> : vector<4x32xf32>
    %911 = tpu.matmul %910, %3, %cst_247 {dimension_numbers = #tpu.dot_dimension_numbers<[1], [0], [0], [1], [0, 0, 1, 1], [], []>} : vector<4x32xf32>, vector<32x32xf32>, vector<4x32xf32> -> vector<4x32xf32>
    %912 = vector.broadcast %13 : vector<1x32xf32> to vector<4x32xf32>
    %913 = arith.addf %911, %912 : vector<4x32xf32>
    %cst_248 = arith.constant 0.000000e+00 : f32
    %914 = vector.broadcast %cst_248 : f32 to vector<4x32xf32>
    %915 = arith.maximumf %913, %914 : vector<4x32xf32>
    %cst_249 = arith.constant dense<0.000000e+00> : vector<4xf32>
    %916 = vector.multi_reduction <add>, %915, %cst_249 [1] : vector<4x32xf32> to vector<4xf32>
    %917 = vector.shape_cast %916 : vector<4xf32> to vector<4x1xf32>
    %cst_250 = arith.constant 3.200000e+01 : f32
    %918 = vector.broadcast %cst_250 : f32 to vector<4x1xf32>
    %919 = arith.divf %917, %918 : vector<4x1xf32>
    %920 = vector.broadcast %919 : vector<4x1xf32> to vector<4x32xf32>
    %921 = arith.subf %915, %920 : vector<4x32xf32>
    %922 = arith.mulf %921, %921 : vector<4x32xf32>
    %cst_251 = arith.constant dense<0.000000e+00> : vector<4xf32>
    %923 = vector.multi_reduction <add>, %922, %cst_251 [1] : vector<4x32xf32> to vector<4xf32>
    %924 = vector.shape_cast %923 : vector<4xf32> to vector<4x1xf32>
    %cst_252 = arith.constant 3.200000e+01 : f32
    %925 = vector.broadcast %cst_252 : f32 to vector<4x1xf32>
    %926 = arith.divf %924, %925 : vector<4x1xf32>
    %927 = vector.broadcast %919 : vector<4x1xf32> to vector<4x32xf32>
    %928 = arith.subf %915, %927 : vector<4x32xf32>
    %cst_253 = arith.constant 9.99999974E-6 : f32
    %929 = vector.broadcast %cst_253 : f32 to vector<4x1xf32>
    %930 = arith.addf %926, %929 : vector<4x1xf32>
    %931 = math.rsqrt %930 : vector<4x1xf32>
    %932 = vector.broadcast %931 : vector<4x1xf32> to vector<4x32xf32>
    %933 = arith.mulf %928, %932 : vector<4x32xf32>
    %934 = vector.broadcast %14 : vector<1x32xf32> to vector<4x32xf32>
    %935 = arith.mulf %933, %934 : vector<4x32xf32>
    %936 = vector.broadcast %15 : vector<1x32xf32> to vector<4x32xf32>
    %937 = arith.addf %935, %936 : vector<4x32xf32>
    %cst_254 = arith.constant dense<0.000000e+00> : vector<4x96xf32>
    %938 = tpu.matmul %937, %4, %cst_254 {dimension_numbers = #tpu.dot_dimension_numbers<[1], [0], [0], [1], [0, 0, 1, 1], [], []>} : vector<4x32xf32>, vector<32x96xf32>, vector<4x96xf32> -> vector<4x96xf32>
    %939 = vector.broadcast %6 : vector<1x96xf32> to vector<4x96xf32>
    %940 = arith.addf %938, %939 : vector<4x96xf32>
    %cst_255 = arith.constant dense<0.000000e+00> : vector<4x96xf32>
    %941 = tpu.matmul %829, %5, %cst_255 {dimension_numbers = #tpu.dot_dimension_numbers<[1], [0], [0], [1], [0, 0, 1, 1], [], []>} : vector<4x32xf32>, vector<32x96xf32>, vector<4x96xf32> -> vector<4x96xf32>
    %942 = vector.broadcast %7 : vector<1x96xf32> to vector<4x96xf32>
    %943 = arith.addf %941, %942 : vector<4x96xf32>
    %944 = vector.extract_strided_slice %940 {offsets = [0, 0], sizes = [4, 32], strides = [1, 1]} : vector<4x96xf32> to vector<4x32xf32>
    %945 = vector.extract_strided_slice %943 {offsets = [0, 0], sizes = [4, 32], strides = [1, 1]} : vector<4x96xf32> to vector<4x32xf32>
    %946 = arith.addf %944, %945 : vector<4x32xf32>
    %947 = arith.negf %946 : vector<4x32xf32>
    %948 = math.exp %947 : vector<4x32xf32>
    %cst_256 = arith.constant 1.000000e+00 : f32
    %949 = vector.broadcast %cst_256 : f32 to vector<4x32xf32>
    %950 = arith.addf %949, %948 : vector<4x32xf32>
    %951 = arith.divf %949, %950 : vector<4x32xf32>
    %952 = vector.extract_strided_slice %940 {offsets = [0, 32], sizes = [4, 32], strides = [1, 1]} : vector<4x96xf32> to vector<4x32xf32>
    %953 = vector.extract_strided_slice %943 {offsets = [0, 32], sizes = [4, 32], strides = [1, 1]} : vector<4x96xf32> to vector<4x32xf32>
    %954 = arith.addf %952, %953 : vector<4x32xf32>
    %955 = arith.negf %954 : vector<4x32xf32>
    %956 = math.exp %955 : vector<4x32xf32>
    %cst_257 = arith.constant 1.000000e+00 : f32
    %957 = vector.broadcast %cst_257 : f32 to vector<4x32xf32>
    %958 = arith.addf %957, %956 : vector<4x32xf32>
    %959 = arith.divf %957, %958 : vector<4x32xf32>
    %960 = vector.extract_strided_slice %940 {offsets = [0, 64], sizes = [4, 32], strides = [1, 1]} : vector<4x96xf32> to vector<4x32xf32>
    %961 = vector.extract_strided_slice %943 {offsets = [0, 64], sizes = [4, 32], strides = [1, 1]} : vector<4x96xf32> to vector<4x32xf32>
    %962 = arith.mulf %951, %961 : vector<4x32xf32>
    %963 = arith.addf %960, %962 : vector<4x32xf32>
    %964 = math.tanh %963 : vector<4x32xf32>
    %cst_258 = arith.constant 1.000000e+00 : f32
    %965 = vector.broadcast %cst_258 : f32 to vector<4x32xf32>
    %966 = arith.subf %965, %959 : vector<4x32xf32>
    %967 = arith.mulf %966, %964 : vector<4x32xf32>
    %968 = arith.mulf %959, %829 : vector<4x32xf32>
    %969 = arith.addf %967, %968 : vector<4x32xf32>
    %cst_259 = arith.constant dense<0.000000e+00> : vector<4xf32>
    %970 = vector.multi_reduction <add>, %969, %cst_259 [1] : vector<4x32xf32> to vector<4xf32>
    %971 = vector.shape_cast %970 : vector<4xf32> to vector<4x1xf32>
    %cst_260 = arith.constant 3.200000e+01 : f32
    %972 = vector.broadcast %cst_260 : f32 to vector<4x1xf32>
    %973 = arith.divf %971, %972 : vector<4x1xf32>
    %974 = vector.broadcast %973 : vector<4x1xf32> to vector<4x32xf32>
    %975 = arith.subf %969, %974 : vector<4x32xf32>
    %976 = arith.mulf %975, %975 : vector<4x32xf32>
    %cst_261 = arith.constant dense<0.000000e+00> : vector<4xf32>
    %977 = vector.multi_reduction <add>, %976, %cst_261 [1] : vector<4x32xf32> to vector<4xf32>
    %978 = vector.shape_cast %977 : vector<4xf32> to vector<4x1xf32>
    %cst_262 = arith.constant 3.200000e+01 : f32
    %979 = vector.broadcast %cst_262 : f32 to vector<4x1xf32>
    %980 = arith.divf %978, %979 : vector<4x1xf32>
    %981 = vector.broadcast %973 : vector<4x1xf32> to vector<4x32xf32>
    %982 = arith.subf %969, %981 : vector<4x32xf32>
    %cst_263 = arith.constant 9.99999974E-6 : f32
    %983 = vector.broadcast %cst_263 : f32 to vector<4x1xf32>
    %984 = arith.addf %980, %983 : vector<4x1xf32>
    %985 = math.rsqrt %984 : vector<4x1xf32>
    %986 = vector.broadcast %985 : vector<4x1xf32> to vector<4x32xf32>
    %987 = arith.mulf %982, %986 : vector<4x32xf32>
    %988 = vector.broadcast %16 : vector<1x32xf32> to vector<4x32xf32>
    %989 = arith.mulf %987, %988 : vector<4x32xf32>
    %990 = vector.broadcast %17 : vector<1x32xf32> to vector<4x32xf32>
    %991 = arith.addf %989, %990 : vector<4x32xf32>
    %cst_264 = arith.constant dense<0.000000e+00> : vector<4x5xf32>
    %992 = tpu.matmul %991, %8, %cst_264 {dimension_numbers = #tpu.dot_dimension_numbers<[1], [0], [0], [1], [0, 0, 1, 1], [], []>} : vector<4x32xf32>, vector<32x5xf32>, vector<4x5xf32> -> vector<4x5xf32>
    %993 = vector.broadcast %9 : vector<1x5xf32> to vector<4x5xf32>
    %994 = arith.addf %992, %993 : vector<4x5xf32>
    %995 = arith.index_cast %c6_i32 : i32 to index
    %c0_265 = arith.constant 0 : index
    %c0_266 = arith.constant 0 : index
    %996 = vector.load %arg11[%995, %c0_265, %c0_266] : memref<8x4x5xf32, #tpu.memory_space<vmem>>, vector<1x4x5xf32>
    %997 = vector.shape_cast %996 : vector<1x4x5xf32> to vector<4x5xf32>
    %998 = vector.shape_cast %994 : vector<4x5xf32> to vector<1x4x5xf32>
    tpu.vector_store %arg11[%995, %c0_265, %c0_266], %998 {strides = array<i32>} : memref<8x4x5xf32, #tpu.memory_space<vmem>>, vector<1x4x5xf32>,
    %c7_i32 = arith.constant 7 : i32
    %999 = arith.index_cast %c7_i32 : i32 to index
    %c0_267 = arith.constant 0 : index
    %c0_268 = arith.constant 0 : index
    %1000 = vector.load %arg0[%999, %c0_267, %c0_268] : memref<8x4x16xf32, #tpu.memory_space<vmem>>, vector<1x4x16xf32>
    %1001 = vector.shape_cast %1000 : vector<1x4x16xf32> to vector<4x16xf32>
    %cst_269 = arith.constant dense<0.000000e+00> : vector<4xf32>
    %1002 = vector.multi_reduction <add>, %1001, %cst_269 [1] : vector<4x16xf32> to vector<4xf32>
    %1003 = vector.shape_cast %1002 : vector<4xf32> to vector<4x1xf32>
    %cst_270 = arith.constant 1.600000e+01 : f32
    %1004 = vector.broadcast %cst_270 : f32 to vector<4x1xf32>
    %1005 = arith.divf %1003, %1004 : vector<4x1xf32>
    %1006 = vector.broadcast %1005 : vector<4x1xf32> to vector<4x16xf32>
    %1007 = arith.subf %1001, %1006 : vector<4x16xf32>
    %1008 = arith.mulf %1007, %1007 : vector<4x16xf32>
    %cst_271 = arith.constant dense<0.000000e+00> : vector<4xf32>
    %1009 = vector.multi_reduction <add>, %1008, %cst_271 [1] : vector<4x16xf32> to vector<4xf32>
    %1010 = vector.shape_cast %1009 : vector<4xf32> to vector<4x1xf32>
    %cst_272 = arith.constant 1.600000e+01 : f32
    %1011 = vector.broadcast %cst_272 : f32 to vector<4x1xf32>
    %1012 = arith.divf %1010, %1011 : vector<4x1xf32>
    %1013 = vector.broadcast %1005 : vector<4x1xf32> to vector<4x16xf32>
    %1014 = arith.subf %1001, %1013 : vector<4x16xf32>
    %cst_273 = arith.constant 9.99999974E-6 : f32
    %1015 = vector.broadcast %cst_273 : f32 to vector<4x1xf32>
    %1016 = arith.addf %1012, %1015 : vector<4x1xf32>
    %1017 = math.rsqrt %1016 : vector<4x1xf32>
    %1018 = vector.broadcast %1017 : vector<4x1xf32> to vector<4x16xf32>
    %1019 = arith.mulf %1014, %1018 : vector<4x16xf32>
    %1020 = vector.broadcast %0 : vector<1x16xf32> to vector<4x16xf32>
    %1021 = arith.mulf %1019, %1020 : vector<4x16xf32>
    %1022 = vector.broadcast %1 : vector<1x16xf32> to vector<4x16xf32>
    %1023 = arith.addf %1021, %1022 : vector<4x16xf32>
    %cst_274 = arith.constant dense<0.000000e+00> : vector<4x32xf32>
    %1024 = tpu.matmul %1023, %2, %cst_274 {dimension_numbers = #tpu.dot_dimension_numbers<[1], [0], [0], [1], [0, 0, 1, 1], [], []>} : vector<4x16xf32>, vector<16x32xf32>, vector<4x32xf32> -> vector<4x32xf32>
    %1025 = vector.broadcast %10 : vector<1x32xf32> to vector<4x32xf32>
    %1026 = arith.addf %1024, %1025 : vector<4x32xf32>
    %cst_275 = arith.constant 0.000000e+00 : f32
    %1027 = vector.broadcast %cst_275 : f32 to vector<4x32xf32>
    %1028 = arith.maximumf %1026, %1027 : vector<4x32xf32>
    %cst_276 = arith.constant dense<0.000000e+00> : vector<4xf32>
    %1029 = vector.multi_reduction <add>, %1028, %cst_276 [1] : vector<4x32xf32> to vector<4xf32>
    %1030 = vector.shape_cast %1029 : vector<4xf32> to vector<4x1xf32>
    %cst_277 = arith.constant 3.200000e+01 : f32
    %1031 = vector.broadcast %cst_277 : f32 to vector<4x1xf32>
    %1032 = arith.divf %1030, %1031 : vector<4x1xf32>
    %1033 = vector.broadcast %1032 : vector<4x1xf32> to vector<4x32xf32>
    %1034 = arith.subf %1028, %1033 : vector<4x32xf32>
    %1035 = arith.mulf %1034, %1034 : vector<4x32xf32>
    %cst_278 = arith.constant dense<0.000000e+00> : vector<4xf32>
    %1036 = vector.multi_reduction <add>, %1035, %cst_278 [1] : vector<4x32xf32> to vector<4xf32>
    %1037 = vector.shape_cast %1036 : vector<4xf32> to vector<4x1xf32>
    %cst_279 = arith.constant 3.200000e+01 : f32
    %1038 = vector.broadcast %cst_279 : f32 to vector<4x1xf32>
    %1039 = arith.divf %1037, %1038 : vector<4x1xf32>
    %1040 = vector.broadcast %1032 : vector<4x1xf32> to vector<4x32xf32>
    %1041 = arith.subf %1028, %1040 : vector<4x32xf32>
    %cst_280 = arith.constant 9.99999974E-6 : f32
    %1042 = vector.broadcast %cst_280 : f32 to vector<4x1xf32>
    %1043 = arith.addf %1039, %1042 : vector<4x1xf32>
    %1044 = math.rsqrt %1043 : vector<4x1xf32>
    %1045 = vector.broadcast %1044 : vector<4x1xf32> to vector<4x32xf32>
    %1046 = arith.mulf %1041, %1045 : vector<4x32xf32>
    %1047 = vector.broadcast %11 : vector<1x32xf32> to vector<4x32xf32>
    %1048 = arith.mulf %1046, %1047 : vector<4x32xf32>
    %1049 = vector.broadcast %12 : vector<1x32xf32> to vector<4x32xf32>
    %1050 = arith.addf %1048, %1049 : vector<4x32xf32>
    %cst_281 = arith.constant dense<0.000000e+00> : vector<4x32xf32>
    %1051 = tpu.matmul %1050, %3, %cst_281 {dimension_numbers = #tpu.dot_dimension_numbers<[1], [0], [0], [1], [0, 0, 1, 1], [], []>} : vector<4x32xf32>, vector<32x32xf32>, vector<4x32xf32> -> vector<4x32xf32>
    %1052 = vector.broadcast %13 : vector<1x32xf32> to vector<4x32xf32>
    %1053 = arith.addf %1051, %1052 : vector<4x32xf32>
    %cst_282 = arith.constant 0.000000e+00 : f32
    %1054 = vector.broadcast %cst_282 : f32 to vector<4x32xf32>
    %1055 = arith.maximumf %1053, %1054 : vector<4x32xf32>
    %cst_283 = arith.constant dense<0.000000e+00> : vector<4xf32>
    %1056 = vector.multi_reduction <add>, %1055, %cst_283 [1] : vector<4x32xf32> to vector<4xf32>
    %1057 = vector.shape_cast %1056 : vector<4xf32> to vector<4x1xf32>
    %cst_284 = arith.constant 3.200000e+01 : f32
    %1058 = vector.broadcast %cst_284 : f32 to vector<4x1xf32>
    %1059 = arith.divf %1057, %1058 : vector<4x1xf32>
    %1060 = vector.broadcast %1059 : vector<4x1xf32> to vector<4x32xf32>
    %1061 = arith.subf %1055, %1060 : vector<4x32xf32>
    %1062 = arith.mulf %1061, %1061 : vector<4x32xf32>
    %cst_285 = arith.constant dense<0.000000e+00> : vector<4xf32>
    %1063 = vector.multi_reduction <add>, %1062, %cst_285 [1] : vector<4x32xf32> to vector<4xf32>
    %1064 = vector.shape_cast %1063 : vector<4xf32> to vector<4x1xf32>
    %cst_286 = arith.constant 3.200000e+01 : f32
    %1065 = vector.broadcast %cst_286 : f32 to vector<4x1xf32>
    %1066 = arith.divf %1064, %1065 : vector<4x1xf32>
    %1067 = vector.broadcast %1059 : vector<4x1xf32> to vector<4x32xf32>
    %1068 = arith.subf %1055, %1067 : vector<4x32xf32>
    %cst_287 = arith.constant 9.99999974E-6 : f32
    %1069 = vector.broadcast %cst_287 : f32 to vector<4x1xf32>
    %1070 = arith.addf %1066, %1069 : vector<4x1xf32>
    %1071 = math.rsqrt %1070 : vector<4x1xf32>
    %1072 = vector.broadcast %1071 : vector<4x1xf32> to vector<4x32xf32>
    %1073 = arith.mulf %1068, %1072 : vector<4x32xf32>
    %1074 = vector.broadcast %14 : vector<1x32xf32> to vector<4x32xf32>
    %1075 = arith.mulf %1073, %1074 : vector<4x32xf32>
    %1076 = vector.broadcast %15 : vector<1x32xf32> to vector<4x32xf32>
    %1077 = arith.addf %1075, %1076 : vector<4x32xf32>
    %cst_288 = arith.constant dense<0.000000e+00> : vector<4x96xf32>
    %1078 = tpu.matmul %1077, %4, %cst_288 {dimension_numbers = #tpu.dot_dimension_numbers<[1], [0], [0], [1], [0, 0, 1, 1], [], []>} : vector<4x32xf32>, vector<32x96xf32>, vector<4x96xf32> -> vector<4x96xf32>
    %1079 = vector.broadcast %6 : vector<1x96xf32> to vector<4x96xf32>
    %1080 = arith.addf %1078, %1079 : vector<4x96xf32>
    %cst_289 = arith.constant dense<0.000000e+00> : vector<4x96xf32>
    %1081 = tpu.matmul %969, %5, %cst_289 {dimension_numbers = #tpu.dot_dimension_numbers<[1], [0], [0], [1], [0, 0, 1, 1], [], []>} : vector<4x32xf32>, vector<32x96xf32>, vector<4x96xf32> -> vector<4x96xf32>
    %1082 = vector.broadcast %7 : vector<1x96xf32> to vector<4x96xf32>
    %1083 = arith.addf %1081, %1082 : vector<4x96xf32>
    %1084 = vector.extract_strided_slice %1080 {offsets = [0, 0], sizes = [4, 32], strides = [1, 1]} : vector<4x96xf32> to vector<4x32xf32>
    %1085 = vector.extract_strided_slice %1083 {offsets = [0, 0], sizes = [4, 32], strides = [1, 1]} : vector<4x96xf32> to vector<4x32xf32>
    %1086 = arith.addf %1084, %1085 : vector<4x32xf32>
    %1087 = arith.negf %1086 : vector<4x32xf32>
    %1088 = math.exp %1087 : vector<4x32xf32>
    %cst_290 = arith.constant 1.000000e+00 : f32
    %1089 = vector.broadcast %cst_290 : f32 to vector<4x32xf32>
    %1090 = arith.addf %1089, %1088 : vector<4x32xf32>
    %1091 = arith.divf %1089, %1090 : vector<4x32xf32>
    %1092 = vector.extract_strided_slice %1080 {offsets = [0, 32], sizes = [4, 32], strides = [1, 1]} : vector<4x96xf32> to vector<4x32xf32>
    %1093 = vector.extract_strided_slice %1083 {offsets = [0, 32], sizes = [4, 32], strides = [1, 1]} : vector<4x96xf32> to vector<4x32xf32>
    %1094 = arith.addf %1092, %1093 : vector<4x32xf32>
    %1095 = arith.negf %1094 : vector<4x32xf32>
    %1096 = math.exp %1095 : vector<4x32xf32>
    %cst_291 = arith.constant 1.000000e+00 : f32
    %1097 = vector.broadcast %cst_291 : f32 to vector<4x32xf32>
    %1098 = arith.addf %1097, %1096 : vector<4x32xf32>
    %1099 = arith.divf %1097, %1098 : vector<4x32xf32>
    %1100 = vector.extract_strided_slice %1080 {offsets = [0, 64], sizes = [4, 32], strides = [1, 1]} : vector<4x96xf32> to vector<4x32xf32>
    %1101 = vector.extract_strided_slice %1083 {offsets = [0, 64], sizes = [4, 32], strides = [1, 1]} : vector<4x96xf32> to vector<4x32xf32>
    %1102 = arith.mulf %1091, %1101 : vector<4x32xf32>
    %1103 = arith.addf %1100, %1102 : vector<4x32xf32>
    %1104 = math.tanh %1103 : vector<4x32xf32>
    %cst_292 = arith.constant 1.000000e+00 : f32
    %1105 = vector.broadcast %cst_292 : f32 to vector<4x32xf32>
    %1106 = arith.subf %1105, %1099 : vector<4x32xf32>
    %1107 = arith.mulf %1106, %1104 : vector<4x32xf32>
    %1108 = arith.mulf %1099, %969 : vector<4x32xf32>
    %1109 = arith.addf %1107, %1108 : vector<4x32xf32>
    %cst_293 = arith.constant dense<0.000000e+00> : vector<4xf32>
    %1110 = vector.multi_reduction <add>, %1109, %cst_293 [1] : vector<4x32xf32> to vector<4xf32>
    %1111 = vector.shape_cast %1110 : vector<4xf32> to vector<4x1xf32>
    %cst_294 = arith.constant 3.200000e+01 : f32
    %1112 = vector.broadcast %cst_294 : f32 to vector<4x1xf32>
    %1113 = arith.divf %1111, %1112 : vector<4x1xf32>
    %1114 = vector.broadcast %1113 : vector<4x1xf32> to vector<4x32xf32>
    %1115 = arith.subf %1109, %1114 : vector<4x32xf32>
    %1116 = arith.mulf %1115, %1115 : vector<4x32xf32>
    %cst_295 = arith.constant dense<0.000000e+00> : vector<4xf32>
    %1117 = vector.multi_reduction <add>, %1116, %cst_295 [1] : vector<4x32xf32> to vector<4xf32>
    %1118 = vector.shape_cast %1117 : vector<4xf32> to vector<4x1xf32>
    %cst_296 = arith.constant 3.200000e+01 : f32
    %1119 = vector.broadcast %cst_296 : f32 to vector<4x1xf32>
    %1120 = arith.divf %1118, %1119 : vector<4x1xf32>
    %1121 = vector.broadcast %1113 : vector<4x1xf32> to vector<4x32xf32>
    %1122 = arith.subf %1109, %1121 : vector<4x32xf32>
    %cst_297 = arith.constant 9.99999974E-6 : f32
    %1123 = vector.broadcast %cst_297 : f32 to vector<4x1xf32>
    %1124 = arith.addf %1120, %1123 : vector<4x1xf32>
    %1125 = math.rsqrt %1124 : vector<4x1xf32>
    %1126 = vector.broadcast %1125 : vector<4x1xf32> to vector<4x32xf32>
    %1127 = arith.mulf %1122, %1126 : vector<4x32xf32>
    %1128 = vector.broadcast %16 : vector<1x32xf32> to vector<4x32xf32>
    %1129 = arith.mulf %1127, %1128 : vector<4x32xf32>
    %1130 = vector.broadcast %17 : vector<1x32xf32> to vector<4x32xf32>
    %1131 = arith.addf %1129, %1130 : vector<4x32xf32>
    %cst_298 = arith.constant dense<0.000000e+00> : vector<4x5xf32>
    %1132 = tpu.matmul %1131, %8, %cst_298 {dimension_numbers = #tpu.dot_dimension_numbers<[1], [0], [0], [1], [0, 0, 1, 1], [], []>} : vector<4x32xf32>, vector<32x5xf32>, vector<4x5xf32> -> vector<4x5xf32>
    %1133 = vector.broadcast %9 : vector<1x5xf32> to vector<4x5xf32>
    %1134 = arith.addf %1132, %1133 : vector<4x5xf32>
    %1135 = arith.index_cast %c7_i32 : i32 to index
    %c0_299 = arith.constant 0 : index
    %c0_300 = arith.constant 0 : index
    %1136 = vector.load %arg11[%1135, %c0_299, %c0_300] : memref<8x4x5xf32, #tpu.memory_space<vmem>>, vector<1x4x5xf32>
    %1137 = vector.shape_cast %1136 : vector<1x4x5xf32> to vector<4x5xf32>
    %1138 = vector.shape_cast %1134 : vector<4x5xf32> to vector<1x4x5xf32>
    tpu.vector_store %arg11[%1135, %c0_299, %c0_300], %1138 {strides = array<i32>} : memref<8x4x5xf32, #tpu.memory_space<vmem>>, vector<1x4x5xf32>,
    %c8_i32 = arith.constant 8 : i32
    %c0_301 = arith.constant 0 : index
    %c0_302 = arith.constant 0 : index
    %1139 = vector.load %arg12[%c0_301, %c0_302] : memref<4x32xf32, #tpu.memory_space<vmem>>, vector<4x32xf32>
    tpu.vector_store %arg12[%c0_301, %c0_302], %1109 {strides = array<i32>} : memref<4x32xf32, #tpu.memory_space<vmem>>, vector<4x32xf32>,
    return
  }
}

</mosaic_0001>

<llo_original>
// kernel: tpu_custom_call.1
$region0: #{tpu_custom_call.1}
  #allocation0 [shape = 'u32[]', space=smem, size = 0x4, offset = 0x4, fixed_abs, tag = 'smem constant byte address 0x4 - core index']
  #allocation1 [shape = 'u32[144,128]{1,0:T(1,128)}', space=vmem, size = 0x12000, scoped, tag = 'internal scratch']
  %s0 = inlined_call_operand.vmem [shape: f32[8,4,16], index: 0, kind: input, shape index: {}]
  %s1 = inlined_call_operand.hbm [shape: f32[4,32], index: 1, kind: input, shape index: {}]
  %s2 = inlined_call_operand.vmem [shape: f32[2,16], index: 2, kind: input, shape index: {}]
  %s3 = inlined_call_operand.hbm [shape: f32[16,32], index: 3, kind: input, shape index: {}]
  %s4 = inlined_call_operand.hbm [shape: f32[32,32], index: 4, kind: input, shape index: {}]
  %s5 = inlined_call_operand.hbm [shape: f32[32,96], index: 5, kind: input, shape index: {}]
  %s6 = inlined_call_operand.hbm [shape: f32[32,96], index: 6, kind: input, shape index: {}]
  %s7 = inlined_call_operand.vmem [shape: f32[2,96], index: 7, kind: input, shape index: {}]
  %s8 = inlined_call_operand.vmem [shape: f32[32,5], index: 8, kind: input, shape index: {}]
  %s9 = inlined_call_operand.vmem [shape: f32[1,5], index: 9, kind: input, shape index: {}]
  %s10 = inlined_call_operand.vmem [shape: f32[8,32], index: 10, kind: input, shape index: {}]
  %s11 = inlined_call_operand.vmem [shape: f32[8,4,5], index: 11, kind: output, shape index: {0}]
  %s12 = inlined_call_operand.hbm [shape: f32[4,32], index: 12, kind: output, shape index: {1}]
  %13 = xla_tuple %s11, %s12
  %s14 = sld [smem:[#allocation0]]
  $region82: #{tpu_custom_call.1} parent=0
    _
  %s16 = ssub.s32 1, %s14
  %s17 = scalar_select 0, %s16, %s14
  $region1: #{tpu_custom_call.1} parent=0
    #allocation2 [shape = 'u8[2048]{0}', space=vmem, size = 0x800, scoped, tag = 'input window, operand 1, single buffered']
    #allocation3 [shape = 's32[1]{0}', space=sflag, size = 0x4, scoped, tag = 'scoped memory for tpu_custom_call.1']
    #allocation4 [shape = 's32[1]{0}', space=sflag, size = 0x4, scoped, tag = 'scoped memory for tpu_custom_call.1']
    #allocation5 [shape = 'u8[8192]{0}', space=vmem, size = 0x2000, scoped, tag = 'input window, operand 3, single buffered']
    #allocation6 [shape = 's32[1]{0}', space=sflag, size = 0x4, scoped, tag = 'scoped memory for tpu_custom_call.1']
    #allocation7 [shape = 'u8[16384]{0}', space=vmem, size = 0x4000, scoped, tag = 'input window, operand 4, single buffered']
    #allocation8 [shape = 'u8[16384]{0}', space=vmem, size = 0x4000, scoped, tag = 'input window, operand 5, single buffered']
    #allocation9 [shape = 's32[1]{0}', space=sflag, size = 0x4, scoped, tag = 'scoped memory for tpu_custom_call.1']
    #allocation10 [shape = 'u8[16384]{0}', space=vmem, size = 0x4000, scoped, tag = 'input window, operand 6, single buffered']
    #allocation11 [shape = 'u8[2048]{0}', space=vmem, size = 0x800, scoped, tag = 'output window, operand 1, single buffered']
    %18 = vsyncpa [#allocation3], 0
    %19 = vsyncpa [#allocation6], 0
    %20 = vsyncpa [#allocation9], 0
    %21 = vsyncpa [#allocation4], 0
    // Predicated region
    $region2: #{tpu_custom_call.1} parent=1 // pred_check
      _
    $region3: #{tpu_custom_call.1} parent=1 // pred_check_branch
      %23 = sbr.rel (0) target = $region5
    $region4: #{tpu_custom_call.1} parent=1 // pred_region
      _
    $region5: #{tpu_custom_call.1} parent=1 // pred_fallthru
      _
    // Predicated region
    $region6: #{tpu_custom_call.1} parent=1 // pred_check
      _
    $region7: #{tpu_custom_call.1} parent=1 // pred_check_branch
      %25 = sbr.rel (0) target = $region9
    $region8: #{tpu_custom_call.1} parent=1 // pred_region
      %s27 = ssub.s32 64, 64
      %28 = vsyncadd [#allocation3], %s27
      %s30 = sshll.u32 [#allocation2], 4
      %s31 = int_to_ptr.vmem [resolvable:$true] %s30
      %33 = dma.hbm_to_vmem [thread:$0]  %s1, 64, %s31, [#allocation3]
    $region9: #{tpu_custom_call.1} parent=1 // pred_fallthru
      _
    // Predicated region
    $region10: #{tpu_custom_call.1} parent=1 // pred_check
      _
    $region11: #{tpu_custom_call.1} parent=1 // pred_check_branch
      %35 = sbr.rel (0) target = $region13
    $region12: #{tpu_custom_call.1} parent=1 // pred_region
      _
    $region13: #{tpu_custom_call.1} parent=1 // pred_fallthru
      _
    // Predicated region
    $region14: #{tpu_custom_call.1} parent=1 // pred_check
      _
    $region15: #{tpu_custom_call.1} parent=1 // pred_check_branch
      %37 = sbr.rel (0) target = $region17
    $region16: #{tpu_custom_call.1} parent=1 // pred_region
      %s39 = ssub.s32 256, 256
      %40 = vsyncadd [#allocation6], %s39
      %s41 = sshll.u32 [#allocation5], 4
      %s42 = int_to_ptr.vmem [resolvable:$true] %s41
      %47 = dma.hbm_to_vmem [thread:$0]  %s3, 256, %s42, [#allocation6], 128, 128, 8
    $region17: #{tpu_custom_call.1} parent=1 // pred_fallthru
      _
    // Predicated region
    $region18: #{tpu_custom_call.1} parent=1 // pred_check
      _
    $region19: #{tpu_custom_call.1} parent=1 // pred_check_branch
      %49 = sbr.rel (0) target = $region21
    $region20: #{tpu_custom_call.1} parent=1 // pred_region
      %s51 = ssub.s32 512, 512
      %52 = vsyncadd [#allocation6], %s51
      %s53 = sshll.u32 [#allocation7], 4
      %s54 = int_to_ptr.vmem [resolvable:$true] %s53
      %59 = dma.hbm_to_vmem [thread:$0]  %s4, 512, %s54, [#allocation6], 128, 128, 8
    $region21: #{tpu_custom_call.1} parent=1 // pred_fallthru
      _
    // Predicated region
    $region22: #{tpu_custom_call.1} parent=1 // pred_check
      _
    $region23: #{tpu_custom_call.1} parent=1 // pred_check_branch
      %61 = sbr.rel (0) target = $region25
    $region24: #{tpu_custom_call.1} parent=1 // pred_region
      %s63 = ssub.s32 512, 512
      %64 = vsyncadd [#allocation9], %s63
      %s65 = sshll.u32 [#allocation8], 4
      %s66 = int_to_ptr.vmem [resolvable:$true] %s65
      %71 = dma.hbm_to_vmem [thread:$0]  %s5, 512, %s66, [#allocation9], 128, 128, 8
    $region25: #{tpu_custom_call.1} parent=1 // pred_fallthru
      _
    // Predicated region
    $region26: #{tpu_custom_call.1} parent=1 // pred_check
      _
    $region27: #{tpu_custom_call.1} parent=1 // pred_check_branch
      %73 = sbr.rel (0) target = $region29
    $region28: #{tpu_custom_call.1} parent=1 // pred_region
      %s75 = ssub.s32 512, 512
      %76 = vsyncadd [#allocation9], %s75
      %s77 = sshll.u32 [#allocation10], 4
      %s78 = int_to_ptr.vmem [resolvable:$true] %s77
      %83 = dma.hbm_to_vmem [thread:$0]  %s6, 512, %s78, [#allocation9], 128, 128, 8
    $region29: #{tpu_custom_call.1} parent=1 // pred_fallthru
      _
    // Predicated region
    $region30: #{tpu_custom_call.1} parent=1 // pred_check
      _
    $region31: #{tpu_custom_call.1} parent=1 // pred_check_branch
      %85 = sbr.rel (0) target = $region33
    $region32: #{tpu_custom_call.1} parent=1 // pred_region
      _
    $region33: #{tpu_custom_call.1} parent=1 // pred_fallthru
      _
    // Predicated region
    $region34: #{tpu_custom_call.1} parent=1 // pred_check
      _
    $region35: #{tpu_custom_call.1} parent=1 // pred_check_branch
      %87 = sbr.rel (0) target = $region37
    $region36: #{tpu_custom_call.1} parent=1 // pred_region
      _
    $region37: #{tpu_custom_call.1} parent=1 // pred_fallthru
      _
    // Predicated region
    $region38: #{tpu_custom_call.1} parent=1 // pred_check
      _
    $region39: #{tpu_custom_call.1} parent=1 // pred_check_branch
      %89 = sbr.rel (0) target = $region41
    $region40: #{tpu_custom_call.1} parent=1 // pred_region
      _
    $region41: #{tpu_custom_call.1} parent=1 // pred_fallthru
      _
    // Predicated region
    $region42: #{tpu_custom_call.1} parent=1 // pred_check
      _
    $region43: #{tpu_custom_call.1} parent=1 // pred_check_branch
      %91 = sbr.rel (0) target = $region45
    $region44: #{tpu_custom_call.1} parent=1 // pred_region
      _
    $region45: #{tpu_custom_call.1} parent=1 // pred_fallthru
      _
    // Predicated region
    $region46: #{tpu_custom_call.1} parent=1 // pred_check
      _
    $region47: #{tpu_custom_call.1} parent=1 // pred_check_branch
      %93 = sbr.rel (0) target = $region49
    $region48: #{tpu_custom_call.1} parent=1 // pred_region
      %94 = dma.done [#allocation3], 64
    $region49: #{tpu_custom_call.1} parent=1 // pred_fallthru
      _
    // Predicated region
    $region50: #{tpu_custom_call.1} parent=1 // pred_check
      _
    $region51: #{tpu_custom_call.1} parent=1 // pred_check_branch
      %96 = sbr.rel (0) target = $region53
    $region52: #{tpu_custom_call.1} parent=1 // pred_region
      %97 = dma.done [#allocation6], 256
    $region53: #{tpu_custom_call.1} parent=1 // pred_fallthru
      _
    // Predicated region
    $region54: #{tpu_custom_call.1} parent=1 // pred_check
      _
    $region55: #{tpu_custom_call.1} parent=1 // pred_check_branch
      %99 = sbr.rel (0) target = $region57
    $region56: #{tpu_custom_call.1} parent=1 // pred_region
      %100 = dma.done [#allocation6], 512
    $region57: #{tpu_custom_call.1} parent=1 // pred_fallthru
      _
    // Predicated region
    $region58: #{tpu_custom_call.1} parent=1 // pred_check
      _
    $region59: #{tpu_custom_call.1} parent=1 // pred_check_branch
      %102 = sbr.rel (0) target = $region61
    $region60: #{tpu_custom_call.1} parent=1 // pred_region
      %103 = dma.done [#allocation9], 512
    $region61: #{tpu_custom_call.1} parent=1 // pred_fallthru
      _
    // Predicated region
    $region62: #{tpu_custom_call.1} parent=1 // pred_check
      _
    $region63: #{tpu_custom_call.1} parent=1 // pred_check_branch
      %105 = sbr.rel (0) target = $region65
    $region64: #{tpu_custom_call.1} parent=1 // pred_region
      %106 = dma.done [#allocation9], 512
    $region65: #{tpu_custom_call.1} parent=1 // pred_fallthru
      _
    %v107 = vld [vmem:[%s2] sm:$0x1]
    %v108 = vld [vmem:[%s2 + $0x1] sm:$0x1]
    %v109 = vld [vmem:[#allocation5] sm:$0xff]
    %v110 = vld [vmem:[#allocation5 + $0x8] sm:$0xff]
    %v111 = vld [vmem:[#allocation7] sm:$0xff]
    %v112 = vld [vmem:[#allocation7 + $0x8] sm:$0xff]
    %v113 = vld [vmem:[#allocation7 + $0x10] sm:$0xff]
    %v114 = vld [vmem:[#allocation7 + $0x18] sm:$0xff]
    %v115 = vld [vmem:[#allocation8] sm:$0xff]
    %v116 = vld [vmem:[#allocation8 + $0x8] sm:$0xff]
    %v117 = vld [vmem:[#allocation8 + $0x10] sm:$0xff]
    %v118 = vld [vmem:[#allocation8 + $0x18] sm:$0xff]
    %v119 = vld [vmem:[#allocation10] sm:$0xff]
    %v120 = vld [vmem:[#allocation10 + $0x8] sm:$0xff]
    %v121 = vld [vmem:[#allocation10 + $0x10] sm:$0xff]
    %v122 = vld [vmem:[#allocation10 + $0x18] sm:$0xff]
    %v123 = vld [vmem:[%s7] sm:$0x1]
    %v124 = vld [vmem:[%s7 + $0x1] sm:$0x1]
    %v125 = vld [vmem:[%s8] sm:$0xff]
    %v126 = vld [vmem:[%s8 + $0x8] sm:$0xff]
    %v127 = vld [vmem:[%s8 + $0x10] sm:$0xff]
    %v128 = vld [vmem:[%s8 + $0x18] sm:$0xff]
    %v129 = vld [vmem:[%s9] sm:$0x1]
    %v130 = vld [vmem:[%s10] sm:$0x1]
    %v131 = vld [vmem:[%s10 + $0x1] sm:$0x1]
    %v132 = vld [vmem:[%s10 + $0x2] sm:$0x1]
    %v133 = vld [vmem:[%s10 + $0x3] sm:$0x1]
    %v134 = vld [vmem:[%s10 + $0x4] sm:$0x1]
    %v135 = vld [vmem:[%s10 + $0x5] sm:$0x1]
    %v136 = vld [vmem:[%s10 + $0x6] sm:$0x1]
    %v137 = vld [vmem:[%s10 + $0x7] sm:$0x1]
    %v138 = vld [vmem:[#allocation2] sm:$0xf]
    %v139 = vld [vmem:[%s0] sm:$0xf]
    %vm140 = vcmask 125952
    %v141 = vsel %vm140, %v139, 0.0
    %142 = vadd.xlane.f32.xlu0 %v141
    %v143 = vpop.xlane.xlu0 %142
    %v144 = vrcp.pop 16.0
    %v145 = vmul.f32 %v143, %v144
    %v146 = vsub.f32 %v139, %v145
    %v147 = vmul.f32 %v146, %v146
    %v148 = vsel %vm140, %v147, 0.0
    %149 = vadd.xlane.f32.xlu0 %v148
    %v150 = vpop.xlane.xlu0 %149
    %v151 = vmul.f32 %v150, %v144
    %v152 = vadd.f32 %v151, 1e-05
    %v153 = vrsqrt.pop %v152
    %v154 = vmul.f32 %v146, %v153
    %v155 = vlaneseq
    %v156 = vshrl.u32 %v155, 7
    %v157 = vsub.s32 0, %v156
    %v158 = vrot.slane %v107, %v157
    %v159 = vmul.f32 %v154, %v158
    %v160 = vlaneseq
    %v161 = vshrl.u32 %v160, 7
    %v162 = vsub.s32 0, %v161
    %v163 = vrot.slane %v108, %v162
    %v164 = vadd.f32 %v159, %v163
    %v165 = vlaneseq
    %v166 = vshrl.u32 %v165, 7
    %v167 = vsub.s32 0, %v166
    %v168 = vrot.slane %v130, %v167
    %vm169 = vcmask 130048
    %v171 = vsel %vm169, %v164, 0
    %173 = vmatprep.subr.mxu0 0.0
    %174 = vmatpush1.msra.mxu0 0.0
    %175 = vmatprep.subr.mxu0 0.0
    %176 = vmatpush1.msra.mxu0 0.0
    %177 = vmatprep.subr.mxu0 0.0
    %178 = vmatpush1.msra.mxu0 0.0
    %179 = vmatprep.subr.mxu0 0.0
    %180 = vmatpush1.msra.mxu0 0.0
    %181 = vmatprep.subr.mxu0 0.0
    %182 = vmatpush1.msra.mxu0 0.0
    %183 = vmatprep.subr.mxu0 0.0
    %184 = vmatpush1.msra.mxu0 0.0
    %185 = vmatprep.subr.mxu0 0.0
    %186 = vmatpush1.msra.mxu0 0.0
    %187 = vmatprep.subr.mxu0 0.0
    %188 = vmatpush1.msra.mxu0 0.0
    %189 = vmatprep.subr.mxu0 0.0
    %190 = vmatpush1.msra.mxu0 0.0
    %191 = vmatprep.subr.mxu0 0.0
    %192 = vmatpush1.msra.mxu0 0.0
    %193 = vmatprep.subr.mxu0 0.0
    %194 = vmatpush1.msra.mxu0 0.0
    %195 = vmatprep.subr.mxu0 0.0
    %196 = vmatpush1.msra.mxu0 0.0
    %197 = vmatprep.subr.mxu0 0.0
    %198 = vmatpush1.msra.mxu0 0.0
    %199 = vmatprep.subr.mxu0 0.0
    %200 = vmatpush1.msra.mxu0 0.0
    %201 = vmatprep.subr.mxu0 0.0
    %202 = vmatpush1.msra.mxu0 %v110
    %203 = vmatprep.subr.mxu0 0.0
    %204 = vmatpush1.msra.mxu0 %v109
    %205 = vmatprep.subr.mxu0 0.0
    %206 = vmatpush2.msra.mxu0 0.0
    %207 = vmatprep.subr.mxu0 0.0
    %208 = vmatpush2.msra.mxu0 0.0
    %209 = vmatprep.subr.mxu0 0.0
    %210 = vmatpush2.msra.mxu0 0.0
    %211 = vmatprep.subr.mxu0 0.0
    %212 = vmatpush2.msra.mxu0 0.0
    %213 = vmatprep.subr.mxu0 0.0
    %214 = vmatpush2.msra.mxu0 0.0
    %215 = vmatprep.subr.mxu0 0.0
    %216 = vmatpush2.msra.mxu0 0.0
    %217 = vmatprep.subr.mxu0 0.0
    %218 = vmatpush2.msra.mxu0 0.0
    %219 = vmatprep.subr.mxu0 0.0
    %220 = vmatpush2.msra.mxu0 0.0
    %221 = vmatprep.subr.mxu0 0.0
    %222 = vmatpush2.msra.mxu0 0.0
    %223 = vmatprep.subr.mxu0 0.0
    %224 = vmatpush2.msra.mxu0 0.0
    %225 = vmatprep.subr.mxu0 0.0
    %226 = vmatpush2.msra.mxu0 0.0
    %227 = vmatprep.subr.mxu0 0.0
    %228 = vmatpush2.msra.mxu0 0.0
    %229 = vmatprep.subr.mxu0 0.0
    %230 = vmatpush2.msra.mxu0 0.0
    %231 = vmatprep.subr.mxu0 0.0
    %232 = vmatpush2.msra.mxu0 0.0
    %233 = vmatprep.subr.mxu0 0.0
    %234 = vmatpush2.msra.mxu0 0.0
    %235 = vmatprep.subr.mxu0 0.0
    %236 = vmatpush2.msra.mxu0 0.0
    %237 = vmatprep.mubr.f32.mxu0 0.0
    %238 = vmatmul.mubr.f32.gmra.mxu0 %v171
    %v239 = vpop.f32.mrf.mxu0
    %v240 = vadd.f32 %v168, %v239
    %v241 = vpop.f32.mrf.mxu0
    %242 = vdwg.mxu0
    %v243 = vmax.f32 %v240, 0.0
    %vm244 = vcmask 257024
    %v245 = vsel %vm244, %v243, 0.0
    %246 = vadd.xlane.f32.xlu0 %v245
    %v247 = vpop.xlane.xlu0 %246
    %v248 = vrcp.pop 32.0
    %v249 = vmul.f32 %v247, %v248
    %v250 = vsub.f32 %v243, %v249
    %v251 = vmul.f32 %v250, %v250
    %v252 = vsel %vm244, %v251, 0.0
    %253 = vadd.xlane.f32.xlu0 %v252
    %v254 = vpop.xlane.xlu0 %253
    %v255 = vmul.f32 %v254, %v248
    %v256 = vadd.f32 %v255, 1e-05
    %v257 = vrsqrt.pop %v256
    %v258 = vmul.f32 %v250, %v257
    %v259 = vlaneseq
    %v260 = vshrl.u32 %v259, 7
    %v261 = vsub.s32 0, %v260
    %v262 = vrot.slane %v131, %v261
    %v263 = vmul.f32 %v258, %v262
    %v264 = vlaneseq
    %v265 = vshrl.u32 %v264, 7
    %v266 = vsub.s32 0, %v265
    %v267 = vrot.slane %v132, %v266
    %v268 = vadd.f32 %v263, %v267
    %v269 = vlaneseq
    %v270 = vshrl.u32 %v269, 7
    %v271 = vsub.s32 0, %v270
    %v272 = vrot.slane %v133, %v271
    %vm273 = vcmask 261120
    %v275 = vsel %vm273, %v268, 0
    %277 = vmatprep.subr.mxu0 0.0
    %278 = vmatpush1.msra.mxu0 0.0
    %279 = vmatprep.subr.mxu0 0.0
    %280 = vmatpush1.msra.mxu0 0.0
    %281 = vmatprep.subr.mxu0 0.0
    %282 = vmatpush1.msra.mxu0 0.0
    %283 = vmatprep.subr.mxu0 0.0
    %284 = vmatpush1.msra.mxu0 0.0
    %285 = vmatprep.subr.mxu0 0.0
    %286 = vmatpush1.msra.mxu0 0.0
    %287 = vmatprep.subr.mxu0 0.0
    %288 = vmatpush1.msra.mxu0 0.0
    %289 = vmatprep.subr.mxu0 0.0
    %290 = vmatpush1.msra.mxu0 0.0
    %291 = vmatprep.subr.mxu0 0.0
    %292 = vmatpush1.msra.mxu0 0.0
    %293 = vmatprep.subr.mxu0 0.0
    %294 = vmatpush1.msra.mxu0 0.0
    %295 = vmatprep.subr.mxu0 0.0
    %296 = vmatpush1.msra.mxu0 0.0
    %297 = vmatprep.subr.mxu0 0.0
    %298 = vmatpush1.msra.mxu0 0.0
    %299 = vmatprep.subr.mxu0 0.0
    %300 = vmatpush1.msra.mxu0 0.0
    %301 = vmatprep.subr.mxu0 0.0
    %302 = vmatpush1.msra.mxu0 %v114
    %303 = vmatprep.subr.mxu0 0.0
    %304 = vmatpush1.msra.mxu0 %v113
    %305 = vmatprep.subr.mxu0 0.0
    %306 = vmatpush1.msra.mxu0 %v112
    %307 = vmatprep.subr.mxu0 0.0
    %308 = vmatpush1.msra.mxu0 %v111
    %309 = vmatprep.subr.mxu0 0.0
    %310 = vmatpush2.msra.mxu0 0.0
    %311 = vmatprep.subr.mxu0 0.0
    %312 = vmatpush2.msra.mxu0 0.0
    %313 = vmatprep.subr.mxu0 0.0
    %314 = vmatpush2.msra.mxu0 0.0
    %315 = vmatprep.subr.mxu0 0.0
    %316 = vmatpush2.msra.mxu0 0.0
    %317 = vmatprep.subr.mxu0 0.0
    %318 = vmatpush2.msra.mxu0 0.0
    %319 = vmatprep.subr.mxu0 0.0
    %320 = vmatpush2.msra.mxu0 0.0
    %321 = vmatprep.subr.mxu0 0.0
    %322 = vmatpush2.msra.mxu0 0.0
    %323 = vmatprep.subr.mxu0 0.0
    %324 = vmatpush2.msra.mxu0 0.0
    %325 = vmatprep.subr.mxu0 0.0
    %326 = vmatpush2.msra.mxu0 0.0
    %327 = vmatprep.subr.mxu0 0.0
    %328 = vmatpush2.msra.mxu0 0.0
    %329 = vmatprep.subr.mxu0 0.0
    %330 = vmatpush2.msra.mxu0 0.0
    %331 = vmatprep.subr.mxu0 0.0
    %332 = vmatpush2.msra.mxu0 0.0
    %333 = vmatprep.subr.mxu0 0.0
    %334 = vmatpush2.msra.mxu0 0.0
    %335 = vmatprep.subr.mxu0 0.0
    %336 = vmatpush2.msra.mxu0 0.0
    %337 = vmatprep.subr.mxu0 0.0
    %338 = vmatpush2.msra.mxu0 0.0
    %339 = vmatprep.subr.mxu0 0.0
    %340 = vmatpush2.msra.mxu0 0.0
    %341 = vmatprep.mubr.f32.mxu0 0.0
    %342 = vmatmul.mubr.f32.gmra.mxu0 %v275
    %v343 = vpop.f32.mrf.mxu0
    %v344 = vadd.f32 %v272, %v343
    %v345 = vpop.f32.mrf.mxu0
    %346 = vdwg.mxu0
    %v347 = vmax.f32 %v344, 0.0
    %v348 = vsel %vm244, %v347, 0.0
    %349 = vadd.xlane.f32.xlu0 %v348
    %v350 = vpop.xlane.xlu0 %349
    %v351 = vmul.f32 %v350, %v248
    %v352 = vsub.f32 %v347, %v351
    %v353 = vmul.f32 %v352, %v352
    %v354 = vsel %vm244, %v353, 0.0
    %355 = vadd.xlane.f32.xlu0 %v354
    %v356 = vpop.xlane.xlu0 %355
    %v357 = vmul.f32 %v356, %v248
    %v358 = vadd.f32 %v357, 1e-05
    %v359 = vrsqrt.pop %v358
    %v360 = vmul.f32 %v352, %v359
    %v361 = vlaneseq
    %v362 = vshrl.u32 %v361, 7
    %v363 = vsub.s32 0, %v362
    %v364 = vrot.slane %v134, %v363
    %v365 = vmul.f32 %v360, %v364
    %v366 = vlaneseq
    %v367 = vshrl.u32 %v366, 7
    %v368 = vsub.s32 0, %v367
    %v369 = vrot.slane %v135, %v368
    %v370 = vadd.f32 %v365, %v369
    %v371 = vlaneseq
    %v372 = vshrl.u32 %v371, 7
    %v373 = vsub.s32 0, %v372
    %v374 = vrot.slane %v123, %v373
    %v376 = vsel %vm273, %v370, 0
    %378 = vmatprep.subr.mxu0 0.0
    %379 = vmatpush1.msra.mxu0 0.0
    %380 = vmatprep.subr.mxu0 0.0
    %381 = vmatpush1.msra.mxu0 0.0
    %382 = vmatprep.subr.mxu0 0.0
    %383 = vmatpush1.msra.mxu0 0.0
    %384 = vmatprep.subr.mxu0 0.0
    %385 = vmatpush1.msra.mxu0 0.0
    %386 = vmatprep.subr.mxu0 0.0
    %387 = vmatpush1.msra.mxu0 0.0
    %388 = vmatprep.subr.mxu0 0.0
    %389 = vmatpush1.msra.mxu0 0.0
    %390 = vmatprep.subr.mxu0 0.0
    %391 = vmatpush1.msra.mxu0 0.0
    %392 = vmatprep.subr.mxu0 0.0
    %393 = vmatpush1.msra.mxu0 0.0
    %394 = vmatprep.subr.mxu0 0.0
    %395 = vmatpush1.msra.mxu0 0.0
    %396 = vmatprep.subr.mxu0 0.0
    %397 = vmatpush1.msra.mxu0 0.0
    %398 = vmatprep.subr.mxu0 0.0
    %399 = vmatpush1.msra.mxu0 0.0
    %400 = vmatprep.subr.mxu0 0.0
    %401 = vmatpush1.msra.mxu0 0.0
    %402 = vmatprep.subr.mxu0 0.0
    %403 = vmatpush1.msra.mxu0 %v118
    %404 = vmatprep.subr.mxu0 0.0
    %405 = vmatpush1.msra.mxu0 %v117
    %406 = vmatprep.subr.mxu0 0.0
    %407 = vmatpush1.msra.mxu0 %v116
    %408 = vmatprep.subr.mxu0 0.0
    %409 = vmatpush1.msra.mxu0 %v115
    %410 = vmatprep.subr.mxu0 0.0
    %411 = vmatpush2.msra.mxu0 0.0
    %412 = vmatprep.subr.mxu0 0.0
    %413 = vmatpush2.msra.mxu0 0.0
    %414 = vmatprep.subr.mxu0 0.0
    %415 = vmatpush2.msra.mxu0 0.0
    %416 = vmatprep.subr.mxu0 0.0
    %417 = vmatpush2.msra.mxu0 0.0
    %418 = vmatprep.subr.mxu0 0.0
    %419 = vmatpush2.msra.mxu0 0.0
    %420 = vmatprep.subr.mxu0 0.0
    %421 = vmatpush2.msra.mxu0 0.0
    %422 = vmatprep.subr.mxu0 0.0
    %423 = vmatpush2.msra.mxu0 0.0
    %424 = vmatprep.subr.mxu0 0.0
    %425 = vmatpush2.msra.mxu0 0.0
    %426 = vmatprep.subr.mxu0 0.0
    %427 = vmatpush2.msra.mxu0 0.0
    %428 = vmatprep.subr.mxu0 0.0
    %429 = vmatpush2.msra.mxu0 0.0
    %430 = vmatprep.subr.mxu0 0.0
    %431 = vmatpush2.msra.mxu0 0.0
    %432 = vmatprep.subr.mxu0 0.0
    %433 = vmatpush2.msra.mxu0 0.0
    %434 = vmatprep.subr.mxu0 0.0
    %435 = vmatpush2.msra.mxu0 0.0
    %436 = vmatprep.subr.mxu0 0.0
    %437 = vmatpush2.msra.mxu0 0.0
    %438 = vmatprep.subr.mxu0 0.0
    %439 = vmatpush2.msra.mxu0 0.0
    %440 = vmatprep.subr.mxu0 0.0
    %441 = vmatpush2.msra.mxu0 0.0
    %442 = vmatprep.mubr.f32.mxu0 0.0
    %443 = vmatmul.mubr.f32.gmra.mxu0 %v376
    %v444 = vpop.f32.mrf.mxu0
    %v445 = vadd.f32 %v374, %v444
    %v446 = vpop.f32.mrf.mxu0
    %447 = vdwg.mxu0
    %v448 = vlaneseq
    %v449 = vshrl.u32 %v448, 7
    %v450 = vsub.s32 0, %v449
    %v451 = vrot.slane %v124, %v450
    %v453 = vsel %vm273, %v138, 0
    %455 = vmatprep.subr.mxu0 0.0
    %456 = vmatpush1.msra.mxu0 0.0
    %457 = vmatprep.subr.mxu0 0.0
    %458 = vmatpush1.msra.mxu0 0.0
    %459 = vmatprep.subr.mxu0 0.0
    %460 = vmatpush1.msra.mxu0 0.0
    %461 = vmatprep.subr.mxu0 0.0
    %462 = vmatpush1.msra.mxu0 0.0
    %463 = vmatprep.subr.mxu0 0.0
    %464 = vmatpush1.msra.mxu0 0.0
    %465 = vmatprep.subr.mxu0 0.0
    %466 = vmatpush1.msra.mxu0 0.0
    %467 = vmatprep.subr.mxu0 0.0
    %468 = vmatpush1.msra.mxu0 0.0
    %469 = vmatprep.subr.mxu0 0.0
    %470 = vmatpush1.msra.mxu0 0.0
    %471 = vmatprep.subr.mxu0 0.0
    %472 = vmatpush1.msra.mxu0 0.0
    %473 = vmatprep.subr.mxu0 0.0
    %474 = vmatpush1.msra.mxu0 0.0
    %475 = vmatprep.subr.mxu0 0.0
    %476 = vmatpush1.msra.mxu0 0.0
    %477 = vmatprep.subr.mxu0 0.0
    %478 = vmatpush1.msra.mxu0 0.0
    %479 = vmatprep.subr.mxu0 0.0
    %480 = vmatpush1.msra.mxu0 %v122
    %481 = vmatprep.subr.mxu0 0.0
    %482 = vmatpush1.msra.mxu0 %v121
    %483 = vmatprep.subr.mxu0 0.0
    %484 = vmatpush1.msra.mxu0 %v120
    %485 = vmatprep.subr.mxu0 0.0
    %486 = vmatpush1.msra.mxu0 %v119
    %487 = vmatprep.subr.mxu0 0.0
    %488 = vmatpush2.msra.mxu0 0.0
    %489 = vmatprep.subr.mxu0 0.0
    %490 = vmatpush2.msra.mxu0 0.0
    %491 = vmatprep.subr.mxu0 0.0
    %492 = vmatpush2.msra.mxu0 0.0
    %493 = vmatprep.subr.mxu0 0.0
    %494 = vmatpush2.msra.mxu0 0.0
    %495 = vmatprep.subr.mxu0 0.0
    %496 = vmatpush2.msra.mxu0 0.0
    %497 = vmatprep.subr.mxu0 0.0
    %498 = vmatpush2.msra.mxu0 0.0
    %499 = vmatprep.subr.mxu0 0.0
    %500 = vmatpush2.msra.mxu0 0.0
    %501 = vmatprep.subr.mxu0 0.0
    %502 = vmatpush2.msra.mxu0 0.0
    %503 = vmatprep.subr.mxu0 0.0
    %504 = vmatpush2.msra.mxu0 0.0
    %505 = vmatprep.subr.mxu0 0.0
    %506 = vmatpush2.msra.mxu0 0.0
    %507 = vmatprep.subr.mxu0 0.0
    %508 = vmatpush2.msra.mxu0 0.0
    %509 = vmatprep.subr.mxu0 0.0
    %510 = vmatpush2.msra.mxu0 0.0
    %511 = vmatprep.subr.mxu0 0.0
    %512 = vmatpush2.msra.mxu0 0.0
    %513 = vmatprep.subr.mxu0 0.0
    %514 = vmatpush2.msra.mxu0 0.0
    %515 = vmatprep.subr.mxu0 0.0
    %516 = vmatpush2.msra.mxu0 0.0
    %517 = vmatprep.subr.mxu0 0.0
    %518 = vmatpush2.msra.mxu0 0.0
    %519 = vmatprep.mubr.f32.mxu0 0.0
    %520 = vmatmul.mubr.f32.gmra.mxu0 %v453
    %v521 = vpop.f32.mrf.mxu0
    %v522 = vadd.f32 %v451, %v521
    %v523 = vpop.f32.mrf.mxu0
    %524 = vdwg.mxu0
    %v525 = vadd.f32 %v445, %v522
    %v526 = vxor.u32 %v525, 2147483648
    %v527 = vmul.f32 %v526, 1.442695
    %v528 = vpow.pop %v527
    %v529 = vadd.f32 %v528, 1.0
    %v530 = vrcp.pop %v529
    %v531 = vmul.f32 1.0, %v530
    %533 = vrot.lane.b32.xlu0 %v522, 64
    %v534 = vpop.permute.xlu0 %533
    %v536 = vmul.f32 %v531, %v534
    %538 = vrot.lane.b32.xlu0 %v536, 64
    %v539 = vpop.permute.xlu0 %538
    %v541 = vadd.f32 %v445, %v539
    %v542 = vtanh.pop %v541
    %v543 = vsub.f32 1.0, %v531
    %545 = vrot.lane.b32.xlu0 %v542, 96
    %v546 = vpop.permute.xlu0 %545
    %v548 = vmul.f32 %v543, %v546
    %549 = vrot.lane.b32.xlu0 %v138, 32
    %v550 = vpop.permute.xlu0 %549
    %v552 = vmul.f32 %v531, %v550
    %v553 = vadd.f32 %v548, %v552
    %555 = vrot.lane.b32.xlu0 %v553, 96
    %v556 = vpop.permute.xlu0 %555
    %v558 = vsel %vm244, %v556, 0.0
    %559 = vadd.xlane.f32.xlu0 %v558
    %v560 = vpop.xlane.xlu0 %559
    %v561 = vmul.f32 %v560, %v248
    %v562 = vsub.f32 %v553, %v561
    %v563 = vmul.f32 %v562, %v562
    %565 = vrot.lane.b32.xlu0 %v563, 96
    %v566 = vpop.permute.xlu0 %565
    %v568 = vsel %vm244, %v566, 0.0
    %569 = vadd.xlane.f32.xlu0 %v568
    %v570 = vpop.xlane.xlu0 %569
    %v571 = vmul.f32 %v570, %v248
    %v572 = vadd.f32 %v571, 1e-05
    %v573 = vrsqrt.pop %v572
    %v574 = vmul.f32 %v562, %v573
    %v575 = vlaneseq
    %v576 = vshrl.u32 %v575, 7
    %v577 = vsub.s32 0, %v576
    %v578 = vrot.slane %v136, %v577
    %580 = vrot.lane.b32.xlu0 %v578, 32
    %v581 = vpop.permute.xlu0 %580
    %v583 = vmul.f32 %v574, %v581
    %v584 = vlaneseq
    %v585 = vshrl.u32 %v584, 7
    %v586 = vsub.s32 0, %v585
    %v587 = vrot.slane %v137, %v586
    %589 = vrot.lane.b32.xlu0 %v587, 32
    %v590 = vpop.permute.xlu0 %589
    %v592 = vadd.f32 %v583, %v590
    %v594 = vlaneseq
    %v595 = vshrl.u32 %v594, 7
    %v596 = vsub.s32 0, %v595
    %v597 = vrot.slane %v129, %v596
    %600 = vrot.lane.b32.xlu0 %v592, 96
    %v601 = vpop.permute.xlu0 %600
    %v602 = vsel %vm273, %v601, 0
    %604 = vmatprep.subr.mxu0 0.0
    %605 = vmatpush1.msra.mxu0 0.0
    %606 = vmatprep.subr.mxu0 0.0
    %607 = vmatpush1.msra.mxu0 0.0
    %608 = vmatprep.subr.mxu0 0.0
    %609 = vmatpush1.msra.mxu0 0.0
    %610 = vmatprep.subr.mxu0 0.0
    %611 = vmatpush1.msra.mxu0 0.0
    %612 = vmatprep.subr.mxu0 0.0
    %613 = vmatpush1.msra.mxu0 0.0
    %614 = vmatprep.subr.mxu0 0.0
    %615 = vmatpush1.msra.mxu0 0.0
    %616 = vmatprep.subr.mxu0 0.0
    %617 = vmatpush1.msra.mxu0 0.0
    %618 = vmatprep.subr.mxu0 0.0
    %619 = vmatpush1.msra.mxu0 0.0
    %620 = vmatprep.subr.mxu0 0.0
    %621 = vmatpush1.msra.mxu0 0.0
    %622 = vmatprep.subr.mxu0 0.0
    %623 = vmatpush1.msra.mxu0 0.0
    %624 = vmatprep.subr.mxu0 0.0
    %625 = vmatpush1.msra.mxu0 0.0
    %626 = vmatprep.subr.mxu0 0.0
    %627 = vmatpush1.msra.mxu0 0.0
    %628 = vmatprep.subr.mxu0 0.0
    %629 = vmatpush1.msra.mxu0 %v128
    %630 = vmatprep.subr.mxu0 0.0
    %631 = vmatpush1.msra.mxu0 %v127
    %632 = vmatprep.subr.mxu0 0.0
    %633 = vmatpush1.msra.mxu0 %v126
    %634 = vmatprep.subr.mxu0 0.0
    %635 = vmatpush1.msra.mxu0 %v125
    %636 = vmatprep.subr.mxu0 0.0
    %637 = vmatpush2.msra.mxu0 0.0
    %638 = vmatprep.subr.mxu0 0.0
    %639 = vmatpush2.msra.mxu0 0.0
    %640 = vmatprep.subr.mxu0 0.0
    %641 = vmatpush2.msra.mxu0 0.0
    %642 = vmatprep.subr.mxu0 0.0
    %643 = vmatpush2.msra.mxu0 0.0
    %644 = vmatprep.subr.mxu0 0.0
    %645 = vmatpush2.msra.mxu0 0.0
    %646 = vmatprep.subr.mxu0 0.0
    %647 = vmatpush2.msra.mxu0 0.0
    %648 = vmatprep.subr.mxu0 0.0
    %649 = vmatpush2.msra.mxu0 0.0
    %650 = vmatprep.subr.mxu0 0.0
    %651 = vmatpush2.msra.mxu0 0.0
    %652 = vmatprep.subr.mxu0 0.0
    %653 = vmatpush2.msra.mxu0 0.0
    %654 = vmatprep.subr.mxu0 0.0
    %655 = vmatpush2.msra.mxu0 0.0
    %656 = vmatprep.subr.mxu0 0.0
    %657 = vmatpush2.msra.mxu0 0.0
    %658 = vmatprep.subr.mxu0 0.0
    %659 = vmatpush2.msra.mxu0 0.0
    %660 = vmatprep.subr.mxu0 0.0
    %661 = vmatpush2.msra.mxu0 0.0
    %662 = vmatprep.subr.mxu0 0.0
    %663 = vmatpush2.msra.mxu0 0.0
    %664 = vmatprep.subr.mxu0 0.0
    %665 = vmatpush2.msra.mxu0 0.0
    %666 = vmatprep.subr.mxu0 0.0
    %667 = vmatpush2.msra.mxu0 0.0
    %668 = vmatprep.mubr.f32.mxu0 0.0
    %669 = vmatmul.mubr.f32.gmra.mxu0 %v602
    %v670 = vpop.f32.mrf.mxu0
    %v671 = vadd.f32 %v597, %v670
    %v672 = vpop.f32.mrf.mxu0
    %673 = vdwg.mxu0
    %vm674 = vcmask 35840
    %675 = vst.msk [vmem:[%s11] sm:$0xf] %vm674, %v671
    %s676 = scalar_lea.vmem %s0, 4
    %v677 = vld [vmem:[%s676] sm:$0xf]
    %v678 = vsel %vm140, %v677, 0.0
    %679 = vadd.xlane.f32.xlu0 %v678
    %v680 = vpop.xlane.xlu0 %679
    %v681 = vmul.f32 %v680, %v144
    %v682 = vsub.f32 %v677, %v681
    %v683 = vmul.f32 %v682, %v682
    %v684 = vsel %vm140, %v683, 0.0
    %685 = vadd.xlane.f32.xlu0 %v684
    %v686 = vpop.xlane.xlu0 %685
    %v687 = vmul.f32 %v686, %v144
    %v688 = vadd.f32 %v687, 1e-05
    %v689 = vrsqrt.pop %v688
    %v690 = vmul.f32 %v682, %v689
    %v691 = vmul.f32 %v690, %v158
    %v692 = vadd.f32 %v691, %v163
    %v694 = vsel %vm169, %v692, 0
    %696 = vmatprep.subr.mxu0 0.0
    %697 = vmatpush1.msra.mxu0 0.0
    %698 = vmatprep.subr.mxu0 0.0
    %699 = vmatpush1.msra.mxu0 0.0
    %700 = vmatprep.subr.mxu0 0.0
    %701 = vmatpush1.msra.mxu0 0.0
    %702 = vmatprep.subr.mxu0 0.0
    %703 = vmatpush1.msra.mxu0 0.0
    %704 = vmatprep.subr.mxu0 0.0
    %705 = vmatpush1.msra.mxu0 0.0
    %706 = vmatprep.subr.mxu0 0.0
    %707 = vmatpush1.msra.mxu0 0.0
    %708 = vmatprep.subr.mxu0 0.0
    %709 = vmatpush1.msra.mxu0 0.0
    %710 = vmatprep.subr.mxu0 0.0
    %711 = vmatpush1.msra.mxu0 0.0
    %712 = vmatprep.subr.mxu0 0.0
    %713 = vmatpush1.msra.mxu0 0.0
    %714 = vmatprep.subr.mxu0 0.0
    %715 = vmatpush1.msra.mxu0 0.0
    %716 = vmatprep.subr.mxu0 0.0
    %717 = vmatpush1.msra.mxu0 0.0
    %718 = vmatprep.subr.mxu0 0.0
    %719 = vmatpush1.msra.mxu0 0.0
    %720 = vmatprep.subr.mxu0 0.0
    %721 = vmatpush1.msra.mxu0 0.0
    %722 = vmatprep.subr.mxu0 0.0
    %723 = vmatpush1.msra.mxu0 0.0
    %724 = vmatprep.subr.mxu0 0.0
    %725 = vmatpush1.msra.mxu0 %v110
    %726 = vmatprep.subr.mxu0 0.0
    %727 = vmatpush1.msra.mxu0 %v109
    %728 = vmatprep.subr.mxu0 0.0
    %729 = vmatpush2.msra.mxu0 0.0
    %730 = vmatprep.subr.mxu0 0.0
    %731 = vmatpush2.msra.mxu0 0.0
    %732 = vmatprep.subr.mxu0 0.0
    %733 = vmatpush2.msra.mxu0 0.0
    %734 = vmatprep.subr.mxu0 0.0
    %735 = vmatpush2.msra.mxu0 0.0
    %736 = vmatprep.subr.mxu0 0.0
    %737 = vmatpush2.msra.mxu0 0.0
    %738 = vmatprep.subr.mxu0 0.0
    %739 = vmatpush2.msra.mxu0 0.0
    %740 = vmatprep.subr.mxu0 0.0
    %741 = vmatpush2.msra.mxu0 0.0
    %742 = vmatprep.subr.mxu0 0.0
    %743 = vmatpush2.msra.mxu0 0.0
    %744 = vmatprep.subr.mxu0 0.0
    %745 = vmatpush2.msra.mxu0 0.0
    %746 = vmatprep.subr.mxu0 0.0
    %747 = vmatpush2.msra.mxu0 0.0
    %748 = vmatprep.subr.mxu0 0.0
    %749 = vmatpush2.msra.mxu0 0.0
    %750 = vmatprep.subr.mxu0 0.0
    %751 = vmatpush2.msra.mxu0 0.0
    %752 = vmatprep.subr.mxu0 0.0
    %753 = vmatpush2.msra.mxu0 0.0
    %754 = vmatprep.subr.mxu0 0.0
    %755 = vmatpush2.msra.mxu0 0.0
    %756 = vmatprep.subr.mxu0 0.0
    %757 = vmatpush2.msra.mxu0 0.0
    %758 = vmatprep.subr.mxu0 0.0
    %759 = vmatpush2.msra.mxu0 0.0
    %760 = vmatprep.mubr.f32.mxu0 0.0
    %761 = vmatmul.mubr.f32.gmra.mxu0 %v694
    %v762 = vpop.f32.mrf.mxu0
    %v763 = vadd.f32 %v168, %v762
    %v764 = vpop.f32.mrf.mxu0
    %765 = vdwg.mxu0
    %v766 = vmax.f32 %v763, 0.0
    %v767 = vsel %vm244, %v766, 0.0
    %768 = vadd.xlane.f32.xlu0 %v767
    %v769 = vpop.xlane.xlu0 %768
    %v770 = vmul.f32 %v769, %v248
    %v771 = vsub.f32 %v766, %v770
    %v772 = vmul.f32 %v771, %v771
    %v773 = vsel %vm244, %v772, 0.0
    %774 = vadd.xlane.f32.xlu0 %v773
    %v775 = vpop.xlane.xlu0 %774
    %v776 = vmul.f32 %v775, %v248
    %v777 = vadd.f32 %v776, 1e-05
    %v778 = vrsqrt.pop %v777
    %v779 = vmul.f32 %v771, %v778
    %v780 = vmul.f32 %v779, %v262
    %v781 = vadd.f32 %v780, %v267
    %v783 = vsel %vm273, %v781, 0
    %785 = vmatprep.subr.mxu0 0.0
    %786 = vmatpush1.msra.mxu0 0.0
    %787 = vmatprep.subr.mxu0 0.0
    %788 = vmatpush1.msra.mxu0 0.0
    %789 = vmatprep.subr.mxu0 0.0
    %790 = vmatpush1.msra.mxu0 0.0
    %791 = vmatprep.subr.mxu0 0.0
    %792 = vmatpush1.msra.mxu0 0.0
    %793 = vmatprep.subr.mxu0 0.0
    %794 = vmatpush1.msra.mxu0 0.0
    %795 = vmatprep.subr.mxu0 0.0
    %796 = vmatpush1.msra.mxu0 0.0
    %797 = vmatprep.subr.mxu0 0.0
    %798 = vmatpush1.msra.mxu0 0.0
    %799 = vmatprep.subr.mxu0 0.0
    %800 = vmatpush1.msra.mxu0 0.0
    %801 = vmatprep.subr.mxu0 0.0
    %802 = vmatpush1.msra.mxu0 0.0
    %803 = vmatprep.subr.mxu0 0.0
    %804 = vmatpush1.msra.mxu0 0.0
    %805 = vmatprep.subr.mxu0 0.0
    %806 = vmatpush1.msra.mxu0 0.0
    %807 = vmatprep.subr.mxu0 0.0
    %808 = vmatpush1.msra.mxu0 0.0
    %809 = vmatprep.subr.mxu0 0.0
    %810 = vmatpush1.msra.mxu0 %v114
    %811 = vmatprep.subr.mxu0 0.0
    %812 = vmatpush1.msra.mxu0 %v113
    %813 = vmatprep.subr.mxu0 0.0
    %814 = vmatpush1.msra.mxu0 %v112
    %815 = vmatprep.subr.mxu0 0.0
    %816 = vmatpush1.msra.mxu0 %v111
    %817 = vmatprep.subr.mxu0 0.0
    %818 = vmatpush2.msra.mxu0 0.0
    %819 = vmatprep.subr.mxu0 0.0
    %820 = vmatpush2.msra.mxu0 0.0
    %821 = vmatprep.subr.mxu0 0.0
    %822 = vmatpush2.msra.mxu0 0.0
    %823 = vmatprep.subr.mxu0 0.0
    %824 = vmatpush2.msra.mxu0 0.0
    %825 = vmatprep.subr.mxu0 0.0
    %826 = vmatpush2.msra.mxu0 0.0
    %827 = vmatprep.subr.mxu0 0.0
    %828 = vmatpush2.msra.mxu0 0.0
    %829 = vmatprep.subr.mxu0 0.0
    %830 = vmatpush2.msra.mxu0 0.0
    %831 = vmatprep.subr.mxu0 0.0
    %832 = vmatpush2.msra.mxu0 0.0
    %833 = vmatprep.subr.mxu0 0.0
    %834 = vmatpush2.msra.mxu0 0.0
    %835 = vmatprep.subr.mxu0 0.0
    %836 = vmatpush2.msra.mxu0 0.0
    %837 = vmatprep.subr.mxu0 0.0
    %838 = vmatpush2.msra.mxu0 0.0
    %839 = vmatprep.subr.mxu0 0.0
    %840 = vmatpush2.msra.mxu0 0.0
    %841 = vmatprep.subr.mxu0 0.0
    %842 = vmatpush2.msra.mxu0 0.0
    %843 = vmatprep.subr.mxu0 0.0
    %844 = vmatpush2.msra.mxu0 0.0
    %845 = vmatprep.subr.mxu0 0.0
    %846 = vmatpush2.msra.mxu0 0.0
    %847 = vmatprep.subr.mxu0 0.0
    %848 = vmatpush2.msra.mxu0 0.0
    %849 = vmatprep.mubr.f32.mxu0 0.0
    %850 = vmatmul.mubr.f32.gmra.mxu0 %v783
    %v851 = vpop.f32.mrf.mxu0
    %v852 = vadd.f32 %v272, %v851
    %v853 = vpop.f32.mrf.mxu0
    %854 = vdwg.mxu0
    %v855 = vmax.f32 %v852, 0.0
    %v856 = vsel %vm244, %v855, 0.0
    %857 = vadd.xlane.f32.xlu0 %v856
    %v858 = vpop.xlane.xlu0 %857
    %v859 = vmul.f32 %v858, %v248
    %v860 = vsub.f32 %v855, %v859
    %v861 = vmul.f32 %v860, %v860
    %v862 = vsel %vm244, %v861, 0.0
    %863 = vadd.xlane.f32.xlu0 %v862
    %v864 = vpop.xlane.xlu0 %863
    %v865 = vmul.f32 %v864, %v248
    %v866 = vadd.f32 %v865, 1e-05
    %v867 = vrsqrt.pop %v866
    %v868 = vmul.f32 %v860, %v867
    %v869 = vmul.f32 %v868, %v364
    %v870 = vadd.f32 %v869, %v369
    %v872 = vsel %vm273, %v870, 0
    %874 = vmatprep.subr.mxu0 0.0
    %875 = vmatpush1.msra.mxu0 0.0
    %876 = vmatprep.subr.mxu0 0.0
    %877 = vmatpush1.msra.mxu0 0.0
    %878 = vmatprep.subr.mxu0 0.0
    %879 = vmatpush1.msra.mxu0 0.0
    %880 = vmatprep.subr.mxu0 0.0
    %881 = vmatpush1.msra.mxu0 0.0
    %882 = vmatprep.subr.mxu0 0.0
    %883 = vmatpush1.msra.mxu0 0.0
    %884 = vmatprep.subr.mxu0 0.0
    %885 = vmatpush1.msra.mxu0 0.0
    %886 = vmatprep.subr.mxu0 0.0
    %887 = vmatpush1.msra.mxu0 0.0
    %888 = vmatprep.subr.mxu0 0.0
    %889 = vmatpush1.msra.mxu0 0.0
    %890 = vmatprep.subr.mxu0 0.0
    %891 = vmatpush1.msra.mxu0 0.0
    %892 = vmatprep.subr.mxu0 0.0
    %893 = vmatpush1.msra.mxu0 0.0
    %894 = vmatprep.subr.mxu0 0.0
    %895 = vmatpush1.msra.mxu0 0.0
    %896 = vmatprep.subr.mxu0 0.0
    %897 = vmatpush1.msra.mxu0 0.0
    %898 = vmatprep.subr.mxu0 0.0
    %899 = vmatpush1.msra.mxu0 %v118
    %900 = vmatprep.subr.mxu0 0.0
    %901 = vmatpush1.msra.mxu0 %v117
    %902 = vmatprep.subr.mxu0 0.0
    %903 = vmatpush1.msra.mxu0 %v116
    %904 = vmatprep.subr.mxu0 0.0
    %905 = vmatpush1.msra.mxu0 %v115
    %906 = vmatprep.subr.mxu0 0.0
    %907 = vmatpush2.msra.mxu0 0.0
    %908 = vmatprep.subr.mxu0 0.0
    %909 = vmatpush2.msra.mxu0 0.0
    %910 = vmatprep.subr.mxu0 0.0
    %911 = vmatpush2.msra.mxu0 0.0
    %912 = vmatprep.subr.mxu0 0.0
    %913 = vmatpush2.msra.mxu0 0.0
    %914 = vmatprep.subr.mxu0 0.0
    %915 = vmatpush2.msra.mxu0 0.0
    %916 = vmatprep.subr.mxu0 0.0
    %917 = vmatpush2.msra.mxu0 0.0
    %918 = vmatprep.subr.mxu0 0.0
    %919 = vmatpush2.msra.mxu0 0.0
    %920 = vmatprep.subr.mxu0 0.0
    %921 = vmatpush2.msra.mxu0 0.0
    %922 = vmatprep.subr.mxu0 0.0
    %923 = vmatpush2.msra.mxu0 0.0
    %924 = vmatprep.subr.mxu0 0.0
    %925 = vmatpush2.msra.mxu0 0.0
    %926 = vmatprep.subr.mxu0 0.0
    %927 = vmatpush2.msra.mxu0 0.0
    %928 = vmatprep.subr.mxu0 0.0
    %929 = vmatpush2.msra.mxu0 0.0
    %930 = vmatprep.subr.mxu0 0.0
    %931 = vmatpush2.msra.mxu0 0.0
    %932 = vmatprep.subr.mxu0 0.0
    %933 = vmatpush2.msra.mxu0 0.0
    %934 = vmatprep.subr.mxu0 0.0
    %935 = vmatpush2.msra.mxu0 0.0
    %936 = vmatprep.subr.mxu0 0.0
    %937 = vmatpush2.msra.mxu0 0.0
    %938 = vmatprep.mubr.f32.mxu0 0.0
    %939 = vmatmul.mubr.f32.gmra.mxu0 %v872
    %v940 = vpop.f32.mrf.mxu0
    %v941 = vadd.f32 %v374, %v940
    %v942 = vpop.f32.mrf.mxu0
    %943 = vdwg.mxu0
    %v944 = vsel %vm273, %v556, 0
    %946 = vmatprep.subr.mxu0 0.0
    %947 = vmatpush1.msra.mxu0 0.0
    %948 = vmatprep.subr.mxu0 0.0
    %949 = vmatpush1.msra.mxu0 0.0
    %950 = vmatprep.subr.mxu0 0.0
    %951 = vmatpush1.msra.mxu0 0.0
    %952 = vmatprep.subr.mxu0 0.0
    %953 = vmatpush1.msra.mxu0 0.0
    %954 = vmatprep.subr.mxu0 0.0
    %955 = vmatpush1.msra.mxu0 0.0
    %956 = vmatprep.subr.mxu0 0.0
    %957 = vmatpush1.msra.mxu0 0.0
    %958 = vmatprep.subr.mxu0 0.0
    %959 = vmatpush1.msra.mxu0 0.0
    %960 = vmatprep.subr.mxu0 0.0
    %961 = vmatpush1.msra.mxu0 0.0
    %962 = vmatprep.subr.mxu0 0.0
    %963 = vmatpush1.msra.mxu0 0.0
    %964 = vmatprep.subr.mxu0 0.0
    %965 = vmatpush1.msra.mxu0 0.0
    %966 = vmatprep.subr.mxu0 0.0
    %967 = vmatpush1.msra.mxu0 0.0
    %968 = vmatprep.subr.mxu0 0.0
    %969 = vmatpush1.msra.mxu0 0.0
    %970 = vmatprep.subr.mxu0 0.0
    %971 = vmatpush1.msra.mxu0 %v122
    %972 = vmatprep.subr.mxu0 0.0
    %973 = vmatpush1.msra.mxu0 %v121
    %974 = vmatprep.subr.mxu0 0.0
    %975 = vmatpush1.msra.mxu0 %v120
    %976 = vmatprep.subr.mxu0 0.0
    %977 = vmatpush1.msra.mxu0 %v119
    %978 = vmatprep.subr.mxu0 0.0
    %979 = vmatpush2.msra.mxu0 0.0
    %980 = vmatprep.subr.mxu0 0.0
    %981 = vmatpush2.msra.mxu0 0.0
    %982 = vmatprep.subr.mxu0 0.0
    %983 = vmatpush2.msra.mxu0 0.0
    %984 = vmatprep.subr.mxu0 0.0
    %985 = vmatpush2.msra.mxu0 0.0
    %986 = vmatprep.subr.mxu0 0.0
    %987 = vmatpush2.msra.mxu0 0.0
    %988 = vmatprep.subr.mxu0 0.0
    %989 = vmatpush2.msra.mxu0 0.0
    %990 = vmatprep.subr.mxu0 0.0
    %991 = vmatpush2.msra.mxu0 0.0
    %992 = vmatprep.subr.mxu0 0.0
    %993 = vmatpush2.msra.mxu0 0.0
    %994 = vmatprep.subr.mxu0 0.0
    %995 = vmatpush2.msra.mxu0 0.0
    %996 = vmatprep.subr.mxu0 0.0
    %997 = vmatpush2.msra.mxu0 0.0
    %998 = vmatprep.subr.mxu0 0.0
    %999 = vmatpush2.msra.mxu0 0.0
    %1000 = vmatprep.subr.mxu0 0.0
    %1001 = vmatpush2.msra.mxu0 0.0
    %1002 = vmatprep.subr.mxu0 0.0
    %1003 = vmatpush2.msra.mxu0 0.0
    %1004 = vmatprep.subr.mxu0 0.0
    %1005 = vmatpush2.msra.mxu0 0.0
    %1006 = vmatprep.subr.mxu0 0.0
    %1007 = vmatpush2.msra.mxu0 0.0
    %1008 = vmatprep.subr.mxu0 0.0
    %1009 = vmatpush2.msra.mxu0 0.0
    %1010 = vmatprep.mubr.f32.mxu0 0.0
    %1011 = vmatmul.mubr.f32.gmra.mxu0 %v944
    %v1012 = vpop.f32.mrf.mxu0
    %v1013 = vadd.f32 %v451, %v1012
    %v1014 = vpop.f32.mrf.mxu0
    %1015 = vdwg.mxu0
    %v1016 = vadd.f32 %v941, %v1013
    %v1017 = vxor.u32 %v1016, 2147483648
    %v1018 = vmul.f32 %v1017, 1.442695
    %v1019 = vpow.pop %v1018
    %v1020 = vadd.f32 %v1019, 1.0
    %v1021 = vrcp.pop %v1020
    %v1022 = vmul.f32 1.0, %v1021
    %1024 = vrot.lane.b32.xlu0 %v1013, 64
    %v1025 = vpop.permute.xlu0 %1024
    %v1027 = vmul.f32 %v1022, %v1025
    %1029 = vrot.lane.b32.xlu0 %v1027, 64
    %v1030 = vpop.permute.xlu0 %1029
    %v1032 = vadd.f32 %v941, %v1030
    %v1033 = vtanh.pop %v1032
    %v1034 = vsub.f32 1.0, %v1022
    %1036 = vrot.lane.b32.xlu0 %v1033, 96
    %v1037 = vpop.permute.xlu0 %1036
    %v1039 = vmul.f32 %v1034, %v1037
    %v1040 = vmul.f32 %v1022, %v553
    %v1041 = vadd.f32 %v1039, %v1040
    %1043 = vrot.lane.b32.xlu0 %v1041, 96
    %v1044 = vpop.permute.xlu0 %1043
    %v1046 = vsel %vm244, %v1044, 0.0
    %1047 = vadd.xlane.f32.xlu0 %v1046
    %v1048 = vpop.xlane.xlu0 %1047
    %v1049 = vmul.f32 %v1048, %v248
    %v1050 = vsub.f32 %v1041, %v1049
    %v1051 = vmul.f32 %v1050, %v1050
    %1053 = vrot.lane.b32.xlu0 %v1051, 96
    %v1054 = vpop.permute.xlu0 %1053
    %v1056 = vsel %vm244, %v1054, 0.0
    %1057 = vadd.xlane.f32.xlu0 %v1056
    %v1058 = vpop.xlane.xlu0 %1057
    %v1059 = vmul.f32 %v1058, %v248
    %v1060 = vadd.f32 %v1059, 1e-05
    %v1061 = vrsqrt.pop %v1060
    %v1062 = vmul.f32 %v1050, %v1061
    %v1063 = vmul.f32 %v1062, %v581
    %v1064 = vadd.f32 %v1063, %v590
    %1066 = vrot.lane.b32.xlu0 %v1064, 96
    %v1067 = vpop.permute.xlu0 %1066
    %v1068 = vsel %vm273, %v1067, 0
    %1070 = vmatprep.subr.mxu0 0.0
    %1071 = vmatpush1.msra.mxu0 0.0
    %1072 = vmatprep.subr.mxu0 0.0
    %1073 = vmatpush1.msra.mxu0 0.0
    %1074 = vmatprep.subr.mxu0 0.0
    %1075 = vmatpush1.msra.mxu0 0.0
    %1076 = vmatprep.subr.mxu0 0.0
    %1077 = vmatpush1.msra.mxu0 0.0
    %1078 = vmatprep.subr.mxu0 0.0
    %1079 = vmatpush1.msra.mxu0 0.0
    %1080 = vmatprep.subr.mxu0 0.0
    %1081 = vmatpush1.msra.mxu0 0.0
    %1082 = vmatprep.subr.mxu0 0.0
    %1083 = vmatpush1.msra.mxu0 0.0
    %1084 = vmatprep.subr.mxu0 0.0
    %1085 = vmatpush1.msra.mxu0 0.0
    %1086 = vmatprep.subr.mxu0 0.0
    %1087 = vmatpush1.msra.mxu0 0.0
    %1088 = vmatprep.subr.mxu0 0.0
    %1089 = vmatpush1.msra.mxu0 0.0
    %1090 = vmatprep.subr.mxu0 0.0
    %1091 = vmatpush1.msra.mxu0 0.0
    %1092 = vmatprep.subr.mxu0 0.0
    %1093 = vmatpush1.msra.mxu0 0.0
    %1094 = vmatprep.subr.mxu0 0.0
    %1095 = vmatpush1.msra.mxu0 %v128
    %1096 = vmatprep.subr.mxu0 0.0
    %1097 = vmatpush1.msra.mxu0 %v127
    %1098 = vmatprep.subr.mxu0 0.0
    %1099 = vmatpush1.msra.mxu0 %v126
    %1100 = vmatprep.subr.mxu0 0.0
    %1101 = vmatpush1.msra.mxu0 %v125
    %1102 = vmatprep.subr.mxu0 0.0
    %1103 = vmatpush2.msra.mxu0 0.0
    %1104 = vmatprep.subr.mxu0 0.0
    %1105 = vmatpush2.msra.mxu0 0.0
    %1106 = vmatprep.subr.mxu0 0.0
    %1107 = vmatpush2.msra.mxu0 0.0
    %1108 = vmatprep.subr.mxu0 0.0
    %1109 = vmatpush2.msra.mxu0 0.0
    %1110 = vmatprep.subr.mxu0 0.0
    %1111 = vmatpush2.msra.mxu0 0.0
    %1112 = vmatprep.subr.mxu0 0.0
    %1113 = vmatpush2.msra.mxu0 0.0
    %1114 = vmatprep.subr.mxu0 0.0
    %1115 = vmatpush2.msra.mxu0 0.0
    %1116 = vmatprep.subr.mxu0 0.0
    %1117 = vmatpush2.msra.mxu0 0.0
    %1118 = vmatprep.subr.mxu0 0.0
    %1119 = vmatpush2.msra.mxu0 0.0
    %1120 = vmatprep.subr.mxu0 0.0
    %1121 = vmatpush2.msra.mxu0 0.0
    %1122 = vmatprep.subr.mxu0 0.0
    %1123 = vmatpush2.msra.mxu0 0.0
    %1124 = vmatprep.subr.mxu0 0.0
    %1125 = vmatpush2.msra.mxu0 0.0
    %1126 = vmatprep.subr.mxu0 0.0
    %1127 = vmatpush2.msra.mxu0 0.0
    %1128 = vmatprep.subr.mxu0 0.0
    %1129 = vmatpush2.msra.mxu0 0.0
    %1130 = vmatprep.subr.mxu0 0.0
    %1131 = vmatpush2.msra.mxu0 0.0
    %1132 = vmatprep.subr.mxu0 0.0
    %1133 = vmatpush2.msra.mxu0 0.0
    %1134 = vmatprep.mubr.f32.mxu0 0.0
    %1135 = vmatmul.mubr.f32.gmra.mxu0 %v1068
    %v1136 = vpop.f32.mrf.mxu0
    %v1137 = vadd.f32 %v597, %v1136
    %v1138 = vpop.f32.mrf.mxu0
    %1139 = vdwg.mxu0
    %s1140 = scalar_lea.vmem %s11, 4
    %1141 = vst.msk [vmem:[%s1140] sm:$0xf] %vm674, %v1137
    %s1142 = scalar_lea.vmem %s0, 8
    %v1143 = vld [vmem:[%s1142] sm:$0xf]
    %v1144 = vsel %vm140, %v1143, 0.0
    %1145 = vadd.xlane.f32.xlu0 %v1144
    %v1146 = vpop.xlane.xlu0 %1145
    %v1147 = vmul.f32 %v1146, %v144
    %v1148 = vsub.f32 %v1143, %v1147
    %v1149 = vmul.f32 %v1148, %v1148
    %v1150 = vsel %vm140, %v1149, 0.0
    %1151 = vadd.xlane.f32.xlu0 %v1150
    %v1152 = vpop.xlane.xlu0 %1151
    %v1153 = vmul.f32 %v1152, %v144
    %v1154 = vadd.f32 %v1153, 1e-05
    %v1155 = vrsqrt.pop %v1154
    %v1156 = vmul.f32 %v1148, %v1155
    %v1157 = vmul.f32 %v1156, %v158
    %v1158 = vadd.f32 %v1157, %v163
    %v1160 = vsel %vm169, %v1158, 0
    %1162 = vmatprep.subr.mxu0 0.0
    %1163 = vmatpush1.msra.mxu0 0.0
    %1164 = vmatprep.subr.mxu0 0.0
    %1165 = vmatpush1.msra.mxu0 0.0
    %1166 = vmatprep.subr.mxu0 0.0
    %1167 = vmatpush1.msra.mxu0 0.0
    %1168 = vmatprep.subr.mxu0 0.0
    %1169 = vmatpush1.msra.mxu0 0.0
    %1170 = vmatprep.subr.mxu0 0.0
    %1171 = vmatpush1.msra.mxu0 0.0
    %1172 = vmatprep.subr.mxu0 0.0
    %1173 = vmatpush1.msra.mxu0 0.0
    %1174 = vmatprep.subr.mxu0 0.0
    %1175 = vmatpush1.msra.mxu0 0.0
    %1176 = vmatprep.subr.mxu0 0.0
    %1177 = vmatpush1.msra.mxu0 0.0
    %1178 = vmatprep.subr.mxu0 0.0
    %1179 = vmatpush1.msra.mxu0 0.0
    %1180 = vmatprep.subr.mxu0 0.0
    %1181 = vmatpush1.msra.mxu0 0.0
    %1182 = vmatprep.subr.mxu0 0.0
    %1183 = vmatpush1.msra.mxu0 0.0
    %1184 = vmatprep.subr.mxu0 0.0
    %1185 = vmatpush1.msra.mxu0 0.0
    %1186 = vmatprep.subr.mxu0 0.0
    %1187 = vmatpush1.msra.mxu0 0.0
    %1188 = vmatprep.subr.mxu0 0.0
    %1189 = vmatpush1.msra.mxu0 0.0
    %1190 = vmatprep.subr.mxu0 0.0
    %1191 = vmatpush1.msra.mxu0 %v110
    %1192 = vmatprep.subr.mxu0 0.0
    %1193 = vmatpush1.msra.mxu0 %v109
    %1194 = vmatprep.subr.mxu0 0.0
    %1195 = vmatpush2.msra.mxu0 0.0
    %1196 = vmatprep.subr.mxu0 0.0
    %1197 = vmatpush2.msra.mxu0 0.0
    %1198 = vmatprep.subr.mxu0 0.0
    %1199 = vmatpush2.msra.mxu0 0.0
    %1200 = vmatprep.subr.mxu0 0.0
    %1201 = vmatpush2.msra.mxu0 0.0
    %1202 = vmatprep.subr.mxu0 0.0
    %1203 = vmatpush2.msra.mxu0 0.0
    %1204 = vmatprep.subr.mxu0 0.0
    %1205 = vmatpush2.msra.mxu0 0.0
    %1206 = vmatprep.subr.mxu0 0.0
    %1207 = vmatpush2.msra.mxu0 0.0
    %1208 = vmatprep.subr.mxu0 0.0
    %1209 = vmatpush2.msra.mxu0 0.0
    %1210 = vmatprep.subr.mxu0 0.0
    %1211 = vmatpush2.msra.mxu0 0.0
    %1212 = vmatprep.subr.mxu0 0.0
    %1213 = vmatpush2.msra.mxu0 0.0
    %1214 = vmatprep.subr.mxu0 0.0
    %1215 = vmatpush2.msra.mxu0 0.0
    %1216 = vmatprep.subr.mxu0 0.0
    %1217 = vmatpush2.msra.mxu0 0.0
    %1218 = vmatprep.subr.mxu0 0.0
    %1219 = vmatpush2.msra.mxu0 0.0
    %1220 = vmatprep.subr.mxu0 0.0
    %1221 = vmatpush2.msra.mxu0 0.0
    %1222 = vmatprep.subr.mxu0 0.0
    %1223 = vmatpush2.msra.mxu0 0.0
    %1224 = vmatprep.subr.mxu0 0.0
    %1225 = vmatpush2.msra.mxu0 0.0
    %1226 = vmatprep.mubr.f32.mxu0 0.0
    %1227 = vmatmul.mubr.f32.gmra.mxu0 %v1160
    %v1228 = vpop.f32.mrf.mxu0
    %v1229 = vadd.f32 %v168, %v1228
    %v1230 = vpop.f32.mrf.mxu0
    %1231 = vdwg.mxu0
    %v1232 = vmax.f32 %v1229, 0.0
    %v1233 = vsel %vm244, %v1232, 0.0
    %1234 = vadd.xlane.f32.xlu0 %v1233
    %v1235 = vpop.xlane.xlu0 %1234
    %v1236 = vmul.f32 %v1235, %v248
    %v1237 = vsub.f32 %v1232, %v1236
    %v1238 = vmul.f32 %v1237, %v1237
    %v1239 = vsel %vm244, %v1238, 0.0
    %1240 = vadd.xlane.f32.xlu0 %v1239
    %v1241 = vpop.xlane.xlu0 %1240
    %v1242 = vmul.f32 %v1241, %v248
    %v1243 = vadd.f32 %v1242, 1e-05
    %v1244 = vrsqrt.pop %v1243
    %v1245 = vmul.f32 %v1237, %v1244
    %v1246 = vmul.f32 %v1245, %v262
    %v1247 = vadd.f32 %v1246, %v267
    %v1249 = vsel %vm273, %v1247, 0
    %1251 = vmatprep.subr.mxu0 0.0
    %1252 = vmatpush1.msra.mxu0 0.0
    %1253 = vmatprep.subr.mxu0 0.0
    %1254 = vmatpush1.msra.mxu0 0.0
    %1255 = vmatprep.subr.mxu0 0.0
    %1256 = vmatpush1.msra.mxu0 0.0
    %1257 = vmatprep.subr.mxu0 0.0
    %1258 = vmatpush1.msra.mxu0 0.0
    %1259 = vmatprep.subr.mxu0 0.0
    %1260 = vmatpush1.msra.mxu0 0.0
    %1261 = vmatprep.subr.mxu0 0.0
    %1262 = vmatpush1.msra.mxu0 0.0
    %1263 = vmatprep.subr.mxu0 0.0
    %1264 = vmatpush1.msra.mxu0 0.0
    %1265 = vmatprep.subr.mxu0 0.0
    %1266 = vmatpush1.msra.mxu0 0.0
    %1267 = vmatprep.subr.mxu0 0.0
    %1268 = vmatpush1.msra.mxu0 0.0
    %1269 = vmatprep.subr.mxu0 0.0
    %1270 = vmatpush1.msra.mxu0 0.0
    %1271 = vmatprep.subr.mxu0 0.0
    %1272 = vmatpush1.msra.mxu0 0.0
    %1273 = vmatprep.subr.mxu0 0.0
    %1274 = vmatpush1.msra.mxu0 0.0
    %1275 = vmatprep.subr.mxu0 0.0
    %1276 = vmatpush1.msra.mxu0 %v114
    %1277 = vmatprep.subr.mxu0 0.0
    %1278 = vmatpush1.msra.mxu0 %v113
    %1279 = vmatprep.subr.mxu0 0.0
    %1280 = vmatpush1.msra.mxu0 %v112
    %1281 = vmatprep.subr.mxu0 0.0
    %1282 = vmatpush1.msra.mxu0 %v111
    %1283 = vmatprep.subr.mxu0 0.0
    %1284 = vmatpush2.msra.mxu0 0.0
    %1285 = vmatprep.subr.mxu0 0.0
    %1286 = vmatpush2.msra.mxu0 0.0
    %1287 = vmatprep.subr.mxu0 0.0
    %1288 = vmatpush2.msra.mxu0 0.0
    %1289 = vmatprep.subr.mxu0 0.0
    %1290 = vmatpush2.msra.mxu0 0.0
    %1291 = vmatprep.subr.mxu0 0.0
    %1292 = vmatpush2.msra.mxu0 0.0
    %1293 = vmatprep.subr.mxu0 0.0
    %1294 = vmatpush2.msra.mxu0 0.0
    %1295 = vmatprep.subr.mxu0 0.0
    %1296 = vmatpush2.msra.mxu0 0.0
    %1297 = vmatprep.subr.mxu0 0.0
    %1298 = vmatpush2.msra.mxu0 0.0
    %1299 = vmatprep.subr.mxu0 0.0
    %1300 = vmatpush2.msra.mxu0 0.0
    %1301 = vmatprep.subr.mxu0 0.0
    %1302 = vmatpush2.msra.mxu0 0.0
    %1303 = vmatprep.subr.mxu0 0.0
    %1304 = vmatpush2.msra.mxu0 0.0
    %1305 = vmatprep.subr.mxu0 0.0
    %1306 = vmatpush2.msra.mxu0 0.0
    %1307 = vmatprep.subr.mxu0 0.0
    %1308 = vmatpush2.msra.mxu0 0.0
    %1309 = vmatprep.subr.mxu0 0.0
    %1310 = vmatpush2.msra.mxu0 0.0
    %1311 = vmatprep.subr.mxu0 0.0
    %1312 = vmatpush2.msra.mxu0 0.0
    %1313 = vmatprep.subr.mxu0 0.0
    %1314 = vmatpush2.msra.mxu0 0.0
    %1315 = vmatprep.mubr.f32.mxu0 0.0
    %1316 = vmatmul.mubr.f32.gmra.mxu0 %v1249
    %v1317 = vpop.f32.mrf.mxu0
    %v1318 = vadd.f32 %v272, %v1317
    %v1319 = vpop.f32.mrf.mxu0
    %1320 = vdwg.mxu0
    %v1321 = vmax.f32 %v1318, 0.0
    %v1322 = vsel %vm244, %v1321, 0.0
    %1323 = vadd.xlane.f32.xlu0 %v1322
    %v1324 = vpop.xlane.xlu0 %1323
    %v1325 = vmul.f32 %v1324, %v248
    %v1326 = vsub.f32 %v1321, %v1325
    %v1327 = vmul.f32 %v1326, %v1326
    %v1328 = vsel %vm244, %v1327, 0.0
    %1329 = vadd.xlane.f32.xlu0 %v1328
    %v1330 = vpop.xlane.xlu0 %1329
    %v1331 = vmul.f32 %v1330, %v248
    %v1332 = vadd.f32 %v1331, 1e-05
    %v1333 = vrsqrt.pop %v1332
    %v1334 = vmul.f32 %v1326, %v1333
    %v1335 = vmul.f32 %v1334, %v364
    %v1336 = vadd.f32 %v1335, %v369
    %v1338 = vsel %vm273, %v1336, 0
    %1340 = vmatprep.subr.mxu0 0.0
    %1341 = vmatpush1.msra.mxu0 0.0
    %1342 = vmatprep.subr.mxu0 0.0
    %1343 = vmatpush1.msra.mxu0 0.0
    %1344 = vmatprep.subr.mxu0 0.0
    %1345 = vmatpush1.msra.mxu0 0.0
    %1346 = vmatprep.subr.mxu0 0.0
    %1347 = vmatpush1.msra.mxu0 0.0
    %1348 = vmatprep.subr.mxu0 0.0
    %1349 = vmatpush1.msra.mxu0 0.0
    %1350 = vmatprep.subr.mxu0 0.0
    %1351 = vmatpush1.msra.mxu0 0.0
    %1352 = vmatprep.subr.mxu0 0.0
    %1353 = vmatpush1.msra.mxu0 0.0
    %1354 = vmatprep.subr.mxu0 0.0
    %1355 = vmatpush1.msra.mxu0 0.0
    %1356 = vmatprep.subr.mxu0 0.0
    %1357 = vmatpush1.msra.mxu0 0.0
    %1358 = vmatprep.subr.mxu0 0.0
    %1359 = vmatpush1.msra.mxu0 0.0
    %1360 = vmatprep.subr.mxu0 0.0
    %1361 = vmatpush1.msra.mxu0 0.0
    %1362 = vmatprep.subr.mxu0 0.0
    %1363 = vmatpush1.msra.mxu0 0.0
    %1364 = vmatprep.subr.mxu0 0.0
    %1365 = vmatpush1.msra.mxu0 %v118
    %1366 = vmatprep.subr.mxu0 0.0
    %1367 = vmatpush1.msra.mxu0 %v117
    %1368 = vmatprep.subr.mxu0 0.0
    %1369 = vmatpush1.msra.mxu0 %v116
    %1370 = vmatprep.subr.mxu0 0.0
    %1371 = vmatpush1.msra.mxu0 %v115
    %1372 = vmatprep.subr.mxu0 0.0
    %1373 = vmatpush2.msra.mxu0 0.0
    %1374 = vmatprep.subr.mxu0 0.0
    %1375 = vmatpush2.msra.mxu0 0.0
    %1376 = vmatprep.subr.mxu0 0.0
    %1377 = vmatpush2.msra.mxu0 0.0
    %1378 = vmatprep.subr.mxu0 0.0
    %1379 = vmatpush2.msra.mxu0 0.0
    %1380 = vmatprep.subr.mxu0 0.0
    %1381 = vmatpush2.msra.mxu0 0.0
    %1382 = vmatprep.subr.mxu0 0.0
    %1383 = vmatpush2.msra.mxu0 0.0
    %1384 = vmatprep.subr.mxu0 0.0
    %1385 = vmatpush2.msra.mxu0 0.0
    %1386 = vmatprep.subr.mxu0 0.0
    %1387 = vmatpush2.msra.mxu0 0.0
    %1388 = vmatprep.subr.mxu0 0.0
    %1389 = vmatpush2.msra.mxu0 0.0
    %1390 = vmatprep.subr.mxu0 0.0
    %1391 = vmatpush2.msra.mxu0 0.0
    %1392 = vmatprep.subr.mxu0 0.0
    %1393 = vmatpush2.msra.mxu0 0.0
    %1394 = vmatprep.subr.mxu0 0.0
    %1395 = vmatpush2.msra.mxu0 0.0
    %1396 = vmatprep.subr.mxu0 0.0
    %1397 = vmatpush2.msra.mxu0 0.0
    %1398 = vmatprep.subr.mxu0 0.0
    %1399 = vmatpush2.msra.mxu0 0.0
    %1400 = vmatprep.subr.mxu0 0.0
    %1401 = vmatpush2.msra.mxu0 0.0
    %1402 = vmatprep.subr.mxu0 0.0
    %1403 = vmatpush2.msra.mxu0 0.0
    %1404 = vmatprep.mubr.f32.mxu0 0.0
    %1405 = vmatmul.mubr.f32.gmra.mxu0 %v1338
    %v1406 = vpop.f32.mrf.mxu0
    %v1407 = vadd.f32 %v374, %v1406
    %v1408 = vpop.f32.mrf.mxu0
    %1409 = vdwg.mxu0
    %v1410 = vsel %vm273, %v1044, 0
    %1412 = vmatprep.subr.mxu0 0.0
    %1413 = vmatpush1.msra.mxu0 0.0
    %1414 = vmatprep.subr.mxu0 0.0
    %1415 = vmatpush1.msra.mxu0 0.0
    %1416 = vmatprep.subr.mxu0 0.0
    %1417 = vmatpush1.msra.mxu0 0.0
    %1418 = vmatprep.subr.mxu0 0.0
    %1419 = vmatpush1.msra.mxu0 0.0
    %1420 = vmatprep.subr.mxu0 0.0
    %1421 = vmatpush1.msra.mxu0 0.0
    %1422 = vmatprep.subr.mxu0 0.0
    %1423 = vmatpush1.msra.mxu0 0.0
    %1424 = vmatprep.subr.mxu0 0.0
    %1425 = vmatpush1.msra.mxu0 0.0
    %1426 = vmatprep.subr.mxu0 0.0
    %1427 = vmatpush1.msra.mxu0 0.0
    %1428 = vmatprep.subr.mxu0 0.0
    %1429 = vmatpush1.msra.mxu0 0.0
    %1430 = vmatprep.subr.mxu0 0.0
    %1431 = vmatpush1.msra.mxu0 0.0
    %1432 = vmatprep.subr.mxu0 0.0
    %1433 = vmatpush1.msra.mxu0 0.0
    %1434 = vmatprep.subr.mxu0 0.0
    %1435 = vmatpush1.msra.mxu0 0.0
    %1436 = vmatprep.subr.mxu0 0.0
    %1437 = vmatpush1.msra.mxu0 %v122
    %1438 = vmatprep.subr.mxu0 0.0
    %1439 = vmatpush1.msra.mxu0 %v121
    %1440 = vmatprep.subr.mxu0 0.0
    %1441 = vmatpush1.msra.mxu0 %v120
    %1442 = vmatprep.subr.mxu0 0.0
    %1443 = vmatpush1.msra.mxu0 %v119
    %1444 = vmatprep.subr.mxu0 0.0
    %1445 = vmatpush2.msra.mxu0 0.0
    %1446 = vmatprep.subr.mxu0 0.0
    %1447 = vmatpush2.msra.mxu0 0.0
    %1448 = vmatprep.subr.mxu0 0.0
    %1449 = vmatpush2.msra.mxu0 0.0
    %1450 = vmatprep.subr.mxu0 0.0
    %1451 = vmatpush2.msra.mxu0 0.0
    %1452 = vmatprep.subr.mxu0 0.0
    %1453 = vmatpush2.msra.mxu0 0.0
    %1454 = vmatprep.subr.mxu0 0.0
    %1455 = vmatpush2.msra.mxu0 0.0
    %1456 = vmatprep.subr.mxu0 0.0
    %1457 = vmatpush2.msra.mxu0 0.0
    %1458 = vmatprep.subr.mxu0 0.0
    %1459 = vmatpush2.msra.mxu0 0.0
    %1460 = vmatprep.subr.mxu0 0.0
    %1461 = vmatpush2.msra.mxu0 0.0
    %1462 = vmatprep.subr.mxu0 0.0
    %1463 = vmatpush2.msra.mxu0 0.0
    %1464 = vmatprep.subr.mxu0 0.0
    %1465 = vmatpush2.msra.mxu0 0.0
    %1466 = vmatprep.subr.mxu0 0.0
    %1467 = vmatpush2.msra.mxu0 0.0
    %1468 = vmatprep.subr.mxu0 0.0
    %1469 = vmatpush2.msra.mxu0 0.0
    %1470 = vmatprep.subr.mxu0 0.0
    %1471 = vmatpush2.msra.mxu0 0.0
    %1472 = vmatprep.subr.mxu0 0.0
    %1473 = vmatpush2.msra.mxu0 0.0
    %1474 = vmatprep.subr.mxu0 0.0
    %1475 = vmatpush2.msra.mxu0 0.0
    %1476 = vmatprep.mubr.f32.mxu0 0.0
    %1477 = vmatmul.mubr.f32.gmra.mxu0 %v1410
    %v1478 = vpop.f32.mrf.mxu0
    %v1479 = vadd.f32 %v451, %v1478
    %v1480 = vpop.f32.mrf.mxu0
    %1481 = vdwg.mxu0
    %v1482 = vadd.f32 %v1407, %v1479
    %v1483 = vxor.u32 %v1482, 2147483648
    %v1484 = vmul.f32 %v1483, 1.442695
    %v1485 = vpow.pop %v1484
    %v1486 = vadd.f32 %v1485, 1.0
    %v1487 = vrcp.pop %v1486
    %v1488 = vmul.f32 1.0, %v1487
    %1490 = vrot.lane.b32.xlu0 %v1479, 64
    %v1491 = vpop.permute.xlu0 %1490
    %v1493 = vmul.f32 %v1488, %v1491
    %1495 = vrot.lane.b32.xlu0 %v1493, 64
    %v1496 = vpop.permute.xlu0 %1495
    %v1498 = vadd.f32 %v1407, %v1496
    %v1499 = vtanh.pop %v1498
    %v1500 = vsub.f32 1.0, %v1488
    %1502 = vrot.lane.b32.xlu0 %v1499, 96
    %v1503 = vpop.permute.xlu0 %1502
    %v1505 = vmul.f32 %v1500, %v1503
    %v1506 = vmul.f32 %v1488, %v1041
    %v1507 = vadd.f32 %v1505, %v1506
    %1509 = vrot.lane.b32.xlu0 %v1507, 96
    %v1510 = vpop.permute.xlu0 %1509
    %v1512 = vsel %vm244, %v1510, 0.0
    %1513 = vadd.xlane.f32.xlu0 %v1512
    %v1514 = vpop.xlane.xlu0 %1513
    %v1515 = vmul.f32 %v1514, %v248
    %v1516 = vsub.f32 %v1507, %v1515
    %v1517 = vmul.f32 %v1516, %v1516
    %1519 = vrot.lane.b32.xlu0 %v1517, 96
    %v1520 = vpop.permute.xlu0 %1519
    %v1522 = vsel %vm244, %v1520, 0.0
    %1523 = vadd.xlane.f32.xlu0 %v1522
    %v1524 = vpop.xlane.xlu0 %1523
    %v1525 = vmul.f32 %v1524, %v248
    %v1526 = vadd.f32 %v1525, 1e-05
    %v1527 = vrsqrt.pop %v1526
    %v1528 = vmul.f32 %v1516, %v1527
    %v1529 = vmul.f32 %v1528, %v581
    %v1530 = vadd.f32 %v1529, %v590
    %1532 = vrot.lane.b32.xlu0 %v1530, 96
    %v1533 = vpop.permute.xlu0 %1532
    %v1534 = vsel %vm273, %v1533, 0
    %1536 = vmatprep.subr.mxu0 0.0
    %1537 = vmatpush1.msra.mxu0 0.0
    %1538 = vmatprep.subr.mxu0 0.0
    %1539 = vmatpush1.msra.mxu0 0.0
    %1540 = vmatprep.subr.mxu0 0.0
    %1541 = vmatpush1.msra.mxu0 0.0
    %1542 = vmatprep.subr.mxu0 0.0
    %1543 = vmatpush1.msra.mxu0 0.0
    %1544 = vmatprep.subr.mxu0 0.0
    %1545 = vmatpush1.msra.mxu0 0.0
    %1546 = vmatprep.subr.mxu0 0.0
    %1547 = vmatpush1.msra.mxu0 0.0
    %1548 = vmatprep.subr.mxu0 0.0
    %1549 = vmatpush1.msra.mxu0 0.0
    %1550 = vmatprep.subr.mxu0 0.0
    %1551 = vmatpush1.msra.mxu0 0.0
    %1552 = vmatprep.subr.mxu0 0.0
    %1553 = vmatpush1.msra.mxu0 0.0
    %1554 = vmatprep.subr.mxu0 0.0
    %1555 = vmatpush1.msra.mxu0 0.0
    %1556 = vmatprep.subr.mxu0 0.0
    %1557 = vmatpush1.msra.mxu0 0.0
    %1558 = vmatprep.subr.mxu0 0.0
    %1559 = vmatpush1.msra.mxu0 0.0
    %1560 = vmatprep.subr.mxu0 0.0
    %1561 = vmatpush1.msra.mxu0 %v128
    %1562 = vmatprep.subr.mxu0 0.0
    %1563 = vmatpush1.msra.mxu0 %v127
    %1564 = vmatprep.subr.mxu0 0.0
    %1565 = vmatpush1.msra.mxu0 %v126
    %1566 = vmatprep.subr.mxu0 0.0
    %1567 = vmatpush1.msra.mxu0 %v125
    %1568 = vmatprep.subr.mxu0 0.0
    %1569 = vmatpush2.msra.mxu0 0.0
    %1570 = vmatprep.subr.mxu0 0.0
    %1571 = vmatpush2.msra.mxu0 0.0
    %1572 = vmatprep.subr.mxu0 0.0
    %1573 = vmatpush2.msra.mxu0 0.0
    %1574 = vmatprep.subr.mxu0 0.0
    %1575 = vmatpush2.msra.mxu0 0.0
    %1576 = vmatprep.subr.mxu0 0.0
    %1577 = vmatpush2.msra.mxu0 0.0
    %1578 = vmatprep.subr.mxu0 0.0
    %1579 = vmatpush2.msra.mxu0 0.0
    %1580 = vmatprep.subr.mxu0 0.0
    %1581 = vmatpush2.msra.mxu0 0.0
    %1582 = vmatprep.subr.mxu0 0.0
    %1583 = vmatpush2.msra.mxu0 0.0
    %1584 = vmatprep.subr.mxu0 0.0
    %1585 = vmatpush2.msra.mxu0 0.0
    %1586 = vmatprep.subr.mxu0 0.0
    %1587 = vmatpush2.msra.mxu0 0.0
    %1588 = vmatprep.subr.mxu0 0.0
    %1589 = vmatpush2.msra.mxu0 0.0
    %1590 = vmatprep.subr.mxu0 0.0
    %1591 = vmatpush2.msra.mxu0 0.0
    %1592 = vmatprep.subr.mxu0 0.0
    %1593 = vmatpush2.msra.mxu0 0.0
    %1594 = vmatprep.subr.mxu0 0.0
    %1595 = vmatpush2.msra.mxu0 0.0
    %1596 = vmatprep.subr.mxu0 0.0
    %1597 = vmatpush2.msra.mxu0 0.0
    %1598 = vmatprep.subr.mxu0 0.0
    %1599 = vmatpush2.msra.mxu0 0.0
    %1600 = vmatprep.mubr.f32.mxu0 0.0
    %1601 = vmatmul.mubr.f32.gmra.mxu0 %v1534
    %v1602 = vpop.f32.mrf.mxu0
    %v1603 = vadd.f32 %v597, %v1602
    %v1604 = vpop.f32.mrf.mxu0
    %1605 = vdwg.mxu0
    %s1606 = scalar_lea.vmem %s11, 8
    %1607 = vst.msk [vmem:[%s1606] sm:$0xf] %vm674, %v1603
    %s1608 = scalar_lea.vmem %s0, 12
    %v1609 = vld [vmem:[%s1608] sm:$0xf]
    %v1610 = vsel %vm140, %v1609, 0.0
    %1611 = vadd.xlane.f32.xlu0 %v1610
    %v1612 = vpop.xlane.xlu0 %1611
    %v1613 = vmul.f32 %v1612, %v144
    %v1614 = vsub.f32 %v1609, %v1613
    %v1615 = vmul.f32 %v1614, %v1614
    %v1616 = vsel %vm140, %v1615, 0.0
    %1617 = vadd.xlane.f32.xlu0 %v1616
    %v1618 = vpop.xlane.xlu0 %1617
    %v1619 = vmul.f32 %v1618, %v144
    %v1620 = vadd.f32 %v1619, 1e-05
    %v1621 = vrsqrt.pop %v1620
    %v1622 = vmul.f32 %v1614, %v1621
    %v1623 = vmul.f32 %v1622, %v158
    %v1624 = vadd.f32 %v1623, %v163
    %v1626 = vsel %vm169, %v1624, 0
    %1628 = vmatprep.subr.mxu0 0.0
    %1629 = vmatpush1.msra.mxu0 0.0
    %1630 = vmatprep.subr.mxu0 0.0
    %1631 = vmatpush1.msra.mxu0 0.0
    %1632 = vmatprep.subr.mxu0 0.0
    %1633 = vmatpush1.msra.mxu0 0.0
    %1634 = vmatprep.subr.mxu0 0.0
    %1635 = vmatpush1.msra.mxu0 0.0
    %1636 = vmatprep.subr.mxu0 0.0
    %1637 = vmatpush1.msra.mxu0 0.0
    %1638 = vmatprep.subr.mxu0 0.0
    %1639 = vmatpush1.msra.mxu0 0.0
    %1640 = vmatprep.subr.mxu0 0.0
    %1641 = vmatpush1.msra.mxu0 0.0
    %1642 = vmatprep.subr.mxu0 0.0
    %1643 = vmatpush1.msra.mxu0 0.0
    %1644 = vmatprep.subr.mxu0 0.0
    %1645 = vmatpush1.msra.mxu0 0.0
    %1646 = vmatprep.subr.mxu0 0.0
    %1647 = vmatpush1.msra.mxu0 0.0
    %1648 = vmatprep.subr.mxu0 0.0
    %1649 = vmatpush1.msra.mxu0 0.0
    %1650 = vmatprep.subr.mxu0 0.0
    %1651 = vmatpush1.msra.mxu0 0.0
    %1652 = vmatprep.subr.mxu0 0.0
    %1653 = vmatpush1.msra.mxu0 0.0
    %1654 = vmatprep.subr.mxu0 0.0
    %1655 = vmatpush1.msra.mxu0 0.0
    %1656 = vmatprep.subr.mxu0 0.0
    %1657 = vmatpush1.msra.mxu0 %v110
    %1658 = vmatprep.subr.mxu0 0.0
    %1659 = vmatpush1.msra.mxu0 %v109
    %1660 = vmatprep.subr.mxu0 0.0
    %1661 = vmatpush2.msra.mxu0 0.0
    %1662 = vmatprep.subr.mxu0 0.0
    %1663 = vmatpush2.msra.mxu0 0.0
    %1664 = vmatprep.subr.mxu0 0.0
    %1665 = vmatpush2.msra.mxu0 0.0
    %1666 = vmatprep.subr.mxu0 0.0
    %1667 = vmatpush2.msra.mxu0 0.0
    %1668 = vmatprep.subr.mxu0 0.0
    %1669 = vmatpush2.msra.mxu0 0.0
    %1670 = vmatprep.subr.mxu0 0.0
    %1671 = vmatpush2.msra.mxu0 0.0
    %1672 = vmatprep.subr.mxu0 0.0
    %1673 = vmatpush2.msra.mxu0 0.0
    %1674 = vmatprep.subr.mxu0 0.0
    %1675 = vmatpush2.msra.mxu0 0.0
    %1676 = vmatprep.subr.mxu0 0.0
    %1677 = vmatpush2.msra.mxu0 0.0
    %1678 = vmatprep.subr.mxu0 0.0
    %1679 = vmatpush2.msra.mxu0 0.0
    %1680 = vmatprep.subr.mxu0 0.0
    %1681 = vmatpush2.msra.mxu0 0.0
    %1682 = vmatprep.subr.mxu0 0.0
    %1683 = vmatpush2.msra.mxu0 0.0
    %1684 = vmatprep.subr.mxu0 0.0
    %1685 = vmatpush2.msra.mxu0 0.0
    %1686 = vmatprep.subr.mxu0 0.0
    %1687 = vmatpush2.msra.mxu0 0.0
    %1688 = vmatprep.subr.mxu0 0.0
    %1689 = vmatpush2.msra.mxu0 0.0
    %1690 = vmatprep.subr.mxu0 0.0
    %1691 = vmatpush2.msra.mxu0 0.0
    %1692 = vmatprep.mubr.f32.mxu0 0.0
    %1693 = vmatmul.mubr.f32.gmra.mxu0 %v1626
    %v1694 = vpop.f32.mrf.mxu0
    %v1695 = vadd.f32 %v168, %v1694
    %v1696 = vpop.f32.mrf.mxu0
    %1697 = vdwg.mxu0
    %v1698 = vmax.f32 %v1695, 0.0
    %v1699 = vsel %vm244, %v1698, 0.0
    %1700 = vadd.xlane.f32.xlu0 %v1699
    %v1701 = vpop.xlane.xlu0 %1700
    %v1702 = vmul.f32 %v1701, %v248
    %v1703 = vsub.f32 %v1698, %v1702
    %v1704 = vmul.f32 %v1703, %v1703
    %v1705 = vsel %vm244, %v1704, 0.0
    %1706 = vadd.xlane.f32.xlu0 %v1705
    %v1707 = vpop.xlane.xlu0 %1706
    %v1708 = vmul.f32 %v1707, %v248
    %v1709 = vadd.f32 %v1708, 1e-05
    %v1710 = vrsqrt.pop %v1709
    %v1711 = vmul.f32 %v1703, %v1710
    %v1712 = vmul.f32 %v1711, %v262
    %v1713 = vadd.f32 %v1712, %v267
    %v1715 = vsel %vm273, %v1713, 0
    %1717 = vmatprep.subr.mxu0 0.0
    %1718 = vmatpush1.msra.mxu0 0.0
    %1719 = vmatprep.subr.mxu0 0.0
    %1720 = vmatpush1.msra.mxu0 0.0
    %1721 = vmatprep.subr.mxu0 0.0
    %1722 = vmatpush1.msra.mxu0 0.0
    %1723 = vmatprep.subr.mxu0 0.0
    %1724 = vmatpush1.msra.mxu0 0.0
    %1725 = vmatprep.subr.mxu0 0.0
    %1726 = vmatpush1.msra.mxu0 0.0
    %1727 = vmatprep.subr.mxu0 0.0
    %1728 = vmatpush1.msra.mxu0 0.0
    %1729 = vmatprep.subr.mxu0 0.0
    %1730 = vmatpush1.msra.mxu0 0.0
    %1731 = vmatprep.subr.mxu0 0.0
    %1732 = vmatpush1.msra.mxu0 0.0
    %1733 = vmatprep.subr.mxu0 0.0
    %1734 = vmatpush1.msra.mxu0 0.0
    %1735 = vmatprep.subr.mxu0 0.0
    %1736 = vmatpush1.msra.mxu0 0.0
    %1737 = vmatprep.subr.mxu0 0.0
    %1738 = vmatpush1.msra.mxu0 0.0
    %1739 = vmatprep.subr.mxu0 0.0
    %1740 = vmatpush1.msra.mxu0 0.0
    %1741 = vmatprep.subr.mxu0 0.0
    %1742 = vmatpush1.msra.mxu0 %v114
    %1743 = vmatprep.subr.mxu0 0.0
    %1744 = vmatpush1.msra.mxu0 %v113
    %1745 = vmatprep.subr.mxu0 0.0
    %1746 = vmatpush1.msra.mxu0 %v112
    %1747 = vmatprep.subr.mxu0 0.0
    %1748 = vmatpush1.msra.mxu0 %v111
    %1749 = vmatprep.subr.mxu0 0.0
    %1750 = vmatpush2.msra.mxu0 0.0
    %1751 = vmatprep.subr.mxu0 0.0
    %1752 = vmatpush2.msra.mxu0 0.0
    %1753 = vmatprep.subr.mxu0 0.0
    %1754 = vmatpush2.msra.mxu0 0.0
    %1755 = vmatprep.subr.mxu0 0.0
    %1756 = vmatpush2.msra.mxu0 0.0
    %1757 = vmatprep.subr.mxu0 0.0
    %1758 = vmatpush2.msra.mxu0 0.0
    %1759 = vmatprep.subr.mxu0 0.0
    %1760 = vmatpush2.msra.mxu0 0.0
    %1761 = vmatprep.subr.mxu0 0.0
    %1762 = vmatpush2.msra.mxu0 0.0
    %1763 = vmatprep.subr.mxu0 0.0
    %1764 = vmatpush2.msra.mxu0 0.0
    %1765 = vmatprep.subr.mxu0 0.0
    %1766 = vmatpush2.msra.mxu0 0.0
    %1767 = vmatprep.subr.mxu0 0.0
    %1768 = vmatpush2.msra.mxu0 0.0
    %1769 = vmatprep.subr.mxu0 0.0
    %1770 = vmatpush2.msra.mxu0 0.0
    %1771 = vmatprep.subr.mxu0 0.0
    %1772 = vmatpush2.msra.mxu0 0.0
    %1773 = vmatprep.subr.mxu0 0.0
    %1774 = vmatpush2.msra.mxu0 0.0
    %1775 = vmatprep.subr.mxu0 0.0
    %1776 = vmatpush2.msra.mxu0 0.0
    %1777 = vmatprep.subr.mxu0 0.0
    %1778 = vmatpush2.msra.mxu0 0.0
    %1779 = vmatprep.subr.mxu0 0.0
    %1780 = vmatpush2.msra.mxu0 0.0
    %1781 = vmatprep.mubr.f32.mxu0 0.0
    %1782 = vmatmul.mubr.f32.gmra.mxu0 %v1715
    %v1783 = vpop.f32.mrf.mxu0
    %v1784 = vadd.f32 %v272, %v1783
    %v1785 = vpop.f32.mrf.mxu0
    %1786 = vdwg.mxu0
    %v1787 = vmax.f32 %v1784, 0.0
    %v1788 = vsel %vm244, %v1787, 0.0
    %1789 = vadd.xlane.f32.xlu0 %v1788
    %v1790 = vpop.xlane.xlu0 %1789
    %v1791 = vmul.f32 %v1790, %v248
    %v1792 = vsub.f32 %v1787, %v1791
    %v1793 = vmul.f32 %v1792, %v1792
    %v1794 = vsel %vm244, %v1793, 0.0
    %1795 = vadd.xlane.f32.xlu0 %v1794
    %v1796 = vpop.xlane.xlu0 %1795
    %v1797 = vmul.f32 %v1796, %v248
    %v1798 = vadd.f32 %v1797, 1e-05
    %v1799 = vrsqrt.pop %v1798
    %v1800 = vmul.f32 %v1792, %v1799
    %v1801 = vmul.f32 %v1800, %v364
    %v1802 = vadd.f32 %v1801, %v369
    %v1804 = vsel %vm273, %v1802, 0
    %1806 = vmatprep.subr.mxu0 0.0
    %1807 = vmatpush1.msra.mxu0 0.0
    %1808 = vmatprep.subr.mxu0 0.0
    %1809 = vmatpush1.msra.mxu0 0.0
    %1810 = vmatprep.subr.mxu0 0.0
    %1811 = vmatpush1.msra.mxu0 0.0
    %1812 = vmatprep.subr.mxu0 0.0
    %1813 = vmatpush1.msra.mxu0 0.0
    %1814 = vmatprep.subr.mxu0 0.0
    %1815 = vmatpush1.msra.mxu0 0.0
    %1816 = vmatprep.subr.mxu0 0.0
    %1817 = vmatpush1.msra.mxu0 0.0
    %1818 = vmatprep.subr.mxu0 0.0
    %1819 = vmatpush1.msra.mxu0 0.0
    %1820 = vmatprep.subr.mxu0 0.0
    %1821 = vmatpush1.msra.mxu0 0.0
    %1822 = vmatprep.subr.mxu0 0.0
    %1823 = vmatpush1.msra.mxu0 0.0
    %1824 = vmatprep.subr.mxu0 0.0
    %1825 = vmatpush1.msra.mxu0 0.0
    %1826 = vmatprep.subr.mxu0 0.0
    %1827 = vmatpush1.msra.mxu0 0.0
    %1828 = vmatprep.subr.mxu0 0.0
    %1829 = vmatpush1.msra.mxu0 0.0
    %1830 = vmatprep.subr.mxu0 0.0
    %1831 = vmatpush1.msra.mxu0 %v118
    %1832 = vmatprep.subr.mxu0 0.0
    %1833 = vmatpush1.msra.mxu0 %v117
    %1834 = vmatprep.subr.mxu0 0.0
    %1835 = vmatpush1.msra.mxu0 %v116
    %1836 = vmatprep.subr.mxu0 0.0
    %1837 = vmatpush1.msra.mxu0 %v115
    %1838 = vmatprep.subr.mxu0 0.0
    %1839 = vmatpush2.msra.mxu0 0.0
    %1840 = vmatprep.subr.mxu0 0.0
    %1841 = vmatpush2.msra.mxu0 0.0
    %1842 = vmatprep.subr.mxu0 0.0
    %1843 = vmatpush2.msra.mxu0 0.0
    %1844 = vmatprep.subr.mxu0 0.0
    %1845 = vmatpush2.msra.mxu0 0.0
    %1846 = vmatprep.subr.mxu0 0.0
    %1847 = vmatpush2.msra.mxu0 0.0
    %1848 = vmatprep.subr.mxu0 0.0
    %1849 = vmatpush2.msra.mxu0 0.0
    %1850 = vmatprep.subr.mxu0 0.0
    %1851 = vmatpush2.msra.mxu0 0.0
    %1852 = vmatprep.subr.mxu0 0.0
    %1853 = vmatpush2.msra.mxu0 0.0
    %1854 = vmatprep.subr.mxu0 0.0
    %1855 = vmatpush2.msra.mxu0 0.0
    %1856 = vmatprep.subr.mxu0 0.0
    %1857 = vmatpush2.msra.mxu0 0.0
    %1858 = vmatprep.subr.mxu0 0.0
    %1859 = vmatpush2.msra.mxu0 0.0
    %1860 = vmatprep.subr.mxu0 0.0
    %1861 = vmatpush2.msra.mxu0 0.0
    %1862 = vmatprep.subr.mxu0 0.0
    %1863 = vmatpush2.msra.mxu0 0.0
    %1864 = vmatprep.subr.mxu0 0.0
    %1865 = vmatpush2.msra.mxu0 0.0
    %1866 = vmatprep.subr.mxu0 0.0
    %1867 = vmatpush2.msra.mxu0 0.0
    %1868 = vmatprep.subr.mxu0 0.0
    %1869 = vmatpush2.msra.mxu0 0.0
    %1870 = vmatprep.mubr.f32.mxu0 0.0
    %1871 = vmatmul.mubr.f32.gmra.mxu0 %v1804
    %v1872 = vpop.f32.mrf.mxu0
    %v1873 = vadd.f32 %v374, %v1872
    %v1874 = vpop.f32.mrf.mxu0
    %1875 = vdwg.mxu0
    %v1876 = vsel %vm273, %v1510, 0
    %1878 = vmatprep.subr.mxu0 0.0
    %1879 = vmatpush1.msra.mxu0 0.0
    %1880 = vmatprep.subr.mxu0 0.0
    %1881 = vmatpush1.msra.mxu0 0.0
    %1882 = vmatprep.subr.mxu0 0.0
    %1883 = vmatpush1.msra.mxu0 0.0
    %1884 = vmatprep.subr.mxu0 0.0
    %1885 = vmatpush1.msra.mxu0 0.0
    %1886 = vmatprep.subr.mxu0 0.0
    %1887 = vmatpush1.msra.mxu0 0.0
    %1888 = vmatprep.subr.mxu0 0.0
    %1889 = vmatpush1.msra.mxu0 0.0
    %1890 = vmatprep.subr.mxu0 0.0
    %1891 = vmatpush1.msra.mxu0 0.0
    %1892 = vmatprep.subr.mxu0 0.0
    %1893 = vmatpush1.msra.mxu0 0.0
    %1894 = vmatprep.subr.mxu0 0.0
    %1895 = vmatpush1.msra.mxu0 0.0
    %1896 = vmatprep.subr.mxu0 0.0
    %1897 = vmatpush1.msra.mxu0 0.0
    %1898 = vmatprep.subr.mxu0 0.0
    %1899 = vmatpush1.msra.mxu0 0.0
    %1900 = vmatprep.subr.mxu0 0.0
    %1901 = vmatpush1.msra.mxu0 0.0
    %1902 = vmatprep.subr.mxu0 0.0
    %1903 = vmatpush1.msra.mxu0 %v122
    %1904 = vmatprep.subr.mxu0 0.0
    %1905 = vmatpush1.msra.mxu0 %v121
    %1906 = vmatprep.subr.mxu0 0.0
    %1907 = vmatpush1.msra.mxu0 %v120
    %1908 = vmatprep.subr.mxu0 0.0
    %1909 = vmatpush1.msra.mxu0 %v119
    %1910 = vmatprep.subr.mxu0 0.0
    %1911 = vmatpush2.msra.mxu0 0.0
    %1912 = vmatprep.subr.mxu0 0.0
    %1913 = vmatpush2.msra.mxu0 0.0
    %1914 = vmatprep.subr.mxu0 0.0
    %1915 = vmatpush2.msra.mxu0 0.0
    %1916 = vmatprep.subr.mxu0 0.0
    %1917 = vmatpush2.msra.mxu0 0.0
    %1918 = vmatprep.subr.mxu0 0.0
    %1919 = vmatpush2.msra.mxu0 0.0
    %1920 = vmatprep.subr.mxu0 0.0
    %1921 = vmatpush2.msra.mxu0 0.0
    %1922 = vmatprep.subr.mxu0 0.0
    %1923 = vmatpush2.msra.mxu0 0.0
    %1924 = vmatprep.subr.mxu0 0.0
    %1925 = vmatpush2.msra.mxu0 0.0
    %1926 = vmatprep.subr.mxu0 0.0
    %1927 = vmatpush2.msra.mxu0 0.0
    %1928 = vmatprep.subr.mxu0 0.0
    %1929 = vmatpush2.msra.mxu0 0.0
    %1930 = vmatprep.subr.mxu0 0.0
    %1931 = vmatpush2.msra.mxu0 0.0
    %1932 = vmatprep.subr.mxu0 0.0
    %1933 = vmatpush2.msra.mxu0 0.0
    %1934 = vmatprep.subr.mxu0 0.0
    %1935 = vmatpush2.msra.mxu0 0.0
    %1936 = vmatprep.subr.mxu0 0.0
    %1937 = vmatpush2.msra.mxu0 0.0
    %1938 = vmatprep.subr.mxu0 0.0
    %1939 = vmatpush2.msra.mxu0 0.0
    %1940 = vmatprep.subr.mxu0 0.0
    %1941 = vmatpush2.msra.mxu0 0.0
    %1942 = vmatprep.mubr.f32.mxu0 0.0
    %1943 = vmatmul.mubr.f32.gmra.mxu0 %v1876
    %v1944 = vpop.f32.mrf.mxu0
    %v1945 = vadd.f32 %v451, %v1944
    %v1946 = vpop.f32.mrf.mxu0
    %1947 = vdwg.mxu0
    %v1948 = vadd.f32 %v1873, %v1945
    %v1949 = vxor.u32 %v1948, 2147483648
    %v1950 = vmul.f32 %v1949, 1.442695
    %v1951 = vpow.pop %v1950
    %v1952 = vadd.f32 %v1951, 1.0
    %v1953 = vrcp.pop %v1952
    %v1954 = vmul.f32 1.0, %v1953
    %1956 = vrot.lane.b32.xlu0 %v1945, 64
    %v1957 = vpop.permute.xlu0 %1956
    %v1959 = vmul.f32 %v1954, %v1957
    %1961 = vrot.lane.b32.xlu0 %v1959, 64
    %v1962 = vpop.permute.xlu0 %1961
    %v1964 = vadd.f32 %v1873, %v1962
    %v1965 = vtanh.pop %v1964
    %v1966 = vsub.f32 1.0, %v1954
    %1968 = vrot.lane.b32.xlu0 %v1965, 96
    %v1969 = vpop.permute.xlu0 %1968
    %v1971 = vmul.f32 %v1966, %v1969
    %v1972 = vmul.f32 %v1954, %v1507
    %v1973 = vadd.f32 %v1971, %v1972
    %1975 = vrot.lane.b32.xlu0 %v1973, 96
    %v1976 = vpop.permute.xlu0 %1975
    %v1978 = vsel %vm244, %v1976, 0.0
    %1979 = vadd.xlane.f32.xlu0 %v1978
    %v1980 = vpop.xlane.xlu0 %1979
    %v1981 = vmul.f32 %v1980, %v248
    %v1982 = vsub.f32 %v1973, %v1981
    %v1983 = vmul.f32 %v1982, %v1982
    %1985 = vrot.lane.b32.xlu0 %v1983, 96
    %v1986 = vpop.permute.xlu0 %1985
    %v1988 = vsel %vm244, %v1986, 0.0
    %1989 = vadd.xlane.f32.xlu0 %v1988
    %v1990 = vpop.xlane.xlu0 %1989
    %v1991 = vmul.f32 %v1990, %v248
    %v1992 = vadd.f32 %v1991, 1e-05
    %v1993 = vrsqrt.pop %v1992
    %v1994 = vmul.f32 %v1982, %v1993
    %v1995 = vmul.f32 %v1994, %v581
    %v1996 = vadd.f32 %v1995, %v590
    %1998 = vrot.lane.b32.xlu0 %v1996, 96
    %v1999 = vpop.permute.xlu0 %1998
    %v2000 = vsel %vm273, %v1999, 0
    %2002 = vmatprep.subr.mxu0 0.0
    %2003 = vmatpush1.msra.mxu0 0.0
    %2004 = vmatprep.subr.mxu0 0.0
    %2005 = vmatpush1.msra.mxu0 0.0
    %2006 = vmatprep.subr.mxu0 0.0
    %2007 = vmatpush1.msra.mxu0 0.0
    %2008 = vmatprep.subr.mxu0 0.0
    %2009 = vmatpush1.msra.mxu0 0.0
    %2010 = vmatprep.subr.mxu0 0.0
    %2011 = vmatpush1.msra.mxu0 0.0
    %2012 = vmatprep.subr.mxu0 0.0
    %2013 = vmatpush1.msra.mxu0 0.0
    %2014 = vmatprep.subr.mxu0 0.0
    %2015 = vmatpush1.msra.mxu0 0.0
    %2016 = vmatprep.subr.mxu0 0.0
    %2017 = vmatpush1.msra.mxu0 0.0
    %2018 = vmatprep.subr.mxu0 0.0
    %2019 = vmatpush1.msra.mxu0 0.0
    %2020 = vmatprep.subr.mxu0 0.0
    %2021 = vmatpush1.msra.mxu0 0.0
    %2022 = vmatprep.subr.mxu0 0.0
    %2023 = vmatpush1.msra.mxu0 0.0
    %2024 = vmatprep.subr.mxu0 0.0
    %2025 = vmatpush1.msra.mxu0 0.0
    %2026 = vmatprep.subr.mxu0 0.0
    %2027 = vmatpush1.msra.mxu0 %v128
    %2028 = vmatprep.subr.mxu0 0.0
    %2029 = vmatpush1.msra.mxu0 %v127
    %2030 = vmatprep.subr.mxu0 0.0
    %2031 = vmatpush1.msra.mxu0 %v126
    %2032 = vmatprep.subr.mxu0 0.0
    %2033 = vmatpush1.msra.mxu0 %v125
    %2034 = vmatprep.subr.mxu0 0.0
    %2035 = vmatpush2.msra.mxu0 0.0
    %2036 = vmatprep.subr.mxu0 0.0
    %2037 = vmatpush2.msra.mxu0 0.0
    %2038 = vmatprep.subr.mxu0 0.0
    %2039 = vmatpush2.msra.mxu0 0.0
    %2040 = vmatprep.subr.mxu0 0.0
    %2041 = vmatpush2.msra.mxu0 0.0
    %2042 = vmatprep.subr.mxu0 0.0
    %2043 = vmatpush2.msra.mxu0 0.0
    %2044 = vmatprep.subr.mxu0 0.0
    %2045 = vmatpush2.msra.mxu0 0.0
    %2046 = vmatprep.subr.mxu0 0.0
    %2047 = vmatpush2.msra.mxu0 0.0
    %2048 = vmatprep.subr.mxu0 0.0
    %2049 = vmatpush2.msra.mxu0 0.0
    %2050 = vmatprep.subr.mxu0 0.0
    %2051 = vmatpush2.msra.mxu0 0.0
    %2052 = vmatprep.subr.mxu0 0.0
    %2053 = vmatpush2.msra.mxu0 0.0
    %2054 = vmatprep.subr.mxu0 0.0
    %2055 = vmatpush2.msra.mxu0 0.0
    %2056 = vmatprep.subr.mxu0 0.0
    %2057 = vmatpush2.msra.mxu0 0.0
    %2058 = vmatprep.subr.mxu0 0.0
    %2059 = vmatpush2.msra.mxu0 0.0
    %2060 = vmatprep.subr.mxu0 0.0
    %2061 = vmatpush2.msra.mxu0 0.0
    %2062 = vmatprep.subr.mxu0 0.0
    %2063 = vmatpush2.msra.mxu0 0.0
    %2064 = vmatprep.subr.mxu0 0.0
    %2065 = vmatpush2.msra.mxu0 0.0
    %2066 = vmatprep.mubr.f32.mxu0 0.0
    %2067 = vmatmul.mubr.f32.gmra.mxu0 %v2000
    %v2068 = vpop.f32.mrf.mxu0
    %v2069 = vadd.f32 %v597, %v2068
    %v2070 = vpop.f32.mrf.mxu0
    %2071 = vdwg.mxu0
    %s2072 = scalar_lea.vmem %s11, 12
    %2073 = vst.msk [vmem:[%s2072] sm:$0xf] %vm674, %v2069
    %s2074 = scalar_lea.vmem %s0, 16
    %v2075 = vld [vmem:[%s2074] sm:$0xf]
    %v2076 = vsel %vm140, %v2075, 0.0
    %2077 = vadd.xlane.f32.xlu0 %v2076
    %v2078 = vpop.xlane.xlu0 %2077
    %v2079 = vmul.f32 %v2078, %v144
    %v2080 = vsub.f32 %v2075, %v2079
    %v2081 = vmul.f32 %v2080, %v2080
    %v2082 = vsel %vm140, %v2081, 0.0
    %2083 = vadd.xlane.f32.xlu0 %v2082
    %v2084 = vpop.xlane.xlu0 %2083
    %v2085 = vmul.f32 %v2084, %v144
    %v2086 = vadd.f32 %v2085, 1e-05
    %v2087 = vrsqrt.pop %v2086
    %v2088 = vmul.f32 %v2080, %v2087
    %v2089 = vmul.f32 %v2088, %v158
    %v2090 = vadd.f32 %v2089, %v163
    %v2092 = vsel %vm169, %v2090, 0
    %2094 = vmatprep.subr.mxu0 0.0
    %2095 = vmatpush1.msra.mxu0 0.0
    %2096 = vmatprep.subr.mxu0 0.0
    %2097 = vmatpush1.msra.mxu0 0.0
    %2098 = vmatprep.subr.mxu0 0.0
    %2099 = vmatpush1.msra.mxu0 0.0
    %2100 = vmatprep.subr.mxu0 0.0
    %2101 = vmatpush1.msra.mxu0 0.0
    %2102 = vmatprep.subr.mxu0 0.0
    %2103 = vmatpush1.msra.mxu0 0.0
    %2104 = vmatprep.subr.mxu0 0.0
    %2105 = vmatpush1.msra.mxu0 0.0
    %2106 = vmatprep.subr.mxu0 0.0
    %2107 = vmatpush1.msra.mxu0 0.0
    %2108 = vmatprep.subr.mxu0 0.0
    %2109 = vmatpush1.msra.mxu0 0.0
    %2110 = vmatprep.subr.mxu0 0.0
    %2111 = vmatpush1.msra.mxu0 0.0
    %2112 = vmatprep.subr.mxu0 0.0
    %2113 = vmatpush1.msra.mxu0 0.0
    %2114 = vmatprep.subr.mxu0 0.0
    %2115 = vmatpush1.msra.mxu0 0.0
    %2116 = vmatprep.subr.mxu0 0.0
    %2117 = vmatpush1.msra.mxu0 0.0
    %2118 = vmatprep.subr.mxu0 0.0
    %2119 = vmatpush1.msra.mxu0 0.0
    %2120 = vmatprep.subr.mxu0 0.0
    %2121 = vmatpush1.msra.mxu0 0.0
    %2122 = vmatprep.subr.mxu0 0.0
    %2123 = vmatpush1.msra.mxu0 %v110
    %2124 = vmatprep.subr.mxu0 0.0
    %2125 = vmatpush1.msra.mxu0 %v109
    %2126 = vmatprep.subr.mxu0 0.0
    %2127 = vmatpush2.msra.mxu0 0.0
    %2128 = vmatprep.subr.mxu0 0.0
    %2129 = vmatpush2.msra.mxu0 0.0
    %2130 = vmatprep.subr.mxu0 0.0
    %2131 = vmatpush2.msra.mxu0 0.0
    %2132 = vmatprep.subr.mxu0 0.0
    %2133 = vmatpush2.msra.mxu0 0.0
    %2134 = vmatprep.subr.mxu0 0.0
    %2135 = vmatpush2.msra.mxu0 0.0
    %2136 = vmatprep.subr.mxu0 0.0
    %2137 = vmatpush2.msra.mxu0 0.0
    %2138 = vmatprep.subr.mxu0 0.0
    %2139 = vmatpush2.msra.mxu0 0.0
    %2140 = vmatprep.subr.mxu0 0.0
    %2141 = vmatpush2.msra.mxu0 0.0
    %2142 = vmatprep.subr.mxu0 0.0
    %2143 = vmatpush2.msra.mxu0 0.0
    %2144 = vmatprep.subr.mxu0 0.0
    %2145 = vmatpush2.msra.mxu0 0.0
    %2146 = vmatprep.subr.mxu0 0.0
    %2147 = vmatpush2.msra.mxu0 0.0
    %2148 = vmatprep.subr.mxu0 0.0
    %2149 = vmatpush2.msra.mxu0 0.0
    %2150 = vmatprep.subr.mxu0 0.0
    %2151 = vmatpush2.msra.mxu0 0.0
    %2152 = vmatprep.subr.mxu0 0.0
    %2153 = vmatpush2.msra.mxu0 0.0
    %2154 = vmatprep.subr.mxu0 0.0
    %2155 = vmatpush2.msra.mxu0 0.0
    %2156 = vmatprep.subr.mxu0 0.0
    %2157 = vmatpush2.msra.mxu0 0.0
    %2158 = vmatprep.mubr.f32.mxu0 0.0
    %2159 = vmatmul.mubr.f32.gmra.mxu0 %v2092
    %v2160 = vpop.f32.mrf.mxu0
    %v2161 = vadd.f32 %v168, %v2160
    %v2162 = vpop.f32.mrf.mxu0
    %2163 = vdwg.mxu0
    %v2164 = vmax.f32 %v2161, 0.0
    %v2165 = vsel %vm244, %v2164, 0.0
    %2166 = vadd.xlane.f32.xlu0 %v2165
    %v2167 = vpop.xlane.xlu0 %2166
    %v2168 = vmul.f32 %v2167, %v248
    %v2169 = vsub.f32 %v2164, %v2168
    %v2170 = vmul.f32 %v2169, %v2169
    %v2171 = vsel %vm244, %v2170, 0.0
    %2172 = vadd.xlane.f32.xlu0 %v2171
    %v2173 = vpop.xlane.xlu0 %2172
    %v2174 = vmul.f32 %v2173, %v248
    %v2175 = vadd.f32 %v2174, 1e-05
    %v2176 = vrsqrt.pop %v2175
    %v2177 = vmul.f32 %v2169, %v2176
    %v2178 = vmul.f32 %v2177, %v262
    %v2179 = vadd.f32 %v2178, %v267
    %v2181 = vsel %vm273, %v2179, 0
    %2183 = vmatprep.subr.mxu0 0.0
    %2184 = vmatpush1.msra.mxu0 0.0
    %2185 = vmatprep.subr.mxu0 0.0
    %2186 = vmatpush1.msra.mxu0 0.0
    %2187 = vmatprep.subr.mxu0 0.0
    %2188 = vmatpush1.msra.mxu0 0.0
    %2189 = vmatprep.subr.mxu0 0.0
    %2190 = vmatpush1.msra.mxu0 0.0
    %2191 = vmatprep.subr.mxu0 0.0
    %2192 = vmatpush1.msra.mxu0 0.0
    %2193 = vmatprep.subr.mxu0 0.0
    %2194 = vmatpush1.msra.mxu0 0.0
    %2195 = vmatprep.subr.mxu0 0.0
    %2196 = vmatpush1.msra.mxu0 0.0
    %2197 = vmatprep.subr.mxu0 0.0
    %2198 = vmatpush1.msra.mxu0 0.0
    %2199 = vmatprep.subr.mxu0 0.0
    %2200 = vmatpush1.msra.mxu0 0.0
    %2201 = vmatprep.subr.mxu0 0.0
    %2202 = vmatpush1.msra.mxu0 0.0
    %2203 = vmatprep.subr.mxu0 0.0
    %2204 = vmatpush1.msra.mxu0 0.0
    %2205 = vmatprep.subr.mxu0 0.0
    %2206 = vmatpush1.msra.mxu0 0.0
    %2207 = vmatprep.subr.mxu0 0.0
    %2208 = vmatpush1.msra.mxu0 %v114
    %2209 = vmatprep.subr.mxu0 0.0
    %2210 = vmatpush1.msra.mxu0 %v113
    %2211 = vmatprep.subr.mxu0 0.0
    %2212 = vmatpush1.msra.mxu0 %v112
    %2213 = vmatprep.subr.mxu0 0.0
    %2214 = vmatpush1.msra.mxu0 %v111
    %2215 = vmatprep.subr.mxu0 0.0
    %2216 = vmatpush2.msra.mxu0 0.0
    %2217 = vmatprep.subr.mxu0 0.0
    %2218 = vmatpush2.msra.mxu0 0.0
    %2219 = vmatprep.subr.mxu0 0.0
    %2220 = vmatpush2.msra.mxu0 0.0
    %2221 = vmatprep.subr.mxu0 0.0
    %2222 = vmatpush2.msra.mxu0 0.0
    %2223 = vmatprep.subr.mxu0 0.0
    %2224 = vmatpush2.msra.mxu0 0.0
    %2225 = vmatprep.subr.mxu0 0.0
    %2226 = vmatpush2.msra.mxu0 0.0
    %2227 = vmatprep.subr.mxu0 0.0
    %2228 = vmatpush2.msra.mxu0 0.0
    %2229 = vmatprep.subr.mxu0 0.0
    %2230 = vmatpush2.msra.mxu0 0.0
    %2231 = vmatprep.subr.mxu0 0.0
    %2232 = vmatpush2.msra.mxu0 0.0
    %2233 = vmatprep.subr.mxu0 0.0
    %2234 = vmatpush2.msra.mxu0 0.0
    %2235 = vmatprep.subr.mxu0 0.0
    %2236 = vmatpush2.msra.mxu0 0.0
    %2237 = vmatprep.subr.mxu0 0.0
    %2238 = vmatpush2.msra.mxu0 0.0
    %2239 = vmatprep.subr.mxu0 0.0
    %2240 = vmatpush2.msra.mxu0 0.0
    %2241 = vmatprep.subr.mxu0 0.0
    %2242 = vmatpush2.msra.mxu0 0.0
    %2243 = vmatprep.subr.mxu0 0.0
    %2244 = vmatpush2.msra.mxu0 0.0
    %2245 = vmatprep.subr.mxu0 0.0
    %2246 = vmatpush2.msra.mxu0 0.0
    %2247 = vmatprep.mubr.f32.mxu0 0.0
    %2248 = vmatmul.mubr.f32.gmra.mxu0 %v2181
    %v2249 = vpop.f32.mrf.mxu0
    %v2250 = vadd.f32 %v272, %v2249
    %v2251 = vpop.f32.mrf.mxu0
    %2252 = vdwg.mxu0
    %v2253 = vmax.f32 %v2250, 0.0
    %v2254 = vsel %vm244, %v2253, 0.0
    %2255 = vadd.xlane.f32.xlu0 %v2254
    %v2256 = vpop.xlane.xlu0 %2255
    %v2257 = vmul.f32 %v2256, %v248
    %v2258 = vsub.f32 %v2253, %v2257
    %v2259 = vmul.f32 %v2258, %v2258
    %v2260 = vsel %vm244, %v2259, 0.0
    %2261 = vadd.xlane.f32.xlu0 %v2260
    %v2262 = vpop.xlane.xlu0 %2261
    %v2263 = vmul.f32 %v2262, %v248
    %v2264 = vadd.f32 %v2263, 1e-05
    %v2265 = vrsqrt.pop %v2264
    %v2266 = vmul.f32 %v2258, %v2265
    %v2267 = vmul.f32 %v2266, %v364
    %v2268 = vadd.f32 %v2267, %v369
    %v2270 = vsel %vm273, %v2268, 0
    %2272 = vmatprep.subr.mxu0 0.0
    %2273 = vmatpush1.msra.mxu0 0.0
    %2274 = vmatprep.subr.mxu0 0.0
    %2275 = vmatpush1.msra.mxu0 0.0
    %2276 = vmatprep.subr.mxu0 0.0
    %2277 = vmatpush1.msra.mxu0 0.0
    %2278 = vmatprep.subr.mxu0 0.0
    %2279 = vmatpush1.msra.mxu0 0.0
    %2280 = vmatprep.subr.mxu0 0.0
    %2281 = vmatpush1.msra.mxu0 0.0
    %2282 = vmatprep.subr.mxu0 0.0
    %2283 = vmatpush1.msra.mxu0 0.0
    %2284 = vmatprep.subr.mxu0 0.0
    %2285 = vmatpush1.msra.mxu0 0.0
    %2286 = vmatprep.subr.mxu0 0.0
    %2287 = vmatpush1.msra.mxu0 0.0
    %2288 = vmatprep.subr.mxu0 0.0
    %2289 = vmatpush1.msra.mxu0 0.0
    %2290 = vmatprep.subr.mxu0 0.0
    %2291 = vmatpush1.msra.mxu0 0.0
    %2292 = vmatprep.subr.mxu0 0.0
    %2293 = vmatpush1.msra.mxu0 0.0
    %2294 = vmatprep.subr.mxu0 0.0
    %2295 = vmatpush1.msra.mxu0 0.0
    %2296 = vmatprep.subr.mxu0 0.0
    %2297 = vmatpush1.msra.mxu0 %v118
    %2298 = vmatprep.subr.mxu0 0.0
    %2299 = vmatpush1.msra.mxu0 %v117
    %2300 = vmatprep.subr.mxu0 0.0
    %2301 = vmatpush1.msra.mxu0 %v116
    %2302 = vmatprep.subr.mxu0 0.0
    %2303 = vmatpush1.msra.mxu0 %v115
    %2304 = vmatprep.subr.mxu0 0.0
    %2305 = vmatpush2.msra.mxu0 0.0
    %2306 = vmatprep.subr.mxu0 0.0
    %2307 = vmatpush2.msra.mxu0 0.0
    %2308 = vmatprep.subr.mxu0 0.0
    %2309 = vmatpush2.msra.mxu0 0.0
    %2310 = vmatprep.subr.mxu0 0.0
    %2311 = vmatpush2.msra.mxu0 0.0
    %2312 = vmatprep.subr.mxu0 0.0
    %2313 = vmatpush2.msra.mxu0 0.0
    %2314 = vmatprep.subr.mxu0 0.0
    %2315 = vmatpush2.msra.mxu0 0.0
    %2316 = vmatprep.subr.mxu0 0.0
    %2317 = vmatpush2.msra.mxu0 0.0
    %2318 = vmatprep.subr.mxu0 0.0
    %2319 = vmatpush2.msra.mxu0 0.0
    %2320 = vmatprep.subr.mxu0 0.0
    %2321 = vmatpush2.msra.mxu0 0.0
    %2322 = vmatprep.subr.mxu0 0.0
    %2323 = vmatpush2.msra.mxu0 0.0
    %2324 = vmatprep.subr.mxu0 0.0
    %2325 = vmatpush2.msra.mxu0 0.0
    %2326 = vmatprep.subr.mxu0 0.0
    %2327 = vmatpush2.msra.mxu0 0.0
    %2328 = vmatprep.subr.mxu0 0.0
    %2329 = vmatpush2.msra.mxu0 0.0
    %2330 = vmatprep.subr.mxu0 0.0
    %2331 = vmatpush2.msra.mxu0 0.0
    %2332 = vmatprep.subr.mxu0 0.0
    %2333 = vmatpush2.msra.mxu0 0.0
    %2334 = vmatprep.subr.mxu0 0.0
    %2335 = vmatpush2.msra.mxu0 0.0
    %2336 = vmatprep.mubr.f32.mxu0 0.0
    %2337 = vmatmul.mubr.f32.gmra.mxu0 %v2270
    %v2338 = vpop.f32.mrf.mxu0
    %v2339 = vadd.f32 %v374, %v2338
    %v2340 = vpop.f32.mrf.mxu0
    %2341 = vdwg.mxu0
    %v2342 = vsel %vm273, %v1976, 0
    %2344 = vmatprep.subr.mxu0 0.0
    %2345 = vmatpush1.msra.mxu0 0.0
    %2346 = vmatprep.subr.mxu0 0.0
    %2347 = vmatpush1.msra.mxu0 0.0
    %2348 = vmatprep.subr.mxu0 0.0
    %2349 = vmatpush1.msra.mxu0 0.0
    %2350 = vmatprep.subr.mxu0 0.0
    %2351 = vmatpush1.msra.mxu0 0.0
    %2352 = vmatprep.subr.mxu0 0.0
    %2353 = vmatpush1.msra.mxu0 0.0
    %2354 = vmatprep.subr.mxu0 0.0
    %2355 = vmatpush1.msra.mxu0 0.0
    %2356 = vmatprep.subr.mxu0 0.0
    %2357 = vmatpush1.msra.mxu0 0.0
    %2358 = vmatprep.subr.mxu0 0.0
    %2359 = vmatpush1.msra.mxu0 0.0
    %2360 = vmatprep.subr.mxu0 0.0
    %2361 = vmatpush1.msra.mxu0 0.0
    %2362 = vmatprep.subr.mxu0 0.0
    %2363 = vmatpush1.msra.mxu0 0.0
    %2364 = vmatprep.subr.mxu0 0.0
    %2365 = vmatpush1.msra.mxu0 0.0
    %2366 = vmatprep.subr.mxu0 0.0
    %2367 = vmatpush1.msra.mxu0 0.0
    %2368 = vmatprep.subr.mxu0 0.0
    %2369 = vmatpush1.msra.mxu0 %v122
    %2370 = vmatprep.subr.mxu0 0.0
    %2371 = vmatpush1.msra.mxu0 %v121
    %2372 = vmatprep.subr.mxu0 0.0
    %2373 = vmatpush1.msra.mxu0 %v120
    %2374 = vmatprep.subr.mxu0 0.0
    %2375 = vmatpush1.msra.mxu0 %v119
    %2376 = vmatprep.subr.mxu0 0.0
    %2377 = vmatpush2.msra.mxu0 0.0
    %2378 = vmatprep.subr.mxu0 0.0
    %2379 = vmatpush2.msra.mxu0 0.0
    %2380 = vmatprep.subr.mxu0 0.0
    %2381 = vmatpush2.msra.mxu0 0.0
    %2382 = vmatprep.subr.mxu0 0.0
    %2383 = vmatpush2.msra.mxu0 0.0
    %2384 = vmatprep.subr.mxu0 0.0
    %2385 = vmatpush2.msra.mxu0 0.0
    %2386 = vmatprep.subr.mxu0 0.0
    %2387 = vmatpush2.msra.mxu0 0.0
    %2388 = vmatprep.subr.mxu0 0.0
    %2389 = vmatpush2.msra.mxu0 0.0
    %2390 = vmatprep.subr.mxu0 0.0
    %2391 = vmatpush2.msra.mxu0 0.0
    %2392 = vmatprep.subr.mxu0 0.0
    %2393 = vmatpush2.msra.mxu0 0.0
    %2394 = vmatprep.subr.mxu0 0.0
    %2395 = vmatpush2.msra.mxu0 0.0
    %2396 = vmatprep.subr.mxu0 0.0
    %2397 = vmatpush2.msra.mxu0 0.0
    %2398 = vmatprep.subr.mxu0 0.0
    %2399 = vmatpush2.msra.mxu0 0.0
    %2400 = vmatprep.subr.mxu0 0.0
    %2401 = vmatpush2.msra.mxu0 0.0
    %2402 = vmatprep.subr.mxu0 0.0
    %2403 = vmatpush2.msra.mxu0 0.0
    %2404 = vmatprep.subr.mxu0 0.0
    %2405 = vmatpush2.msra.mxu0 0.0
    %2406 = vmatprep.subr.mxu0 0.0
    %2407 = vmatpush2.msra.mxu0 0.0
    %2408 = vmatprep.mubr.f32.mxu0 0.0
    %2409 = vmatmul.mubr.f32.gmra.mxu0 %v2342
    %v2410 = vpop.f32.mrf.mxu0
    %v2411 = vadd.f32 %v451, %v2410
    %v2412 = vpop.f32.mrf.mxu0
    %2413 = vdwg.mxu0
    %v2414 = vadd.f32 %v2339, %v2411
    %v2415 = vxor.u32 %v2414, 2147483648
    %v2416 = vmul.f32 %v2415, 1.442695
    %v2417 = vpow.pop %v2416
    %v2418 = vadd.f32 %v2417, 1.0
    %v2419 = vrcp.pop %v2418
    %v2420 = vmul.f32 1.0, %v2419
    %2422 = vrot.lane.b32.xlu0 %v2411, 64
    %v2423 = vpop.permute.xlu0 %2422
    %v2425 = vmul.f32 %v2420, %v2423
    %2427 = vrot.lane.b32.xlu0 %v2425, 64
    %v2428 = vpop.permute.xlu0 %2427
    %v2430 = vadd.f32 %v2339, %v2428
    %v2431 = vtanh.pop %v2430
    %v2432 = vsub.f32 1.0, %v2420
    %2434 = vrot.lane.b32.xlu0 %v2431, 96
    %v2435 = vpop.permute.xlu0 %2434
    %v2437 = vmul.f32 %v2432, %v2435
    %v2438 = vmul.f32 %v2420, %v1973
    %v2439 = vadd.f32 %v2437, %v2438
    %2441 = vrot.lane.b32.xlu0 %v2439, 96
    %v2442 = vpop.permute.xlu0 %2441
    %v2444 = vsel %vm244, %v2442, 0.0
    %2445 = vadd.xlane.f32.xlu0 %v2444
    %v2446 = vpop.xlane.xlu0 %2445
    %v2447 = vmul.f32 %v2446, %v248
    %v2448 = vsub.f32 %v2439, %v2447
    %v2449 = vmul.f32 %v2448, %v2448
    %2451 = vrot.lane.b32.xlu0 %v2449, 96
    %v2452 = vpop.permute.xlu0 %2451
    %v2454 = vsel %vm244, %v2452, 0.0
    %2455 = vadd.xlane.f32.xlu0 %v2454
    %v2456 = vpop.xlane.xlu0 %2455
    %v2457 = vmul.f32 %v2456, %v248
    %v2458 = vadd.f32 %v2457, 1e-05
    %v2459 = vrsqrt.pop %v2458
    %v2460 = vmul.f32 %v2448, %v2459
    %v2461 = vmul.f32 %v2460, %v581
    %v2462 = vadd.f32 %v2461, %v590
    %2464 = vrot.lane.b32.xlu0 %v2462, 96
    %v2465 = vpop.permute.xlu0 %2464
    %v2466 = vsel %vm273, %v2465, 0
    %2468 = vmatprep.subr.mxu0 0.0
    %2469 = vmatpush1.msra.mxu0 0.0
    %2470 = vmatprep.subr.mxu0 0.0
    %2471 = vmatpush1.msra.mxu0 0.0
    %2472 = vmatprep.subr.mxu0 0.0
    %2473 = vmatpush1.msra.mxu0 0.0
    %2474 = vmatprep.subr.mxu0 0.0
    %2475 = vmatpush1.msra.mxu0 0.0
    %2476 = vmatprep.subr.mxu0 0.0
    %2477 = vmatpush1.msra.mxu0 0.0
    %2478 = vmatprep.subr.mxu0 0.0
    %2479 = vmatpush1.msra.mxu0 0.0
    %2480 = vmatprep.subr.mxu0 0.0
    %2481 = vmatpush1.msra.mxu0 0.0
    %2482 = vmatprep.subr.mxu0 0.0
    %2483 = vmatpush1.msra.mxu0 0.0
    %2484 = vmatprep.subr.mxu0 0.0
    %2485 = vmatpush1.msra.mxu0 0.0
    %2486 = vmatprep.subr.mxu0 0.0
    %2487 = vmatpush1.msra.mxu0 0.0
    %2488 = vmatprep.subr.mxu0 0.0
    %2489 = vmatpush1.msra.mxu0 0.0
    %2490 = vmatprep.subr.mxu0 0.0
    %2491 = vmatpush1.msra.mxu0 0.0
    %2492 = vmatprep.subr.mxu0 0.0
    %2493 = vmatpush1.msra.mxu0 %v128
    %2494 = vmatprep.subr.mxu0 0.0
    %2495 = vmatpush1.msra.mxu0 %v127
    %2496 = vmatprep.subr.mxu0 0.0
    %2497 = vmatpush1.msra.mxu0 %v126
    %2498 = vmatprep.subr.mxu0 0.0
    %2499 = vmatpush1.msra.mxu0 %v125
    %2500 = vmatprep.subr.mxu0 0.0
    %2501 = vmatpush2.msra.mxu0 0.0
    %2502 = vmatprep.subr.mxu0 0.0
    %2503 = vmatpush2.msra.mxu0 0.0
    %2504 = vmatprep.subr.mxu0 0.0
    %2505 = vmatpush2.msra.mxu0 0.0
    %2506 = vmatprep.subr.mxu0 0.0
    %2507 = vmatpush2.msra.mxu0 0.0
    %2508 = vmatprep.subr.mxu0 0.0
    %2509 = vmatpush2.msra.mxu0 0.0
    %2510 = vmatprep.subr.mxu0 0.0
    %2511 = vmatpush2.msra.mxu0 0.0
    %2512 = vmatprep.subr.mxu0 0.0
    %2513 = vmatpush2.msra.mxu0 0.0
    %2514 = vmatprep.subr.mxu0 0.0
    %2515 = vmatpush2.msra.mxu0 0.0
    %2516 = vmatprep.subr.mxu0 0.0
    %2517 = vmatpush2.msra.mxu0 0.0
    %2518 = vmatprep.subr.mxu0 0.0
    %2519 = vmatpush2.msra.mxu0 0.0
    %2520 = vmatprep.subr.mxu0 0.0
    %2521 = vmatpush2.msra.mxu0 0.0
    %2522 = vmatprep.subr.mxu0 0.0
    %2523 = vmatpush2.msra.mxu0 0.0
    %2524 = vmatprep.subr.mxu0 0.0
    %2525 = vmatpush2.msra.mxu0 0.0
    %2526 = vmatprep.subr.mxu0 0.0
    %2527 = vmatpush2.msra.mxu0 0.0
    %2528 = vmatprep.subr.mxu0 0.0
    %2529 = vmatpush2.msra.mxu0 0.0
    %2530 = vmatprep.subr.mxu0 0.0
    %2531 = vmatpush2.msra.mxu0 0.0
    %2532 = vmatprep.mubr.f32.mxu0 0.0
    %2533 = vmatmul.mubr.f32.gmra.mxu0 %v2466
    %v2534 = vpop.f32.mrf.mxu0
    %v2535 = vadd.f32 %v597, %v2534
    %v2536 = vpop.f32.mrf.mxu0
    %2537 = vdwg.mxu0
    %s2538 = scalar_lea.vmem %s11, 16
    %2539 = vst.msk [vmem:[%s2538] sm:$0xf] %vm674, %v2535
    %s2540 = scalar_lea.vmem %s0, 20
    %v2541 = vld [vmem:[%s2540] sm:$0xf]
    %v2542 = vsel %vm140, %v2541, 0.0
    %2543 = vadd.xlane.f32.xlu0 %v2542
    %v2544 = vpop.xlane.xlu0 %2543
    %v2545 = vmul.f32 %v2544, %v144
    %v2546 = vsub.f32 %v2541, %v2545
    %v2547 = vmul.f32 %v2546, %v2546
    %v2548 = vsel %vm140, %v2547, 0.0
    %2549 = vadd.xlane.f32.xlu0 %v2548
    %v2550 = vpop.xlane.xlu0 %2549
    %v2551 = vmul.f32 %v2550, %v144
    %v2552 = vadd.f32 %v2551, 1e-05
    %v2553 = vrsqrt.pop %v2552
    %v2554 = vmul.f32 %v2546, %v2553
    %v2555 = vmul.f32 %v2554, %v158
    %v2556 = vadd.f32 %v2555, %v163
    %v2558 = vsel %vm169, %v2556, 0
    %2560 = vmatprep.subr.mxu0 0.0
    %2561 = vmatpush1.msra.mxu0 0.0
    %2562 = vmatprep.subr.mxu0 0.0
    %2563 = vmatpush1.msra.mxu0 0.0
    %2564 = vmatprep.subr.mxu0 0.0
    %2565 = vmatpush1.msra.mxu0 0.0
    %2566 = vmatprep.subr.mxu0 0.0
    %2567 = vmatpush1.msra.mxu0 0.0
    %2568 = vmatprep.subr.mxu0 0.0
    %2569 = vmatpush1.msra.mxu0 0.0
    %2570 = vmatprep.subr.mxu0 0.0
    %2571 = vmatpush1.msra.mxu0 0.0
    %2572 = vmatprep.subr.mxu0 0.0
    %2573 = vmatpush1.msra.mxu0 0.0
    %2574 = vmatprep.subr.mxu0 0.0
    %2575 = vmatpush1.msra.mxu0 0.0
    %2576 = vmatprep.subr.mxu0 0.0
    %2577 = vmatpush1.msra.mxu0 0.0
    %2578 = vmatprep.subr.mxu0 0.0
    %2579 = vmatpush1.msra.mxu0 0.0
    %2580 = vmatprep.subr.mxu0 0.0
    %2581 = vmatpush1.msra.mxu0 0.0
    %2582 = vmatprep.subr.mxu0 0.0
    %2583 = vmatpush1.msra.mxu0 0.0
    %2584 = vmatprep.subr.mxu0 0.0
    %2585 = vmatpush1.msra.mxu0 0.0
    %2586 = vmatprep.subr.mxu0 0.0
    %2587 = vmatpush1.msra.mxu0 0.0
    %2588 = vmatprep.subr.mxu0 0.0
    %2589 = vmatpush1.msra.mxu0 %v110
    %2590 = vmatprep.subr.mxu0 0.0
    %2591 = vmatpush1.msra.mxu0 %v109
    %2592 = vmatprep.subr.mxu0 0.0
    %2593 = vmatpush2.msra.mxu0 0.0
    %2594 = vmatprep.subr.mxu0 0.0
    %2595 = vmatpush2.msra.mxu0 0.0
    %2596 = vmatprep.subr.mxu0 0.0
    %2597 = vmatpush2.msra.mxu0 0.0
    %2598 = vmatprep.subr.mxu0 0.0
    %2599 = vmatpush2.msra.mxu0 0.0
    %2600 = vmatprep.subr.mxu0 0.0
    %2601 = vmatpush2.msra.mxu0 0.0
    %2602 = vmatprep.subr.mxu0 0.0
    %2603 = vmatpush2.msra.mxu0 0.0
    %2604 = vmatprep.subr.mxu0 0.0
    %2605 = vmatpush2.msra.mxu0 0.0
    %2606 = vmatprep.subr.mxu0 0.0
    %2607 = vmatpush2.msra.mxu0 0.0
    %2608 = vmatprep.subr.mxu0 0.0
    %2609 = vmatpush2.msra.mxu0 0.0
    %2610 = vmatprep.subr.mxu0 0.0
    %2611 = vmatpush2.msra.mxu0 0.0
    %2612 = vmatprep.subr.mxu0 0.0
    %2613 = vmatpush2.msra.mxu0 0.0
    %2614 = vmatprep.subr.mxu0 0.0
    %2615 = vmatpush2.msra.mxu0 0.0
    %2616 = vmatprep.subr.mxu0 0.0
    %2617 = vmatpush2.msra.mxu0 0.0
    %2618 = vmatprep.subr.mxu0 0.0
    %2619 = vmatpush2.msra.mxu0 0.0
    %2620 = vmatprep.subr.mxu0 0.0
    %2621 = vmatpush2.msra.mxu0 0.0
    %2622 = vmatprep.subr.mxu0 0.0
    %2623 = vmatpush2.msra.mxu0 0.0
    %2624 = vmatprep.mubr.f32.mxu0 0.0
    %2625 = vmatmul.mubr.f32.gmra.mxu0 %v2558
    %v2626 = vpop.f32.mrf.mxu0
    %v2627 = vadd.f32 %v168, %v2626
    %v2628 = vpop.f32.mrf.mxu0
    %2629 = vdwg.mxu0
    %v2630 = vmax.f32 %v2627, 0.0
    %v2631 = vsel %vm244, %v2630, 0.0
    %2632 = vadd.xlane.f32.xlu0 %v2631
    %v2633 = vpop.xlane.xlu0 %2632
    %v2634 = vmul.f32 %v2633, %v248
    %v2635 = vsub.f32 %v2630, %v2634
    %v2636 = vmul.f32 %v2635, %v2635
    %v2637 = vsel %vm244, %v2636, 0.0
    %2638 = vadd.xlane.f32.xlu0 %v2637
    %v2639 = vpop.xlane.xlu0 %2638
    %v2640 = vmul.f32 %v2639, %v248
    %v2641 = vadd.f32 %v2640, 1e-05
    %v2642 = vrsqrt.pop %v2641
    %v2643 = vmul.f32 %v2635, %v2642
    %v2644 = vmul.f32 %v2643, %v262
    %v2645 = vadd.f32 %v2644, %v267
    %v2647 = vsel %vm273, %v2645, 0
    %2649 = vmatprep.subr.mxu0 0.0
    %2650 = vmatpush1.msra.mxu0 0.0
    %2651 = vmatprep.subr.mxu0 0.0
    %2652 = vmatpush1.msra.mxu0 0.0
    %2653 = vmatprep.subr.mxu0 0.0
    %2654 = vmatpush1.msra.mxu0 0.0
    %2655 = vmatprep.subr.mxu0 0.0
    %2656 = vmatpush1.msra.mxu0 0.0
    %2657 = vmatprep.subr.mxu0 0.0
    %2658 = vmatpush1.msra.mxu0 0.0
    %2659 = vmatprep.subr.mxu0 0.0
    %2660 = vmatpush1.msra.mxu0 0.0
    %2661 = vmatprep.subr.mxu0 0.0
    %2662 = vmatpush1.msra.mxu0 0.0
    %2663 = vmatprep.subr.mxu0 0.0
    %2664 = vmatpush1.msra.mxu0 0.0
    %2665 = vmatprep.subr.mxu0 0.0
    %2666 = vmatpush1.msra.mxu0 0.0
    %2667 = vmatprep.subr.mxu0 0.0
    %2668 = vmatpush1.msra.mxu0 0.0
    %2669 = vmatprep.subr.mxu0 0.0
    %2670 = vmatpush1.msra.mxu0 0.0
    %2671 = vmatprep.subr.mxu0 0.0
    %2672 = vmatpush1.msra.mxu0 0.0
    %2673 = vmatprep.subr.mxu0 0.0
    %2674 = vmatpush1.msra.mxu0 %v114
    %2675 = vmatprep.subr.mxu0 0.0
    %2676 = vmatpush1.msra.mxu0 %v113
    %2677 = vmatprep.subr.mxu0 0.0
    %2678 = vmatpush1.msra.mxu0 %v112
    %2679 = vmatprep.subr.mxu0 0.0
    %2680 = vmatpush1.msra.mxu0 %v111
    %2681 = vmatprep.subr.mxu0 0.0
    %2682 = vmatpush2.msra.mxu0 0.0
    %2683 = vmatprep.subr.mxu0 0.0
    %2684 = vmatpush2.msra.mxu0 0.0
    %2685 = vmatprep.subr.mxu0 0.0
    %2686 = vmatpush2.msra.mxu0 0.0
    %2687 = vmatprep.subr.mxu0 0.0
    %2688 = vmatpush2.msra.mxu0 0.0
    %2689 = vmatprep.subr.mxu0 0.0
    %2690 = vmatpush2.msra.mxu0 0.0
    %2691 = vmatprep.subr.mxu0 0.0
    %2692 = vmatpush2.msra.mxu0 0.0
    %2693 = vmatprep.subr.mxu0 0.0
    %2694 = vmatpush2.msra.mxu0 0.0
    %2695 = vmatprep.subr.mxu0 0.0
    %2696 = vmatpush2.msra.mxu0 0.0
    %2697 = vmatprep.subr.mxu0 0.0
    %2698 = vmatpush2.msra.mxu0 0.0
    %2699 = vmatprep.subr.mxu0 0.0
    %2700 = vmatpush2.msra.mxu0 0.0
    %2701 = vmatprep.subr.mxu0 0.0
    %2702 = vmatpush2.msra.mxu0 0.0
    %2703 = vmatprep.subr.mxu0 0.0
    %2704 = vmatpush2.msra.mxu0 0.0
    %2705 = vmatprep.subr.mxu0 0.0
    %2706 = vmatpush2.msra.mxu0 0.0
    %2707 = vmatprep.subr.mxu0 0.0
    %2708 = vmatpush2.msra.mxu0 0.0
    %2709 = vmatprep.subr.mxu0 0.0
    %2710 = vmatpush2.msra.mxu0 0.0
    %2711 = vmatprep.subr.mxu0 0.0
    %2712 = vmatpush2.msra.mxu0 0.0
    %2713 = vmatprep.mubr.f32.mxu0 0.0
    %2714 = vmatmul.mubr.f32.gmra.mxu0 %v2647
    %v2715 = vpop.f32.mrf.mxu0
    %v2716 = vadd.f32 %v272, %v2715
    %v2717 = vpop.f32.mrf.mxu0
    %2718 = vdwg.mxu0
    %v2719 = vmax.f32 %v2716, 0.0
    %v2720 = vsel %vm244, %v2719, 0.0
    %2721 = vadd.xlane.f32.xlu0 %v2720
    %v2722 = vpop.xlane.xlu0 %2721
    %v2723 = vmul.f32 %v2722, %v248
    %v2724 = vsub.f32 %v2719, %v2723
    %v2725 = vmul.f32 %v2724, %v2724
    %v2726 = vsel %vm244, %v2725, 0.0
    %2727 = vadd.xlane.f32.xlu0 %v2726
    %v2728 = vpop.xlane.xlu0 %2727
    %v2729 = vmul.f32 %v2728, %v248
    %v2730 = vadd.f32 %v2729, 1e-05
    %v2731 = vrsqrt.pop %v2730
    %v2732 = vmul.f32 %v2724, %v2731
    %v2733 = vmul.f32 %v2732, %v364
    %v2734 = vadd.f32 %v2733, %v369
    %v2736 = vsel %vm273, %v2734, 0
    %2738 = vmatprep.subr.mxu0 0.0
    %2739 = vmatpush1.msra.mxu0 0.0
    %2740 = vmatprep.subr.mxu0 0.0
    %2741 = vmatpush1.msra.mxu0 0.0
    %2742 = vmatprep.subr.mxu0 0.0
    %2743 = vmatpush1.msra.mxu0 0.0
    %2744 = vmatprep.subr.mxu0 0.0
    %2745 = vmatpush1.msra.mxu0 0.0
    %2746 = vmatprep.subr.mxu0 0.0
    %2747 = vmatpush1.msra.mxu0 0.0
    %2748 = vmatprep.subr.mxu0 0.0
    %2749 = vmatpush1.msra.mxu0 0.0
    %2750 = vmatprep.subr.mxu0 0.0
    %2751 = vmatpush1.msra.mxu0 0.0
    %2752 = vmatprep.subr.mxu0 0.0
    %2753 = vmatpush1.msra.mxu0 0.0
    %2754 = vmatprep.subr.mxu0 0.0
    %2755 = vmatpush1.msra.mxu0 0.0
    %2756 = vmatprep.subr.mxu0 0.0
    %2757 = vmatpush1.msra.mxu0 0.0
    %2758 = vmatprep.subr.mxu0 0.0
    %2759 = vmatpush1.msra.mxu0 0.0
    %2760 = vmatprep.subr.mxu0 0.0
    %2761 = vmatpush1.msra.mxu0 0.0
    %2762 = vmatprep.subr.mxu0 0.0
    %2763 = vmatpush1.msra.mxu0 %v118
    %2764 = vmatprep.subr.mxu0 0.0
    %2765 = vmatpush1.msra.mxu0 %v117
    %2766 = vmatprep.subr.mxu0 0.0
    %2767 = vmatpush1.msra.mxu0 %v116
    %2768 = vmatprep.subr.mxu0 0.0
    %2769 = vmatpush1.msra.mxu0 %v115
    %2770 = vmatprep.subr.mxu0 0.0
    %2771 = vmatpush2.msra.mxu0 0.0
    %2772 = vmatprep.subr.mxu0 0.0
    %2773 = vmatpush2.msra.mxu0 0.0
    %2774 = vmatprep.subr.mxu0 0.0
    %2775 = vmatpush2.msra.mxu0 0.0
    %2776 = vmatprep.subr.mxu0 0.0
    %2777 = vmatpush2.msra.mxu0 0.0
    %2778 = vmatprep.subr.mxu0 0.0
    %2779 = vmatpush2.msra.mxu0 0.0
    %2780 = vmatprep.subr.mxu0 0.0
    %2781 = vmatpush2.msra.mxu0 0.0
    %2782 = vmatprep.subr.mxu0 0.0
    %2783 = vmatpush2.msra.mxu0 0.0
    %2784 = vmatprep.subr.mxu0 0.0
    %2785 = vmatpush2.msra.mxu0 0.0
    %2786 = vmatprep.subr.mxu0 0.0
    %2787 = vmatpush2.msra.mxu0 0.0
    %2788 = vmatprep.subr.mxu0 0.0
    %2789 = vmatpush2.msra.mxu0 0.0
    %2790 = vmatprep.subr.mxu0 0.0
    %2791 = vmatpush2.msra.mxu0 0.0
    %2792 = vmatprep.subr.mxu0 0.0
    %2793 = vmatpush2.msra.mxu0 0.0
    %2794 = vmatprep.subr.mxu0 0.0
    %2795 = vmatpush2.msra.mxu0 0.0
    %2796 = vmatprep.subr.mxu0 0.0
    %2797 = vmatpush2.msra.mxu0 0.0
    %2798 = vmatprep.subr.mxu0 0.0
    %2799 = vmatpush2.msra.mxu0 0.0
    %2800 = vmatprep.subr.mxu0 0.0
    %2801 = vmatpush2.msra.mxu0 0.0
    %2802 = vmatprep.mubr.f32.mxu0 0.0
    %2803 = vmatmul.mubr.f32.gmra.mxu0 %v2736
    %v2804 = vpop.f32.mrf.mxu0
    %v2805 = vadd.f32 %v374, %v2804
    %v2806 = vpop.f32.mrf.mxu0
    %2807 = vdwg.mxu0
    %v2808 = vsel %vm273, %v2442, 0
    %2810 = vmatprep.subr.mxu0 0.0
    %2811 = vmatpush1.msra.mxu0 0.0
    %2812 = vmatprep.subr.mxu0 0.0
    %2813 = vmatpush1.msra.mxu0 0.0
    %2814 = vmatprep.subr.mxu0 0.0
    %2815 = vmatpush1.msra.mxu0 0.0
    %2816 = vmatprep.subr.mxu0 0.0
    %2817 = vmatpush1.msra.mxu0 0.0
    %2818 = vmatprep.subr.mxu0 0.0
    %2819 = vmatpush1.msra.mxu0 0.0
    %2820 = vmatprep.subr.mxu0 0.0
    %2821 = vmatpush1.msra.mxu0 0.0
    %2822 = vmatprep.subr.mxu0 0.0
    %2823 = vmatpush1.msra.mxu0 0.0
    %2824 = vmatprep.subr.mxu0 0.0
    %2825 = vmatpush1.msra.mxu0 0.0
    %2826 = vmatprep.subr.mxu0 0.0
    %2827 = vmatpush1.msra.mxu0 0.0
    %2828 = vmatprep.subr.mxu0 0.0
    %2829 = vmatpush1.msra.mxu0 0.0
    %2830 = vmatprep.subr.mxu0 0.0
    %2831 = vmatpush1.msra.mxu0 0.0
    %2832 = vmatprep.subr.mxu0 0.0
    %2833 = vmatpush1.msra.mxu0 0.0
    %2834 = vmatprep.subr.mxu0 0.0
    %2835 = vmatpush1.msra.mxu0 %v122
    %2836 = vmatprep.subr.mxu0 0.0
    %2837 = vmatpush1.msra.mxu0 %v121
    %2838 = vmatprep.subr.mxu0 0.0
    %2839 = vmatpush1.msra.mxu0 %v120
    %2840 = vmatprep.subr.mxu0 0.0
    %2841 = vmatpush1.msra.mxu0 %v119
    %2842 = vmatprep.subr.mxu0 0.0
    %2843 = vmatpush2.msra.mxu0 0.0
    %2844 = vmatprep.subr.mxu0 0.0
    %2845 = vmatpush2.msra.mxu0 0.0
    %2846 = vmatprep.subr.mxu0 0.0
    %2847 = vmatpush2.msra.mxu0 0.0
    %2848 = vmatprep.subr.mxu0 0.0
    %2849 = vmatpush2.msra.mxu0 0.0
    %2850 = vmatprep.subr.mxu0 0.0
    %2851 = vmatpush2.msra.mxu0 0.0
    %2852 = vmatprep.subr.mxu0 0.0
    %2853 = vmatpush2.msra.mxu0 0.0
    %2854 = vmatprep.subr.mxu0 0.0
    %2855 = vmatpush2.msra.mxu0 0.0
    %2856 = vmatprep.subr.mxu0 0.0
    %2857 = vmatpush2.msra.mxu0 0.0
    %2858 = vmatprep.subr.mxu0 0.0
    %2859 = vmatpush2.msra.mxu0 0.0
    %2860 = vmatprep.subr.mxu0 0.0
    %2861 = vmatpush2.msra.mxu0 0.0
    %2862 = vmatprep.subr.mxu0 0.0
    %2863 = vmatpush2.msra.mxu0 0.0
    %2864 = vmatprep.subr.mxu0 0.0
    %2865 = vmatpush2.msra.mxu0 0.0
    %2866 = vmatprep.subr.mxu0 0.0
    %2867 = vmatpush2.msra.mxu0 0.0
    %2868 = vmatprep.subr.mxu0 0.0
    %2869 = vmatpush2.msra.mxu0 0.0
    %2870 = vmatprep.subr.mxu0 0.0
    %2871 = vmatpush2.msra.mxu0 0.0
    %2872 = vmatprep.subr.mxu0 0.0
    %2873 = vmatpush2.msra.mxu0 0.0
    %2874 = vmatprep.mubr.f32.mxu0 0.0
    %2875 = vmatmul.mubr.f32.gmra.mxu0 %v2808
    %v2876 = vpop.f32.mrf.mxu0
    %v2877 = vadd.f32 %v451, %v2876
    %v2878 = vpop.f32.mrf.mxu0
    %2879 = vdwg.mxu0
    %v2880 = vadd.f32 %v2805, %v2877
    %v2881 = vxor.u32 %v2880, 2147483648
    %v2882 = vmul.f32 %v2881, 1.442695
    %v2883 = vpow.pop %v2882
    %v2884 = vadd.f32 %v2883, 1.0
    %v2885 = vrcp.pop %v2884
    %v2886 = vmul.f32 1.0, %v2885
    %2888 = vrot.lane.b32.xlu0 %v2877, 64
    %v2889 = vpop.permute.xlu0 %2888
    %v2891 = vmul.f32 %v2886, %v2889
    %2893 = vrot.lane.b32.xlu0 %v2891, 64
    %v2894 = vpop.permute.xlu0 %2893
    %v2896 = vadd.f32 %v2805, %v2894
    %v2897 = vtanh.pop %v2896
    %v2898 = vsub.f32 1.0, %v2886
    %2900 = vrot.lane.b32.xlu0 %v2897, 96
    %v2901 = vpop.permute.xlu0 %2900
    %v2903 = vmul.f32 %v2898, %v2901
    %v2904 = vmul.f32 %v2886, %v2439
    %v2905 = vadd.f32 %v2903, %v2904
    %2907 = vrot.lane.b32.xlu0 %v2905, 96
    %v2908 = vpop.permute.xlu0 %2907
    %v2910 = vsel %vm244, %v2908, 0.0
    %2911 = vadd.xlane.f32.xlu0 %v2910
    %v2912 = vpop.xlane.xlu0 %2911
    %v2913 = vmul.f32 %v2912, %v248
    %v2914 = vsub.f32 %v2905, %v2913
    %v2915 = vmul.f32 %v2914, %v2914
    %2917 = vrot.lane.b32.xlu0 %v2915, 96
    %v2918 = vpop.permute.xlu0 %2917
    %v2920 = vsel %vm244, %v2918, 0.0
    %2921 = vadd.xlane.f32.xlu0 %v2920
    %v2922 = vpop.xlane.xlu0 %2921
    %v2923 = vmul.f32 %v2922, %v248
    %v2924 = vadd.f32 %v2923, 1e-05
    %v2925 = vrsqrt.pop %v2924
    %v2926 = vmul.f32 %v2914, %v2925
    %v2927 = vmul.f32 %v2926, %v581
    %v2928 = vadd.f32 %v2927, %v590
    %2930 = vrot.lane.b32.xlu0 %v2928, 96
    %v2931 = vpop.permute.xlu0 %2930
    %v2932 = vsel %vm273, %v2931, 0
    %2934 = vmatprep.subr.mxu0 0.0
    %2935 = vmatpush1.msra.mxu0 0.0
    %2936 = vmatprep.subr.mxu0 0.0
    %2937 = vmatpush1.msra.mxu0 0.0
    %2938 = vmatprep.subr.mxu0 0.0
    %2939 = vmatpush1.msra.mxu0 0.0
    %2940 = vmatprep.subr.mxu0 0.0
    %2941 = vmatpush1.msra.mxu0 0.0
    %2942 = vmatprep.subr.mxu0 0.0
    %2943 = vmatpush1.msra.mxu0 0.0
    %2944 = vmatprep.subr.mxu0 0.0
    %2945 = vmatpush1.msra.mxu0 0.0
    %2946 = vmatprep.subr.mxu0 0.0
    %2947 = vmatpush1.msra.mxu0 0.0
    %2948 = vmatprep.subr.mxu0 0.0
    %2949 = vmatpush1.msra.mxu0 0.0
    %2950 = vmatprep.subr.mxu0 0.0
    %2951 = vmatpush1.msra.mxu0 0.0
    %2952 = vmatprep.subr.mxu0 0.0
    %2953 = vmatpush1.msra.mxu0 0.0
    %2954 = vmatprep.subr.mxu0 0.0
    %2955 = vmatpush1.msra.mxu0 0.0
    %2956 = vmatprep.subr.mxu0 0.0
    %2957 = vmatpush1.msra.mxu0 0.0
    %2958 = vmatprep.subr.mxu0 0.0
    %2959 = vmatpush1.msra.mxu0 %v128
    %2960 = vmatprep.subr.mxu0 0.0
    %2961 = vmatpush1.msra.mxu0 %v127
    %2962 = vmatprep.subr.mxu0 0.0
    %2963 = vmatpush1.msra.mxu0 %v126
    %2964 = vmatprep.subr.mxu0 0.0
    %2965 = vmatpush1.msra.mxu0 %v125
    %2966 = vmatprep.subr.mxu0 0.0
    %2967 = vmatpush2.msra.mxu0 0.0
    %2968 = vmatprep.subr.mxu0 0.0
    %2969 = vmatpush2.msra.mxu0 0.0
    %2970 = vmatprep.subr.mxu0 0.0
    %2971 = vmatpush2.msra.mxu0 0.0
    %2972 = vmatprep.subr.mxu0 0.0
    %2973 = vmatpush2.msra.mxu0 0.0
    %2974 = vmatprep.subr.mxu0 0.0
    %2975 = vmatpush2.msra.mxu0 0.0
    %2976 = vmatprep.subr.mxu0 0.0
    %2977 = vmatpush2.msra.mxu0 0.0
    %2978 = vmatprep.subr.mxu0 0.0
    %2979 = vmatpush2.msra.mxu0 0.0
    %2980 = vmatprep.subr.mxu0 0.0
    %2981 = vmatpush2.msra.mxu0 0.0
    %2982 = vmatprep.subr.mxu0 0.0
    %2983 = vmatpush2.msra.mxu0 0.0
    %2984 = vmatprep.subr.mxu0 0.0
    %2985 = vmatpush2.msra.mxu0 0.0
    %2986 = vmatprep.subr.mxu0 0.0
    %2987 = vmatpush2.msra.mxu0 0.0
    %2988 = vmatprep.subr.mxu0 0.0
    %2989 = vmatpush2.msra.mxu0 0.0
    %2990 = vmatprep.subr.mxu0 0.0
    %2991 = vmatpush2.msra.mxu0 0.0
    %2992 = vmatprep.subr.mxu0 0.0
    %2993 = vmatpush2.msra.mxu0 0.0
    %2994 = vmatprep.subr.mxu0 0.0
    %2995 = vmatpush2.msra.mxu0 0.0
    %2996 = vmatprep.subr.mxu0 0.0
    %2997 = vmatpush2.msra.mxu0 0.0
    %2998 = vmatprep.mubr.f32.mxu0 0.0
    %2999 = vmatmul.mubr.f32.gmra.mxu0 %v2932
    %v3000 = vpop.f32.mrf.mxu0
    %v3001 = vadd.f32 %v597, %v3000
    %v3002 = vpop.f32.mrf.mxu0
    %3003 = vdwg.mxu0
    %s3004 = scalar_lea.vmem %s11, 20
    %3005 = vst.msk [vmem:[%s3004] sm:$0xf] %vm674, %v3001
    %s3006 = scalar_lea.vmem %s0, 24
    %v3007 = vld [vmem:[%s3006] sm:$0xf]
    %v3008 = vsel %vm140, %v3007, 0.0
    %3009 = vadd.xlane.f32.xlu0 %v3008
    %v3010 = vpop.xlane.xlu0 %3009
    %v3011 = vmul.f32 %v3010, %v144
    %v3012 = vsub.f32 %v3007, %v3011
    %v3013 = vmul.f32 %v3012, %v3012
    %v3014 = vsel %vm140, %v3013, 0.0
    %3015 = vadd.xlane.f32.xlu0 %v3014
    %v3016 = vpop.xlane.xlu0 %3015
    %v3017 = vmul.f32 %v3016, %v144
    %v3018 = vadd.f32 %v3017, 1e-05
    %v3019 = vrsqrt.pop %v3018
    %v3020 = vmul.f32 %v3012, %v3019
    %v3021 = vmul.f32 %v3020, %v158
    %v3022 = vadd.f32 %v3021, %v163
    %v3024 = vsel %vm169, %v3022, 0
    %3026 = vmatprep.subr.mxu0 0.0
    %3027 = vmatpush1.msra.mxu0 0.0
    %3028 = vmatprep.subr.mxu0 0.0
    %3029 = vmatpush1.msra.mxu0 0.0
    %3030 = vmatprep.subr.mxu0 0.0
    %3031 = vmatpush1.msra.mxu0 0.0
    %3032 = vmatprep.subr.mxu0 0.0
    %3033 = vmatpush1.msra.mxu0 0.0
    %3034 = vmatprep.subr.mxu0 0.0
    %3035 = vmatpush1.msra.mxu0 0.0
    %3036 = vmatprep.subr.mxu0 0.0
    %3037 = vmatpush1.msra.mxu0 0.0
    %3038 = vmatprep.subr.mxu0 0.0
    %3039 = vmatpush1.msra.mxu0 0.0
    %3040 = vmatprep.subr.mxu0 0.0
    %3041 = vmatpush1.msra.mxu0 0.0
    %3042 = vmatprep.subr.mxu0 0.0
    %3043 = vmatpush1.msra.mxu0 0.0
    %3044 = vmatprep.subr.mxu0 0.0
    %3045 = vmatpush1.msra.mxu0 0.0
    %3046 = vmatprep.subr.mxu0 0.0
    %3047 = vmatpush1.msra.mxu0 0.0
    %3048 = vmatprep.subr.mxu0 0.0
    %3049 = vmatpush1.msra.mxu0 0.0
    %3050 = vmatprep.subr.mxu0 0.0
    %3051 = vmatpush1.msra.mxu0 0.0
    %3052 = vmatprep.subr.mxu0 0.0
    %3053 = vmatpush1.msra.mxu0 0.0
    %3054 = vmatprep.subr.mxu0 0.0
    %3055 = vmatpush1.msra.mxu0 %v110
    %3056 = vmatprep.subr.mxu0 0.0
    %3057 = vmatpush1.msra.mxu0 %v109
    %3058 = vmatprep.subr.mxu0 0.0
    %3059 = vmatpush2.msra.mxu0 0.0
    %3060 = vmatprep.subr.mxu0 0.0
    %3061 = vmatpush2.msra.mxu0 0.0
    %3062 = vmatprep.subr.mxu0 0.0
    %3063 = vmatpush2.msra.mxu0 0.0
    %3064 = vmatprep.subr.mxu0 0.0
    %3065 = vmatpush2.msra.mxu0 0.0
    %3066 = vmatprep.subr.mxu0 0.0
    %3067 = vmatpush2.msra.mxu0 0.0
    %3068 = vmatprep.subr.mxu0 0.0
    %3069 = vmatpush2.msra.mxu0 0.0
    %3070 = vmatprep.subr.mxu0 0.0
    %3071 = vmatpush2.msra.mxu0 0.0
    %3072 = vmatprep.subr.mxu0 0.0
    %3073 = vmatpush2.msra.mxu0 0.0
    %3074 = vmatprep.subr.mxu0 0.0
    %3075 = vmatpush2.msra.mxu0 0.0
    %3076 = vmatprep.subr.mxu0 0.0
    %3077 = vmatpush2.msra.mxu0 0.0
    %3078 = vmatprep.subr.mxu0 0.0
    %3079 = vmatpush2.msra.mxu0 0.0
    %3080 = vmatprep.subr.mxu0 0.0
    %3081 = vmatpush2.msra.mxu0 0.0
    %3082 = vmatprep.subr.mxu0 0.0
    %3083 = vmatpush2.msra.mxu0 0.0
    %3084 = vmatprep.subr.mxu0 0.0
    %3085 = vmatpush2.msra.mxu0 0.0
    %3086 = vmatprep.subr.mxu0 0.0
    %3087 = vmatpush2.msra.mxu0 0.0
    %3088 = vmatprep.subr.mxu0 0.0
    %3089 = vmatpush2.msra.mxu0 0.0
    %3090 = vmatprep.mubr.f32.mxu0 0.0
    %3091 = vmatmul.mubr.f32.gmra.mxu0 %v3024
    %v3092 = vpop.f32.mrf.mxu0
    %v3093 = vadd.f32 %v168, %v3092
    %v3094 = vpop.f32.mrf.mxu0
    %3095 = vdwg.mxu0
    %v3096 = vmax.f32 %v3093, 0.0
    %v3097 = vsel %vm244, %v3096, 0.0
    %3098 = vadd.xlane.f32.xlu0 %v3097
    %v3099 = vpop.xlane.xlu0 %3098
    %v3100 = vmul.f32 %v3099, %v248
    %v3101 = vsub.f32 %v3096, %v3100
    %v3102 = vmul.f32 %v3101, %v3101
    %v3103 = vsel %vm244, %v3102, 0.0
    %3104 = vadd.xlane.f32.xlu0 %v3103
    %v3105 = vpop.xlane.xlu0 %3104
    %v3106 = vmul.f32 %v3105, %v248
    %v3107 = vadd.f32 %v3106, 1e-05
    %v3108 = vrsqrt.pop %v3107
    %v3109 = vmul.f32 %v3101, %v3108
    %v3110 = vmul.f32 %v3109, %v262
    %v3111 = vadd.f32 %v3110, %v267
    %v3113 = vsel %vm273, %v3111, 0
    %3115 = vmatprep.subr.mxu0 0.0
    %3116 = vmatpush1.msra.mxu0 0.0
    %3117 = vmatprep.subr.mxu0 0.0
    %3118 = vmatpush1.msra.mxu0 0.0
    %3119 = vmatprep.subr.mxu0 0.0
    %3120 = vmatpush1.msra.mxu0 0.0
    %3121 = vmatprep.subr.mxu0 0.0
    %3122 = vmatpush1.msra.mxu0 0.0
    %3123 = vmatprep.subr.mxu0 0.0
    %3124 = vmatpush1.msra.mxu0 0.0
    %3125 = vmatprep.subr.mxu0 0.0
    %3126 = vmatpush1.msra.mxu0 0.0
    %3127 = vmatprep.subr.mxu0 0.0
    %3128 = vmatpush1.msra.mxu0 0.0
    %3129 = vmatprep.subr.mxu0 0.0
    %3130 = vmatpush1.msra.mxu0 0.0
    %3131 = vmatprep.subr.mxu0 0.0
    %3132 = vmatpush1.msra.mxu0 0.0
    %3133 = vmatprep.subr.mxu0 0.0
    %3134 = vmatpush1.msra.mxu0 0.0
    %3135 = vmatprep.subr.mxu0 0.0
    %3136 = vmatpush1.msra.mxu0 0.0
    %3137 = vmatprep.subr.mxu0 0.0
    %3138 = vmatpush1.msra.mxu0 0.0
    %3139 = vmatprep.subr.mxu0 0.0
    %3140 = vmatpush1.msra.mxu0 %v114
    %3141 = vmatprep.subr.mxu0 0.0
    %3142 = vmatpush1.msra.mxu0 %v113
    %3143 = vmatprep.subr.mxu0 0.0
    %3144 = vmatpush1.msra.mxu0 %v112
    %3145 = vmatprep.subr.mxu0 0.0
    %3146 = vmatpush1.msra.mxu0 %v111
    %3147 = vmatprep.subr.mxu0 0.0
    %3148 = vmatpush2.msra.mxu0 0.0
    %3149 = vmatprep.subr.mxu0 0.0
    %3150 = vmatpush2.msra.mxu0 0.0
    %3151 = vmatprep.subr.mxu0 0.0
    %3152 = vmatpush2.msra.mxu0 0.0
    %3153 = vmatprep.subr.mxu0 0.0
    %3154 = vmatpush2.msra.mxu0 0.0
    %3155 = vmatprep.subr.mxu0 0.0
    %3156 = vmatpush2.msra.mxu0 0.0
    %3157 = vmatprep.subr.mxu0 0.0
    %3158 = vmatpush2.msra.mxu0 0.0
    %3159 = vmatprep.subr.mxu0 0.0
    %3160 = vmatpush2.msra.mxu0 0.0
    %3161 = vmatprep.subr.mxu0 0.0
    %3162 = vmatpush2.msra.mxu0 0.0
    %3163 = vmatprep.subr.mxu0 0.0
    %3164 = vmatpush2.msra.mxu0 0.0
    %3165 = vmatprep.subr.mxu0 0.0
    %3166 = vmatpush2.msra.mxu0 0.0
    %3167 = vmatprep.subr.mxu0 0.0
    %3168 = vmatpush2.msra.mxu0 0.0
    %3169 = vmatprep.subr.mxu0 0.0
    %3170 = vmatpush2.msra.mxu0 0.0
    %3171 = vmatprep.subr.mxu0 0.0
    %3172 = vmatpush2.msra.mxu0 0.0
    %3173 = vmatprep.subr.mxu0 0.0
    %3174 = vmatpush2.msra.mxu0 0.0
    %3175 = vmatprep.subr.mxu0 0.0
    %3176 = vmatpush2.msra.mxu0 0.0
    %3177 = vmatprep.subr.mxu0 0.0
    %3178 = vmatpush2.msra.mxu0 0.0
    %3179 = vmatprep.mubr.f32.mxu0 0.0
    %3180 = vmatmul.mubr.f32.gmra.mxu0 %v3113
    %v3181 = vpop.f32.mrf.mxu0
    %v3182 = vadd.f32 %v272, %v3181
    %v3183 = vpop.f32.mrf.mxu0
    %3184 = vdwg.mxu0
    %v3185 = vmax.f32 %v3182, 0.0
    %v3186 = vsel %vm244, %v3185, 0.0
    %3187 = vadd.xlane.f32.xlu0 %v3186
    %v3188 = vpop.xlane.xlu0 %3187
    %v3189 = vmul.f32 %v3188, %v248
    %v3190 = vsub.f32 %v3185, %v3189
    %v3191 = vmul.f32 %v3190, %v3190
    %v3192 = vsel %vm244, %v3191, 0.0
    %3193 = vadd.xlane.f32.xlu0 %v3192
    %v3194 = vpop.xlane.xlu0 %3193
    %v3195 = vmul.f32 %v3194, %v248
    %v3196 = vadd.f32 %v3195, 1e-05
    %v3197 = vrsqrt.pop %v3196
    %v3198 = vmul.f32 %v3190, %v3197
    %v3199 = vmul.f32 %v3198, %v364
    %v3200 = vadd.f32 %v3199, %v369
    %v3202 = vsel %vm273, %v3200, 0
    %3204 = vmatprep.subr.mxu0 0.0
    %3205 = vmatpush1.msra.mxu0 0.0
    %3206 = vmatprep.subr.mxu0 0.0
    %3207 = vmatpush1.msra.mxu0 0.0
    %3208 = vmatprep.subr.mxu0 0.0
    %3209 = vmatpush1.msra.mxu0 0.0
    %3210 = vmatprep.subr.mxu0 0.0
    %3211 = vmatpush1.msra.mxu0 0.0
    %3212 = vmatprep.subr.mxu0 0.0
    %3213 = vmatpush1.msra.mxu0 0.0
    %3214 = vmatprep.subr.mxu0 0.0
    %3215 = vmatpush1.msra.mxu0 0.0
    %3216 = vmatprep.subr.mxu0 0.0
    %3217 = vmatpush1.msra.mxu0 0.0
    %3218 = vmatprep.subr.mxu0 0.0
    %3219 = vmatpush1.msra.mxu0 0.0
    %3220 = vmatprep.subr.mxu0 0.0
    %3221 = vmatpush1.msra.mxu0 0.0
    %3222 = vmatprep.subr.mxu0 0.0
    %3223 = vmatpush1.msra.mxu0 0.0
    %3224 = vmatprep.subr.mxu0 0.0
    %3225 = vmatpush1.msra.mxu0 0.0
    %3226 = vmatprep.subr.mxu0 0.0
    %3227 = vmatpush1.msra.mxu0 0.0
    %3228 = vmatprep.subr.mxu0 0.0
    %3229 = vmatpush1.msra.mxu0 %v118
    %3230 = vmatprep.subr.mxu0 0.0
    %3231 = vmatpush1.msra.mxu0 %v117
    %3232 = vmatprep.subr.mxu0 0.0
    %3233 = vmatpush1.msra.mxu0 %v116
    %3234 = vmatprep.subr.mxu0 0.0
    %3235 = vmatpush1.msra.mxu0 %v115
    %3236 = vmatprep.subr.mxu0 0.0
    %3237 = vmatpush2.msra.mxu0 0.0
    %3238 = vmatprep.subr.mxu0 0.0
    %3239 = vmatpush2.msra.mxu0 0.0
    %3240 = vmatprep.subr.mxu0 0.0
    %3241 = vmatpush2.msra.mxu0 0.0
    %3242 = vmatprep.subr.mxu0 0.0
    %3243 = vmatpush2.msra.mxu0 0.0
    %3244 = vmatprep.subr.mxu0 0.0
    %3245 = vmatpush2.msra.mxu0 0.0
    %3246 = vmatprep.subr.mxu0 0.0
    %3247 = vmatpush2.msra.mxu0 0.0
    %3248 = vmatprep.subr.mxu0 0.0
    %3249 = vmatpush2.msra.mxu0 0.0
    %3250 = vmatprep.subr.mxu0 0.0
    %3251 = vmatpush2.msra.mxu0 0.0
    %3252 = vmatprep.subr.mxu0 0.0
    %3253 = vmatpush2.msra.mxu0 0.0
    %3254 = vmatprep.subr.mxu0 0.0
    %3255 = vmatpush2.msra.mxu0 0.0
    %3256 = vmatprep.subr.mxu0 0.0
    %3257 = vmatpush2.msra.mxu0 0.0
    %3258 = vmatprep.subr.mxu0 0.0
    %3259 = vmatpush2.msra.mxu0 0.0
    %3260 = vmatprep.subr.mxu0 0.0
    %3261 = vmatpush2.msra.mxu0 0.0
    %3262 = vmatprep.subr.mxu0 0.0
    %3263 = vmatpush2.msra.mxu0 0.0
    %3264 = vmatprep.subr.mxu0 0.0
    %3265 = vmatpush2.msra.mxu0 0.0
    %3266 = vmatprep.subr.mxu0 0.0
    %3267 = vmatpush2.msra.mxu0 0.0
    %3268 = vmatprep.mubr.f32.mxu0 0.0
    %3269 = vmatmul.mubr.f32.gmra.mxu0 %v3202
    %v3270 = vpop.f32.mrf.mxu0
    %v3271 = vadd.f32 %v374, %v3270
    %v3272 = vpop.f32.mrf.mxu0
    %3273 = vdwg.mxu0
    %v3274 = vsel %vm273, %v2908, 0
    %3276 = vmatprep.subr.mxu0 0.0
    %3277 = vmatpush1.msra.mxu0 0.0
    %3278 = vmatprep.subr.mxu0 0.0
    %3279 = vmatpush1.msra.mxu0 0.0
    %3280 = vmatprep.subr.mxu0 0.0
    %3281 = vmatpush1.msra.mxu0 0.0
    %3282 = vmatprep.subr.mxu0 0.0
    %3283 = vmatpush1.msra.mxu0 0.0
    %3284 = vmatprep.subr.mxu0 0.0
    %3285 = vmatpush1.msra.mxu0 0.0
    %3286 = vmatprep.subr.mxu0 0.0
    %3287 = vmatpush1.msra.mxu0 0.0
    %3288 = vmatprep.subr.mxu0 0.0
    %3289 = vmatpush1.msra.mxu0 0.0
    %3290 = vmatprep.subr.mxu0 0.0
    %3291 = vmatpush1.msra.mxu0 0.0
    %3292 = vmatprep.subr.mxu0 0.0
    %3293 = vmatpush1.msra.mxu0 0.0
    %3294 = vmatprep.subr.mxu0 0.0
    %3295 = vmatpush1.msra.mxu0 0.0
    %3296 = vmatprep.subr.mxu0 0.0
    %3297 = vmatpush1.msra.mxu0 0.0
    %3298 = vmatprep.subr.mxu0 0.0
    %3299 = vmatpush1.msra.mxu0 0.0
    %3300 = vmatprep.subr.mxu0 0.0
    %3301 = vmatpush1.msra.mxu0 %v122
    %3302 = vmatprep.subr.mxu0 0.0
    %3303 = vmatpush1.msra.mxu0 %v121
    %3304 = vmatprep.subr.mxu0 0.0
    %3305 = vmatpush1.msra.mxu0 %v120
    %3306 = vmatprep.subr.mxu0 0.0
    %3307 = vmatpush1.msra.mxu0 %v119
    %3308 = vmatprep.subr.mxu0 0.0
    %3309 = vmatpush2.msra.mxu0 0.0
    %3310 = vmatprep.subr.mxu0 0.0
    %3311 = vmatpush2.msra.mxu0 0.0
    %3312 = vmatprep.subr.mxu0 0.0
    %3313 = vmatpush2.msra.mxu0 0.0
    %3314 = vmatprep.subr.mxu0 0.0
    %3315 = vmatpush2.msra.mxu0 0.0
    %3316 = vmatprep.subr.mxu0 0.0
    %3317 = vmatpush2.msra.mxu0 0.0
    %3318 = vmatprep.subr.mxu0 0.0
    %3319 = vmatpush2.msra.mxu0 0.0
    %3320 = vmatprep.subr.mxu0 0.0
    %3321 = vmatpush2.msra.mxu0 0.0
    %3322 = vmatprep.subr.mxu0 0.0
    %3323 = vmatpush2.msra.mxu0 0.0
    %3324 = vmatprep.subr.mxu0 0.0
    %3325 = vmatpush2.msra.mxu0 0.0
    %3326 = vmatprep.subr.mxu0 0.0
    %3327 = vmatpush2.msra.mxu0 0.0
    %3328 = vmatprep.subr.mxu0 0.0
    %3329 = vmatpush2.msra.mxu0 0.0
    %3330 = vmatprep.subr.mxu0 0.0
    %3331 = vmatpush2.msra.mxu0 0.0
    %3332 = vmatprep.subr.mxu0 0.0
    %3333 = vmatpush2.msra.mxu0 0.0
    %3334 = vmatprep.subr.mxu0 0.0
    %3335 = vmatpush2.msra.mxu0 0.0
    %3336 = vmatprep.subr.mxu0 0.0
    %3337 = vmatpush2.msra.mxu0 0.0
    %3338 = vmatprep.subr.mxu0 0.0
    %3339 = vmatpush2.msra.mxu0 0.0
    %3340 = vmatprep.mubr.f32.mxu0 0.0
    %3341 = vmatmul.mubr.f32.gmra.mxu0 %v3274
    %v3342 = vpop.f32.mrf.mxu0
    %v3343 = vadd.f32 %v451, %v3342
    %v3344 = vpop.f32.mrf.mxu0
    %3345 = vdwg.mxu0
    %v3346 = vadd.f32 %v3271, %v3343
    %v3347 = vxor.u32 %v3346, 2147483648
    %v3348 = vmul.f32 %v3347, 1.442695
    %v3349 = vpow.pop %v3348
    %v3350 = vadd.f32 %v3349, 1.0
    %v3351 = vrcp.pop %v3350
    %v3352 = vmul.f32 1.0, %v3351
    %3354 = vrot.lane.b32.xlu0 %v3343, 64
    %v3355 = vpop.permute.xlu0 %3354
    %v3357 = vmul.f32 %v3352, %v3355
    %3359 = vrot.lane.b32.xlu0 %v3357, 64
    %v3360 = vpop.permute.xlu0 %3359
    %v3362 = vadd.f32 %v3271, %v3360
    %v3363 = vtanh.pop %v3362
    %v3364 = vsub.f32 1.0, %v3352
    %3366 = vrot.lane.b32.xlu0 %v3363, 96
    %v3367 = vpop.permute.xlu0 %3366
    %v3369 = vmul.f32 %v3364, %v3367
    %v3370 = vmul.f32 %v3352, %v2905
    %v3371 = vadd.f32 %v3369, %v3370
    %3373 = vrot.lane.b32.xlu0 %v3371, 96
    %v3374 = vpop.permute.xlu0 %3373
    %v3376 = vsel %vm244, %v3374, 0.0
    %3377 = vadd.xlane.f32.xlu0 %v3376
    %v3378 = vpop.xlane.xlu0 %3377
    %v3379 = vmul.f32 %v3378, %v248
    %v3380 = vsub.f32 %v3371, %v3379
    %v3381 = vmul.f32 %v3380, %v3380
    %3383 = vrot.lane.b32.xlu0 %v3381, 96
    %v3384 = vpop.permute.xlu0 %3383
    %v3386 = vsel %vm244, %v3384, 0.0
    %3387 = vadd.xlane.f32.xlu0 %v3386
    %v3388 = vpop.xlane.xlu0 %3387
    %v3389 = vmul.f32 %v3388, %v248
    %v3390 = vadd.f32 %v3389, 1e-05
    %v3391 = vrsqrt.pop %v3390
    %v3392 = vmul.f32 %v3380, %v3391
    %v3393 = vmul.f32 %v3392, %v581
    %v3394 = vadd.f32 %v3393, %v590
    %3396 = vrot.lane.b32.xlu0 %v3394, 96
    %v3397 = vpop.permute.xlu0 %3396
    %v3398 = vsel %vm273, %v3397, 0
    %3400 = vmatprep.subr.mxu0 0.0
    %3401 = vmatpush1.msra.mxu0 0.0
    %3402 = vmatprep.subr.mxu0 0.0
    %3403 = vmatpush1.msra.mxu0 0.0
    %3404 = vmatprep.subr.mxu0 0.0
    %3405 = vmatpush1.msra.mxu0 0.0
    %3406 = vmatprep.subr.mxu0 0.0
    %3407 = vmatpush1.msra.mxu0 0.0
    %3408 = vmatprep.subr.mxu0 0.0
    %3409 = vmatpush1.msra.mxu0 0.0
    %3410 = vmatprep.subr.mxu0 0.0
    %3411 = vmatpush1.msra.mxu0 0.0
    %3412 = vmatprep.subr.mxu0 0.0
    %3413 = vmatpush1.msra.mxu0 0.0
    %3414 = vmatprep.subr.mxu0 0.0
    %3415 = vmatpush1.msra.mxu0 0.0
    %3416 = vmatprep.subr.mxu0 0.0
    %3417 = vmatpush1.msra.mxu0 0.0
    %3418 = vmatprep.subr.mxu0 0.0
    %3419 = vmatpush1.msra.mxu0 0.0
    %3420 = vmatprep.subr.mxu0 0.0
    %3421 = vmatpush1.msra.mxu0 0.0
    %3422 = vmatprep.subr.mxu0 0.0
    %3423 = vmatpush1.msra.mxu0 0.0
    %3424 = vmatprep.subr.mxu0 0.0
    %3425 = vmatpush1.msra.mxu0 %v128
    %3426 = vmatprep.subr.mxu0 0.0
    %3427 = vmatpush1.msra.mxu0 %v127
    %3428 = vmatprep.subr.mxu0 0.0
    %3429 = vmatpush1.msra.mxu0 %v126
    %3430 = vmatprep.subr.mxu0 0.0
    %3431 = vmatpush1.msra.mxu0 %v125
    %3432 = vmatprep.subr.mxu0 0.0
    %3433 = vmatpush2.msra.mxu0 0.0
    %3434 = vmatprep.subr.mxu0 0.0
    %3435 = vmatpush2.msra.mxu0 0.0
    %3436 = vmatprep.subr.mxu0 0.0
    %3437 = vmatpush2.msra.mxu0 0.0
    %3438 = vmatprep.subr.mxu0 0.0
    %3439 = vmatpush2.msra.mxu0 0.0
    %3440 = vmatprep.subr.mxu0 0.0
    %3441 = vmatpush2.msra.mxu0 0.0
    %3442 = vmatprep.subr.mxu0 0.0
    %3443 = vmatpush2.msra.mxu0 0.0
    %3444 = vmatprep.subr.mxu0 0.0
    %3445 = vmatpush2.msra.mxu0 0.0
    %3446 = vmatprep.subr.mxu0 0.0
    %3447 = vmatpush2.msra.mxu0 0.0
    %3448 = vmatprep.subr.mxu0 0.0
    %3449 = vmatpush2.msra.mxu0 0.0
    %3450 = vmatprep.subr.mxu0 0.0
    %3451 = vmatpush2.msra.mxu0 0.0
    %3452 = vmatprep.subr.mxu0 0.0
    %3453 = vmatpush2.msra.mxu0 0.0
    %3454 = vmatprep.subr.mxu0 0.0
    %3455 = vmatpush2.msra.mxu0 0.0
    %3456 = vmatprep.subr.mxu0 0.0
    %3457 = vmatpush2.msra.mxu0 0.0
    %3458 = vmatprep.subr.mxu0 0.0
    %3459 = vmatpush2.msra.mxu0 0.0
    %3460 = vmatprep.subr.mxu0 0.0
    %3461 = vmatpush2.msra.mxu0 0.0
    %3462 = vmatprep.subr.mxu0 0.0
    %3463 = vmatpush2.msra.mxu0 0.0
    %3464 = vmatprep.mubr.f32.mxu0 0.0
    %3465 = vmatmul.mubr.f32.gmra.mxu0 %v3398
    %v3466 = vpop.f32.mrf.mxu0
    %v3467 = vadd.f32 %v597, %v3466
    %v3468 = vpop.f32.mrf.mxu0
    %3469 = vdwg.mxu0
    %s3470 = scalar_lea.vmem %s11, 24
    %3471 = vst.msk [vmem:[%s3470] sm:$0xf] %vm674, %v3467
    %s3472 = scalar_lea.vmem %s0, 28
    %v3473 = vld [vmem:[%s3472] sm:$0xf]
    %v3474 = vsel %vm140, %v3473, 0.0
    %3475 = vadd.xlane.f32.xlu0 %v3474
    %v3476 = vpop.xlane.xlu0 %3475
    %v3477 = vmul.f32 %v3476, %v144
    %v3478 = vsub.f32 %v3473, %v3477
    %v3479 = vmul.f32 %v3478, %v3478
    %v3480 = vsel %vm140, %v3479, 0.0
    %3481 = vadd.xlane.f32.xlu0 %v3480
    %v3482 = vpop.xlane.xlu0 %3481
    %v3483 = vmul.f32 %v3482, %v144
    %v3484 = vadd.f32 %v3483, 1e-05
    %v3485 = vrsqrt.pop %v3484
    %v3486 = vmul.f32 %v3478, %v3485
    %v3487 = vmul.f32 %v3486, %v158
    %v3488 = vadd.f32 %v3487, %v163
    %v3490 = vsel %vm169, %v3488, 0
    %3492 = vmatprep.subr.mxu0 0.0
    %3493 = vmatpush1.msra.mxu0 0.0
    %3494 = vmatprep.subr.mxu0 0.0
    %3495 = vmatpush1.msra.mxu0 0.0
    %3496 = vmatprep.subr.mxu0 0.0
    %3497 = vmatpush1.msra.mxu0 0.0
    %3498 = vmatprep.subr.mxu0 0.0
    %3499 = vmatpush1.msra.mxu0 0.0
    %3500 = vmatprep.subr.mxu0 0.0
    %3501 = vmatpush1.msra.mxu0 0.0
    %3502 = vmatprep.subr.mxu0 0.0
    %3503 = vmatpush1.msra.mxu0 0.0
    %3504 = vmatprep.subr.mxu0 0.0
    %3505 = vmatpush1.msra.mxu0 0.0
    %3506 = vmatprep.subr.mxu0 0.0
    %3507 = vmatpush1.msra.mxu0 0.0
    %3508 = vmatprep.subr.mxu0 0.0
    %3509 = vmatpush1.msra.mxu0 0.0
    %3510 = vmatprep.subr.mxu0 0.0
    %3511 = vmatpush1.msra.mxu0 0.0
    %3512 = vmatprep.subr.mxu0 0.0
    %3513 = vmatpush1.msra.mxu0 0.0
    %3514 = vmatprep.subr.mxu0 0.0
    %3515 = vmatpush1.msra.mxu0 0.0
    %3516 = vmatprep.subr.mxu0 0.0
    %3517 = vmatpush1.msra.mxu0 0.0
    %3518 = vmatprep.subr.mxu0 0.0
    %3519 = vmatpush1.msra.mxu0 0.0
    %3520 = vmatprep.subr.mxu0 0.0
    %3521 = vmatpush1.msra.mxu0 %v110
    %3522 = vmatprep.subr.mxu0 0.0
    %3523 = vmatpush1.msra.mxu0 %v109
    %3524 = vmatprep.subr.mxu0 0.0
    %3525 = vmatpush2.msra.mxu0 0.0
    %3526 = vmatprep.subr.mxu0 0.0
    %3527 = vmatpush2.msra.mxu0 0.0
    %3528 = vmatprep.subr.mxu0 0.0
    %3529 = vmatpush2.msra.mxu0 0.0
    %3530 = vmatprep.subr.mxu0 0.0
    %3531 = vmatpush2.msra.mxu0 0.0
    %3532 = vmatprep.subr.mxu0 0.0
    %3533 = vmatpush2.msra.mxu0 0.0
    %3534 = vmatprep.subr.mxu0 0.0
    %3535 = vmatpush2.msra.mxu0 0.0
    %3536 = vmatprep.subr.mxu0 0.0
    %3537 = vmatpush2.msra.mxu0 0.0
    %3538 = vmatprep.subr.mxu0 0.0
    %3539 = vmatpush2.msra.mxu0 0.0
    %3540 = vmatprep.subr.mxu0 0.0
    %3541 = vmatpush2.msra.mxu0 0.0
    %3542 = vmatprep.subr.mxu0 0.0
    %3543 = vmatpush2.msra.mxu0 0.0
    %3544 = vmatprep.subr.mxu0 0.0
    %3545 = vmatpush2.msra.mxu0 0.0
    %3546 = vmatprep.subr.mxu0 0.0
    %3547 = vmatpush2.msra.mxu0 0.0
    %3548 = vmatprep.subr.mxu0 0.0
    %3549 = vmatpush2.msra.mxu0 0.0
    %3550 = vmatprep.subr.mxu0 0.0
    %3551 = vmatpush2.msra.mxu0 0.0
    %3552 = vmatprep.subr.mxu0 0.0
    %3553 = vmatpush2.msra.mxu0 0.0
    %3554 = vmatprep.subr.mxu0 0.0
    %3555 = vmatpush2.msra.mxu0 0.0
    %3556 = vmatprep.mubr.f32.mxu0 0.0
    %3557 = vmatmul.mubr.f32.gmra.mxu0 %v3490
    %v3558 = vpop.f32.mrf.mxu0
    %v3559 = vadd.f32 %v168, %v3558
    %v3560 = vpop.f32.mrf.mxu0
    %3561 = vdwg.mxu0
    %v3562 = vmax.f32 %v3559, 0.0
    %v3563 = vsel %vm244, %v3562, 0.0
    %3564 = vadd.xlane.f32.xlu0 %v3563
    %v3565 = vpop.xlane.xlu0 %3564
    %v3566 = vmul.f32 %v3565, %v248
    %v3567 = vsub.f32 %v3562, %v3566
    %v3568 = vmul.f32 %v3567, %v3567
    %v3569 = vsel %vm244, %v3568, 0.0
    %3570 = vadd.xlane.f32.xlu0 %v3569
    %v3571 = vpop.xlane.xlu0 %3570
    %v3572 = vmul.f32 %v3571, %v248
    %v3573 = vadd.f32 %v3572, 1e-05
    %v3574 = vrsqrt.pop %v3573
    %v3575 = vmul.f32 %v3567, %v3574
    %v3576 = vmul.f32 %v3575, %v262
    %v3577 = vadd.f32 %v3576, %v267
    %v3579 = vsel %vm273, %v3577, 0
    %3581 = vmatprep.subr.mxu0 0.0
    %3582 = vmatpush1.msra.mxu0 0.0
    %3583 = vmatprep.subr.mxu0 0.0
    %3584 = vmatpush1.msra.mxu0 0.0
    %3585 = vmatprep.subr.mxu0 0.0
    %3586 = vmatpush1.msra.mxu0 0.0
    %3587 = vmatprep.subr.mxu0 0.0
    %3588 = vmatpush1.msra.mxu0 0.0
    %3589 = vmatprep.subr.mxu0 0.0
    %3590 = vmatpush1.msra.mxu0 0.0
    %3591 = vmatprep.subr.mxu0 0.0
    %3592 = vmatpush1.msra.mxu0 0.0
    %3593 = vmatprep.subr.mxu0 0.0
    %3594 = vmatpush1.msra.mxu0 0.0
    %3595 = vmatprep.subr.mxu0 0.0
    %3596 = vmatpush1.msra.mxu0 0.0
    %3597 = vmatprep.subr.mxu0 0.0
    %3598 = vmatpush1.msra.mxu0 0.0
    %3599 = vmatprep.subr.mxu0 0.0
    %3600 = vmatpush1.msra.mxu0 0.0
    %3601 = vmatprep.subr.mxu0 0.0
    %3602 = vmatpush1.msra.mxu0 0.0
    %3603 = vmatprep.subr.mxu0 0.0
    %3604 = vmatpush1.msra.mxu0 0.0
    %3605 = vmatprep.subr.mxu0 0.0
    %3606 = vmatpush1.msra.mxu0 %v114
    %3607 = vmatprep.subr.mxu0 0.0
    %3608 = vmatpush1.msra.mxu0 %v113
    %3609 = vmatprep.subr.mxu0 0.0
    %3610 = vmatpush1.msra.mxu0 %v112
    %3611 = vmatprep.subr.mxu0 0.0
    %3612 = vmatpush1.msra.mxu0 %v111
    %3613 = vmatprep.subr.mxu0 0.0
    %3614 = vmatpush2.msra.mxu0 0.0
    %3615 = vmatprep.subr.mxu0 0.0
    %3616 = vmatpush2.msra.mxu0 0.0
    %3617 = vmatprep.subr.mxu0 0.0
    %3618 = vmatpush2.msra.mxu0 0.0
    %3619 = vmatprep.subr.mxu0 0.0
    %3620 = vmatpush2.msra.mxu0 0.0
    %3621 = vmatprep.subr.mxu0 0.0
    %3622 = vmatpush2.msra.mxu0 0.0
    %3623 = vmatprep.subr.mxu0 0.0
    %3624 = vmatpush2.msra.mxu0 0.0
    %3625 = vmatprep.subr.mxu0 0.0
    %3626 = vmatpush2.msra.mxu0 0.0
    %3627 = vmatprep.subr.mxu0 0.0
    %3628 = vmatpush2.msra.mxu0 0.0
    %3629 = vmatprep.subr.mxu0 0.0
    %3630 = vmatpush2.msra.mxu0 0.0
    %3631 = vmatprep.subr.mxu0 0.0
    %3632 = vmatpush2.msra.mxu0 0.0
    %3633 = vmatprep.subr.mxu0 0.0
    %3634 = vmatpush2.msra.mxu0 0.0
    %3635 = vmatprep.subr.mxu0 0.0
    %3636 = vmatpush2.msra.mxu0 0.0
    %3637 = vmatprep.subr.mxu0 0.0
    %3638 = vmatpush2.msra.mxu0 0.0
    %3639 = vmatprep.subr.mxu0 0.0
    %3640 = vmatpush2.msra.mxu0 0.0
    %3641 = vmatprep.subr.mxu0 0.0
    %3642 = vmatpush2.msra.mxu0 0.0
    %3643 = vmatprep.subr.mxu0 0.0
    %3644 = vmatpush2.msra.mxu0 0.0
    %3645 = vmatprep.mubr.f32.mxu0 0.0
    %3646 = vmatmul.mubr.f32.gmra.mxu0 %v3579
    %v3647 = vpop.f32.mrf.mxu0
    %v3648 = vadd.f32 %v272, %v3647
    %v3649 = vpop.f32.mrf.mxu0
    %3650 = vdwg.mxu0
    %v3651 = vmax.f32 %v3648, 0.0
    %v3652 = vsel %vm244, %v3651, 0.0
    %3653 = vadd.xlane.f32.xlu0 %v3652
    %v3654 = vpop.xlane.xlu0 %3653
    %v3655 = vmul.f32 %v3654, %v248
    %v3656 = vsub.f32 %v3651, %v3655
    %v3657 = vmul.f32 %v3656, %v3656
    %v3658 = vsel %vm244, %v3657, 0.0
    %3659 = vadd.xlane.f32.xlu0 %v3658
    %v3660 = vpop.xlane.xlu0 %3659
    %v3661 = vmul.f32 %v3660, %v248
    %v3662 = vadd.f32 %v3661, 1e-05
    %v3663 = vrsqrt.pop %v3662
    %v3664 = vmul.f32 %v3656, %v3663
    %v3665 = vmul.f32 %v3664, %v364
    %v3666 = vadd.f32 %v3665, %v369
    %v3668 = vsel %vm273, %v3666, 0
    %3670 = vmatprep.subr.mxu0 0.0
    %3671 = vmatpush1.msra.mxu0 0.0
    %3672 = vmatprep.subr.mxu0 0.0
    %3673 = vmatpush1.msra.mxu0 0.0
    %3674 = vmatprep.subr.mxu0 0.0
    %3675 = vmatpush1.msra.mxu0 0.0
    %3676 = vmatprep.subr.mxu0 0.0
    %3677 = vmatpush1.msra.mxu0 0.0
    %3678 = vmatprep.subr.mxu0 0.0
    %3679 = vmatpush1.msra.mxu0 0.0
    %3680 = vmatprep.subr.mxu0 0.0
    %3681 = vmatpush1.msra.mxu0 0.0
    %3682 = vmatprep.subr.mxu0 0.0
    %3683 = vmatpush1.msra.mxu0 0.0
    %3684 = vmatprep.subr.mxu0 0.0
    %3685 = vmatpush1.msra.mxu0 0.0
    %3686 = vmatprep.subr.mxu0 0.0
    %3687 = vmatpush1.msra.mxu0 0.0
    %3688 = vmatprep.subr.mxu0 0.0
    %3689 = vmatpush1.msra.mxu0 0.0
    %3690 = vmatprep.subr.mxu0 0.0
    %3691 = vmatpush1.msra.mxu0 0.0
    %3692 = vmatprep.subr.mxu0 0.0
    %3693 = vmatpush1.msra.mxu0 0.0
    %3694 = vmatprep.subr.mxu0 0.0
    %3695 = vmatpush1.msra.mxu0 %v118
    %3696 = vmatprep.subr.mxu0 0.0
    %3697 = vmatpush1.msra.mxu0 %v117
    %3698 = vmatprep.subr.mxu0 0.0
    %3699 = vmatpush1.msra.mxu0 %v116
    %3700 = vmatprep.subr.mxu0 0.0
    %3701 = vmatpush1.msra.mxu0 %v115
    %3702 = vmatprep.subr.mxu0 0.0
    %3703 = vmatpush2.msra.mxu0 0.0
    %3704 = vmatprep.subr.mxu0 0.0
    %3705 = vmatpush2.msra.mxu0 0.0
    %3706 = vmatprep.subr.mxu0 0.0
    %3707 = vmatpush2.msra.mxu0 0.0
    %3708 = vmatprep.subr.mxu0 0.0
    %3709 = vmatpush2.msra.mxu0 0.0
    %3710 = vmatprep.subr.mxu0 0.0
    %3711 = vmatpush2.msra.mxu0 0.0
    %3712 = vmatprep.subr.mxu0 0.0
    %3713 = vmatpush2.msra.mxu0 0.0
    %3714 = vmatprep.subr.mxu0 0.0
    %3715 = vmatpush2.msra.mxu0 0.0
    %3716 = vmatprep.subr.mxu0 0.0
    %3717 = vmatpush2.msra.mxu0 0.0
    %3718 = vmatprep.subr.mxu0 0.0
    %3719 = vmatpush2.msra.mxu0 0.0
    %3720 = vmatprep.subr.mxu0 0.0
    %3721 = vmatpush2.msra.mxu0 0.0
    %3722 = vmatprep.subr.mxu0 0.0
    %3723 = vmatpush2.msra.mxu0 0.0
    %3724 = vmatprep.subr.mxu0 0.0
    %3725 = vmatpush2.msra.mxu0 0.0
    %3726 = vmatprep.subr.mxu0 0.0
    %3727 = vmatpush2.msra.mxu0 0.0
    %3728 = vmatprep.subr.mxu0 0.0
    %3729 = vmatpush2.msra.mxu0 0.0
    %3730 = vmatprep.subr.mxu0 0.0
    %3731 = vmatpush2.msra.mxu0 0.0
    %3732 = vmatprep.subr.mxu0 0.0
    %3733 = vmatpush2.msra.mxu0 0.0
    %3734 = vmatprep.mubr.f32.mxu0 0.0
    %3735 = vmatmul.mubr.f32.gmra.mxu0 %v3668
    %v3736 = vpop.f32.mrf.mxu0
    %v3737 = vadd.f32 %v374, %v3736
    %v3738 = vpop.f32.mrf.mxu0
    %3739 = vdwg.mxu0
    %v3740 = vsel %vm273, %v3374, 0
    %3742 = vmatprep.subr.mxu0 0.0
    %3743 = vmatpush1.msra.mxu0 0.0
    %3744 = vmatprep.subr.mxu0 0.0
    %3745 = vmatpush1.msra.mxu0 0.0
    %3746 = vmatprep.subr.mxu0 0.0
    %3747 = vmatpush1.msra.mxu0 0.0
    %3748 = vmatprep.subr.mxu0 0.0
    %3749 = vmatpush1.msra.mxu0 0.0
    %3750 = vmatprep.subr.mxu0 0.0
    %3751 = vmatpush1.msra.mxu0 0.0
    %3752 = vmatprep.subr.mxu0 0.0
    %3753 = vmatpush1.msra.mxu0 0.0
    %3754 = vmatprep.subr.mxu0 0.0
    %3755 = vmatpush1.msra.mxu0 0.0
    %3756 = vmatprep.subr.mxu0 0.0
    %3757 = vmatpush1.msra.mxu0 0.0
    %3758 = vmatprep.subr.mxu0 0.0
    %3759 = vmatpush1.msra.mxu0 0.0
    %3760 = vmatprep.subr.mxu0 0.0
    %3761 = vmatpush1.msra.mxu0 0.0
    %3762 = vmatprep.subr.mxu0 0.0
    %3763 = vmatpush1.msra.mxu0 0.0
    %3764 = vmatprep.subr.mxu0 0.0
    %3765 = vmatpush1.msra.mxu0 0.0
    %3766 = vmatprep.subr.mxu0 0.0
    %3767 = vmatpush1.msra.mxu0 %v122
    %3768 = vmatprep.subr.mxu0 0.0
    %3769 = vmatpush1.msra.mxu0 %v121
    %3770 = vmatprep.subr.mxu0 0.0
    %3771 = vmatpush1.msra.mxu0 %v120
    %3772 = vmatprep.subr.mxu0 0.0
    %3773 = vmatpush1.msra.mxu0 %v119
    %3774 = vmatprep.subr.mxu0 0.0
    %3775 = vmatpush2.msra.mxu0 0.0
    %3776 = vmatprep.subr.mxu0 0.0
    %3777 = vmatpush2.msra.mxu0 0.0
    %3778 = vmatprep.subr.mxu0 0.0
    %3779 = vmatpush2.msra.mxu0 0.0
    %3780 = vmatprep.subr.mxu0 0.0
    %3781 = vmatpush2.msra.mxu0 0.0
    %3782 = vmatprep.subr.mxu0 0.0
    %3783 = vmatpush2.msra.mxu0 0.0
    %3784 = vmatprep.subr.mxu0 0.0
    %3785 = vmatpush2.msra.mxu0 0.0
    %3786 = vmatprep.subr.mxu0 0.0
    %3787 = vmatpush2.msra.mxu0 0.0
    %3788 = vmatprep.subr.mxu0 0.0
    %3789 = vmatpush2.msra.mxu0 0.0
    %3790 = vmatprep.subr.mxu0 0.0
    %3791 = vmatpush2.msra.mxu0 0.0
    %3792 = vmatprep.subr.mxu0 0.0
    %3793 = vmatpush2.msra.mxu0 0.0
    %3794 = vmatprep.subr.mxu0 0.0
    %3795 = vmatpush2.msra.mxu0 0.0
    %3796 = vmatprep.subr.mxu0 0.0
    %3797 = vmatpush2.msra.mxu0 0.0
    %3798 = vmatprep.subr.mxu0 0.0
    %3799 = vmatpush2.msra.mxu0 0.0
    %3800 = vmatprep.subr.mxu0 0.0
    %3801 = vmatpush2.msra.mxu0 0.0
    %3802 = vmatprep.subr.mxu0 0.0
    %3803 = vmatpush2.msra.mxu0 0.0
    %3804 = vmatprep.subr.mxu0 0.0
    %3805 = vmatpush2.msra.mxu0 0.0
    %3806 = vmatprep.mubr.f32.mxu0 0.0
    %3807 = vmatmul.mubr.f32.gmra.mxu0 %v3740
    %v3808 = vpop.f32.mrf.mxu0
    %v3809 = vadd.f32 %v451, %v3808
    %v3810 = vpop.f32.mrf.mxu0
    %3811 = vdwg.mxu0
    %v3812 = vadd.f32 %v3737, %v3809
    %v3813 = vxor.u32 %v3812, 2147483648
    %v3814 = vmul.f32 %v3813, 1.442695
    %v3815 = vpow.pop %v3814
    %v3816 = vadd.f32 %v3815, 1.0
    %v3817 = vrcp.pop %v3816
    %v3818 = vmul.f32 1.0, %v3817
    %3820 = vrot.lane.b32.xlu0 %v3809, 64
    %v3821 = vpop.permute.xlu0 %3820
    %v3823 = vmul.f32 %v3818, %v3821
    %3825 = vrot.lane.b32.xlu0 %v3823, 64
    %v3826 = vpop.permute.xlu0 %3825
    %v3828 = vadd.f32 %v3737, %v3826
    %v3829 = vtanh.pop %v3828
    %v3830 = vsub.f32 1.0, %v3818
    %3832 = vrot.lane.b32.xlu0 %v3829, 96
    %v3833 = vpop.permute.xlu0 %3832
    %v3835 = vmul.f32 %v3830, %v3833
    %v3836 = vmul.f32 %v3818, %v3371
    %v3837 = vadd.f32 %v3835, %v3836
    %3839 = vrot.lane.b32.xlu0 %v3837, 96
    %v3840 = vpop.permute.xlu0 %3839
    %v3842 = vsel %vm244, %v3840, 0.0
    %3843 = vadd.xlane.f32.xlu0 %v3842
    %v3844 = vpop.xlane.xlu0 %3843
    %v3845 = vmul.f32 %v3844, %v248
    %v3846 = vsub.f32 %v3837, %v3845
    %v3847 = vmul.f32 %v3846, %v3846
    %3849 = vrot.lane.b32.xlu0 %v3847, 96
    %v3850 = vpop.permute.xlu0 %3849
    %v3852 = vsel %vm244, %v3850, 0.0
    %3853 = vadd.xlane.f32.xlu0 %v3852
    %v3854 = vpop.xlane.xlu0 %3853
    %v3855 = vmul.f32 %v3854, %v248
    %v3856 = vadd.f32 %v3855, 1e-05
    %v3857 = vrsqrt.pop %v3856
    %v3858 = vmul.f32 %v3846, %v3857
    %v3859 = vmul.f32 %v3858, %v581
    %v3860 = vadd.f32 %v3859, %v590
    %3862 = vrot.lane.b32.xlu0 %v3860, 96
    %v3863 = vpop.permute.xlu0 %3862
    %v3864 = vsel %vm273, %v3863, 0
    %3866 = vmatprep.subr.mxu0 0.0
    %3867 = vmatpush1.msra.mxu0 0.0
    %3868 = vmatprep.subr.mxu0 0.0
    %3869 = vmatpush1.msra.mxu0 0.0
    %3870 = vmatprep.subr.mxu0 0.0
    %3871 = vmatpush1.msra.mxu0 0.0
    %3872 = vmatprep.subr.mxu0 0.0
    %3873 = vmatpush1.msra.mxu0 0.0
    %3874 = vmatprep.subr.mxu0 0.0
    %3875 = vmatpush1.msra.mxu0 0.0
    %3876 = vmatprep.subr.mxu0 0.0
    %3877 = vmatpush1.msra.mxu0 0.0
    %3878 = vmatprep.subr.mxu0 0.0
    %3879 = vmatpush1.msra.mxu0 0.0
    %3880 = vmatprep.subr.mxu0 0.0
    %3881 = vmatpush1.msra.mxu0 0.0
    %3882 = vmatprep.subr.mxu0 0.0
    %3883 = vmatpush1.msra.mxu0 0.0
    %3884 = vmatprep.subr.mxu0 0.0
    %3885 = vmatpush1.msra.mxu0 0.0
    %3886 = vmatprep.subr.mxu0 0.0
    %3887 = vmatpush1.msra.mxu0 0.0
    %3888 = vmatprep.subr.mxu0 0.0
    %3889 = vmatpush1.msra.mxu0 0.0
    %3890 = vmatprep.subr.mxu0 0.0
    %3891 = vmatpush1.msra.mxu0 %v128
    %3892 = vmatprep.subr.mxu0 0.0
    %3893 = vmatpush1.msra.mxu0 %v127
    %3894 = vmatprep.subr.mxu0 0.0
    %3895 = vmatpush1.msra.mxu0 %v126
    %3896 = vmatprep.subr.mxu0 0.0
    %3897 = vmatpush1.msra.mxu0 %v125
    %3898 = vmatprep.subr.mxu0 0.0
    %3899 = vmatpush2.msra.mxu0 0.0
    %3900 = vmatprep.subr.mxu0 0.0
    %3901 = vmatpush2.msra.mxu0 0.0
    %3902 = vmatprep.subr.mxu0 0.0
    %3903 = vmatpush2.msra.mxu0 0.0
    %3904 = vmatprep.subr.mxu0 0.0
    %3905 = vmatpush2.msra.mxu0 0.0
    %3906 = vmatprep.subr.mxu0 0.0
    %3907 = vmatpush2.msra.mxu0 0.0
    %3908 = vmatprep.subr.mxu0 0.0
    %3909 = vmatpush2.msra.mxu0 0.0
    %3910 = vmatprep.subr.mxu0 0.0
    %3911 = vmatpush2.msra.mxu0 0.0
    %3912 = vmatprep.subr.mxu0 0.0
    %3913 = vmatpush2.msra.mxu0 0.0
    %3914 = vmatprep.subr.mxu0 0.0
    %3915 = vmatpush2.msra.mxu0 0.0
    %3916 = vmatprep.subr.mxu0 0.0
    %3917 = vmatpush2.msra.mxu0 0.0
    %3918 = vmatprep.subr.mxu0 0.0
    %3919 = vmatpush2.msra.mxu0 0.0
    %3920 = vmatprep.subr.mxu0 0.0
    %3921 = vmatpush2.msra.mxu0 0.0
    %3922 = vmatprep.subr.mxu0 0.0
    %3923 = vmatpush2.msra.mxu0 0.0
    %3924 = vmatprep.subr.mxu0 0.0
    %3925 = vmatpush2.msra.mxu0 0.0
    %3926 = vmatprep.subr.mxu0 0.0
    %3927 = vmatpush2.msra.mxu0 0.0
    %3928 = vmatprep.subr.mxu0 0.0
    %3929 = vmatpush2.msra.mxu0 0.0
    %3930 = vmatprep.mubr.f32.mxu0 0.0
    %3931 = vmatmul.mubr.f32.gmra.mxu0 %v3864
    %v3932 = vpop.f32.mrf.mxu0
    %v3933 = vadd.f32 %v597, %v3932
    %v3934 = vpop.f32.mrf.mxu0
    %3935 = vdwg.mxu0
    %s3936 = scalar_lea.vmem %s11, 28
    %3937 = vst.msk [vmem:[%s3936] sm:$0xf] %vm674, %v3933
    %3938 = vst.msk [vmem:[#allocation11] sm:$0xf] %vm244, %v3840
    // Predicated region
    $region66: #{tpu_custom_call.1} parent=1 // pred_check
      _
    $region67: #{tpu_custom_call.1} parent=1 // pred_check_branch
      %3940 = sbr.rel (0) target = $region69
    $region68: #{tpu_custom_call.1} parent=1 // pred_region
      _
    $region69: #{tpu_custom_call.1} parent=1 // pred_fallthru
      _
    // Predicated region
    $region70: #{tpu_custom_call.1} parent=1 // pred_check
      _
    $region71: #{tpu_custom_call.1} parent=1 // pred_check_branch
      %3942 = sbr.rel (0) target = $region73
    $region72: #{tpu_custom_call.1} parent=1 // pred_region
      %s3944 = ssub.s32 64, 64
      %3945 = vsyncadd [#allocation4], %s3944
      %s3947 = sshll.u32 [#allocation11], 4
      %s3948 = int_to_ptr.vmem [resolvable:$true] %s3947
      %3950 = dma.vmem_to_hbm [thread:$0]  %s3948, 64, %s12, [#allocation4]
    $region73: #{tpu_custom_call.1} parent=1 // pred_fallthru
      _
    // Predicated region
    $region74: #{tpu_custom_call.1} parent=1 // pred_check
      _
    $region75: #{tpu_custom_call.1} parent=1 // pred_check_branch
      %3952 = sbr.rel (0) target = $region77
    $region76: #{tpu_custom_call.1} parent=1 // pred_region
      _
    $region77: #{tpu_custom_call.1} parent=1 // pred_fallthru
      _
    // Predicated region
    $region78: #{tpu_custom_call.1} parent=1 // pred_check
      _
    $region79: #{tpu_custom_call.1} parent=1 // pred_check_branch
      %3954 = sbr.rel (0) target = $region81
    $region80: #{tpu_custom_call.1} parent=1 // pred_region
      %3955 = dma.done [#allocation4], 64
    $region81: #{tpu_custom_call.1} parent=1 // pred_fallthru
      _
    %3956 = vsyncpa [#allocation3], 1
    %3957 = vsyncpa [#allocation6], 1
    %3958 = vsyncpa [#allocation9], 1
    %3959 = vsyncpa [#allocation4], 1

</llo_original>
